<compile_context>
chip_gen: v6e
topology: v6e:2x2x1
jax: 0.10.0
libtpu: 0.0.40
codegen_flags: <defaults>
</compile_context>

<pallas_src>
import functools

import numpy as np
import jax
import jax.numpy as jnp
from jax.experimental import pallas as pl
from jax.experimental.pallas import tpu as pltpu

_HH_CHUNK = 512                      # hi-res rows produced per inner step
_VMEM_HEADROOM = 16 * 1024 * 1024    # leave room for Mosaic internal scratch


# ----------------------------------------------------------------------------
# Pallas kernel
# ----------------------------------------------------------------------------
def _lmsgf_kernel(guide_hr_ref, guide_ref, target_ref,
                  nht_ref, nwt_all_ref, uht_ref, uwt_ref,
                  eps_ref, w_ref, out_ref, *, upsample_bf16):
    # guide_ref / target_ref : (TC, H, W)    low-res block
    # guide_hr_ref / out_ref : (TC, Hh, Wh)  high-res block
    # nht_ref     : (ns, H, H)   row-normalized box matrix, transposed ([h, i])
    # nwt_all_ref : (W, ns*W)    row-normalized box matrices, transposed and
    #                            concatenated along the output dim ([w, s*W+k])
    # uht_ref : (H, Hh), uwt_ref : (W, Wh)   bilinear matrices, transposed
    # eps_ref, w_ref : (ns,) scalars in SMEM
    TC, H, W = guide_ref.shape
    ns = nht_ref.shape[0]
    Hh = uht_ref.shape[1]
    Wh = uwt_ref.shape[1]

    t = target_ref[...]
    g = guide_ref[...]

    # Pack the four box-filter operands along the channel axis -> each
    # contraction is one big 2-D MXU matmul covering t, g, t*g, g*g for all
    # channels at once.
    x = jnp.concatenate([t, g, t * g, g * g], axis=0)            # (4TC, H, W)
    x2 = x.reshape(4 * TC * H, W)

    # Width contraction fused over scales (normalization folded in):
    #   y_all[c, h, s*W + k] = sum_w x[c, h, w] * Nw[s][k, w]
    y_all = jnp.dot(x2, nwt_all_ref[...], preferred_element_type=jnp.float32)
    y_all = y_all.reshape(4 * TC, H, ns * W)

    # Between the two separable contractions data lives in (C, W, H)
    # orientation (H minor); orientation is consistent for all quantities so
    # the elementwise guided-filter math is unaffected.
    a_acc = None
    b_acc = None
    for s in range(ns):                      # ns is small & static -> unrolled
        # Slice this scale BEFORE transposing so the transposed slab stays at
        # per-scale size (lower VMEM peak than one ns*W-wide transpose).
        y_s = y_all[:, :, s * W:(s + 1) * W]                     # (4TC, H, W)
        y_t = jnp.swapaxes(y_s, -1, -2)                          # (4TC, W, H) XLU
        z = jnp.dot(y_t.reshape(4 * TC * W, H), nht_ref[s],
                    preferred_element_type=jnp.float32)
        z = z.reshape(4 * TC, W, H)           # box means, orientation (C, W, H)

        tm = z[:TC]                # mean(target)
        gm = z[TC:2 * TC]          # mean(guide)
        tgm = z[2 * TC:3 * TC]     # mean(target*guide)
        ggm = z[3 * TC:]           # mean(guide^2)
        cov = tgm - tm * gm
        var = ggm - gm * gm

        # Exact reciprocal keeps the tight correctness tolerance; flip
        # approx=True for EUP-approximate speed when the accuracy budget allows.
        a_s = cov * pl.reciprocal(var + eps_ref[s], approx=False)
        b_s = tm - a_s * gm
        w_s = w_ref[s]
        if s == 0:
            a_acc = w_s * a_s
            b_acc = w_s * b_s
        else:
            a_acc = a_acc + w_s * a_s
            b_acc = b_acc + w_s * b_s

    # Fused bilinear upsample of A and b + final blend, chunked over Hh so the
    # full-resolution intermediates never live in VMEM at once.
    up_dtype = jnp.bfloat16 if upsample_bf16 else jnp.float32
    ab = jnp.concatenate([a_acc, b_acc], axis=0)                 # (2TC, W, H)
    ab2 = ab.reshape(2 * TC * W, H).astype(up_dtype)
    uh = uht_ref[...].astype(up_dtype)                           # (H, Hh)
    uw = uwt_ref[...].astype(up_dtype)                           # (W, Wh)

    for h0 in range(0, Hh, _HH_CHUNK):                           # static unroll
        hc = min(_HH_CHUNK, Hh - h0)
        u = jnp.dot(ab2, uh[:, h0:h0 + hc],
                    preferred_element_type=jnp.float32)          # (2TC*W, hc)
        u = u.reshape(2 * TC, W, hc)
        u = jnp.swapaxes(u, -1, -2)                              # (2TC, hc, W)
        v = jnp.dot(u.reshape(2 * TC * hc, W).astype(up_dtype), uw,
                    preferred_element_type=jnp.float32)
        v = v.reshape(2 * TC, hc, Wh)
        a_up = v[:TC]
        b_up = v[TC:]
        g_hr = guide_hr_ref[:, pl.ds(h0, hc), :]
        out_ref[:, pl.ds(h0, hc), :] = (a_up * g_hr + b_up).astype(out_ref.dtype)


# ----------------------------------------------------------------------------
# Generation-aware sizing helpers
# ----------------------------------------------------------------------------
def _device_vmem_bytes():
    try:
        return int(pltpu.get_tpu_info().vmem_capacity_bytes)
    except Exception:
        return 128 * 1024 * 1024          # v5e/v6e physical VMEM


def _pick_channel_tile(B, C, H, W, Hh, Wh, ns, vmem_limit):
    """Largest channel tile whose per-step footprint fits the VMEM budget,
    preferring an even total grid-step count (both v7x TensorCores busy)."""
    chunk = min(Hh, _HH_CHUNK)
    consts = (ns * (H * H + W * W) + H * Hh + W * Wh) * 4

    def step_bytes(tc):
        io = 2 * (2 * tc * Hh * Wh + 2 * tc * H * W) * 4         # dbl-buffered blocks
        inter = ((4 * ns + 18) * tc * H * W + 2 * tc * chunk * (W + Wh)) * 4
        return io + inter

    budget = int(vmem_limit * 0.8) - consts
    divisors = [d for d in range(1, C + 1) if C % d == 0]
    fitting = [d for d in divisors if step_bytes(d) <= budget] or [1]
    even = [d for d in fitting if (B * (C // d)) % 2 == 0]
    return max(even) if even else max(fitting)


# ----------------------------------------------------------------------------
# Wrapper
# ----------------------------------------------------------------------------
def lmsgf_forward(guide_hr, guide, target, box_h, box_w, up_h, up_w, eps, wts,
                  channel_tile=None, upsample_bf16=False):
    B, C, H, W = target.shape
    Hh, Wh = guide_hr.shape[-2:]
    ns = box_h.shape[0]

    vmem_phys = _device_vmem_bytes()
    vmem_limit = max(32 * 1024 * 1024, vmem_phys - _VMEM_HEADROOM)

    tc = (channel_tile if channel_tile is not None
          else _pick_channel_tile(B, C, H, W, Hh, Wh, ns, vmem_limit))
    assert C % tc == 0, "channel_tile must divide C"

    # Fold the separable box normalization into the matrices (exact), pass
    # every matrix with its contraction dim leading, and concatenate the
    # width matrices of all scales along the output dim so the first
    # contraction is a single large-N matmul.
    nh = box_h / jnp.sum(box_h, axis=2, keepdims=True)           # (ns, H, H)
    nw = box_w / jnp.sum(box_w, axis=2, keepdims=True)           # (ns, W, W)
    nht = jnp.transpose(nh, (0, 2, 1))                           # [s, h, i]
    nwt_all = jnp.transpose(nw, (2, 0, 1)).reshape(W, ns * W)    # [w, s*W + k]
    uht = jnp.transpose(up_h)                                    # (H, Hh)
    uwt = jnp.transpose(up_w)                                    # (W, Wh)

    grid = (B, C // tc)
    n_steps = B * (C // tc)
    flops_per_step = (
        2 * (4 * tc * H) * W * (ns * W)          # fused width contraction
        + ns * 2 * (4 * tc * W) * H * H          # height contraction per scale
        + 2 * (2 * tc * W) * H * Hh              # upsample along H
        + 2 * (2 * tc * Hh) * W * Wh)            # upsample along W
    bytes_accessed = 4 * (B * C * (2 * H * W + 2 * Hh * Wh)
                          + ns * (H * H + W * W) + H * Hh + W * Wh)
    cost = pl.CostEstimate(flops=flops_per_step * n_steps, transcendentals=0,
                           bytes_accessed=bytes_accessed)

    kernel = functools.partial(_lmsgf_kernel, upsample_bf16=upsample_bf16)

    def build(single_buffer_consts):
        const_kw = ({"pipeline_mode": pl.Buffered(1)}
                    if single_buffer_consts else {})
        in_specs = [
            pl.BlockSpec((None, tc, Hh, Wh), lambda b, c: (b, c, 0, 0)),   # guide_hr
            pl.BlockSpec((None, tc, H, W), lambda b, c: (b, c, 0, 0)),     # guide
            pl.BlockSpec((None, tc, H, W), lambda b, c: (b, c, 0, 0)),     # target
            pl.BlockSpec((ns, H, H), lambda b, c: (0, 0, 0), **const_kw),  # Nh^T
            pl.BlockSpec((W, ns * W), lambda b, c: (0, 0), **const_kw),    # Nw^T fused
            pl.BlockSpec((H, Hh), lambda b, c: (0, 0), **const_kw),        # Uh^T
            pl.BlockSpec((W, Wh), lambda b, c: (0, 0), **const_kw),        # Uw^T
            pl.BlockSpec(memory_space=pltpu.MemorySpace.SMEM),             # eps
            pl.BlockSpec(memory_space=pltpu.MemorySpace.SMEM),             # weights
        ]
        return pl.pallas_call(
            kernel,
            out_shape=jax.ShapeDtypeStruct((B, C, Hh, Wh), jnp.float32),
            grid=grid,
            in_specs=in_specs,
            out_specs=pl.BlockSpec((None, tc, Hh, Wh), lambda b, c: (b, c, 0, 0)),
            compiler_params=pltpu.CompilerParams(
                dimension_semantics=("parallel", "parallel"),
                vmem_limit_bytes=int(vmem_limit)),
            cost_estimate=cost,
        )

    args = (guide_hr, guide, target, nht, nwt_all, uht, uwt, eps, wts)
    try:
        return build(single_buffer_consts=True)(*args)
    except Exception:
        # Fall back to default (double) buffering of the constant matrices if
        # the runtime rejects pl.Buffered(1).
        return build(single_buffer_consts=False)(*args)


# ----------------------------------------------------------------------------
# Glue: static matrices + module parameters
# ----------------------------------------------------------------------------
def get_kernel_sizes(h, w, num_scales):
    ks = [(min(h, 3), min(w, 3))]
    if num_scales > 1:
        dh, dw = abs(h - 3) // (num_scales - 1), abs(w - 3) // (num_scales - 1)
        ks += [(min(h, 3 + i * dh), min(w, 3 + i * dw))
               for i in range(1, num_scales - 1)]
        ks += [(h, w)]
    return ks


def box_matrix(n, k):
    # band matrix: M[i, j] = 1 iff i-(k-1)//2 <= j <= i+k//2   (zero padding)
    i = np.arange(n)[:, None]
    j = np.arange(n)[None, :]
    return ((j >= i - (k - 1) // 2) & (j <= i + k // 2)).astype(np.float32)


def bilinear_matrix(out_size, in_size):
    # PyTorch F.interpolate(mode='bilinear', align_corners=False), one axis.
    scale = in_size / out_size
    i = np.arange(out_size, dtype=np.float64)
    src = np.maximum((i + 0.5) * scale - 0.5, 0.0)
    i0 = np.minimum(np.floor(src).astype(np.int64), in_size - 1)
    frac = src - i0
    i1 = np.minimum(i0 + 1, in_size - 1)
    U = np.zeros((out_size, in_size), np.float64)
    np.add.at(U, (np.arange(out_size), i0), 1.0 - frac)
    np.add.at(U, (np.arange(out_size), i1), frac)
    return U.astype(np.float32)


def build_params(num_scales=3, epsilon=0.001, small_eps=1e-5):
    epsilon = max(epsilon, small_eps)
    log_eps = np.log(np.ones(num_scales, np.float32) * epsilon)
    log_eps = np.clip(log_eps, np.log(small_eps), 100.0)          # clamp_
    eps = np.exp(log_eps).astype(np.float32)                      # (ns,)
    raw_w = np.ones(num_scales, np.float32)
    wts = np.exp(raw_w - raw_w.max())
    wts = (wts / wts.sum()).astype(np.float32)                    # softmax
    return eps, wts


# ----------------------------------------------------------------------------
# Pure-JAX reference (module math: un-normalized box + explicit norm divide)
# ----------------------------------------------------------------------------
def reference(guide_hr, guide, target, box_h, box_w, up_h, up_w, eps, wts):
    def box(x, mh, mw):
        y = jnp.einsum('ih,bchw->bciw', mh, x)
        return jnp.einsum('bciw,kw->bcik', y, mw)

    ones = jnp.ones((1, 1) + target.shape[-2:], jnp.float32)
    A_acc = jnp.zeros_like(target)
    b_acc = jnp.zeros_like(target)
    for s in range(eps.shape[0]):
        norm = box(ones, box_h[s], box_w[s])
        tm = box(target, box_h[s], box_w[s]) / norm
        gm = box(guide, box_h[s], box_w[s]) / norm
        cov = box(target * guide, box_h[s], box_w[s]) / norm - tm * gm
        var = box(guide * guide, box_h[s], box_w[s]) / norm - gm * gm
        A = cov / (var + eps[s])
        b = tm - A * gm
        A_acc = A_acc + wts[s] * A
        b_acc = b_acc + wts[s] * b

    def ups(x):
        y = jnp.einsum('Ih,bchw->bcIw', up_h, x)
        return jnp.einsum('bcIw,Kw->bcIK', y, up_w)

    return ups(A_acc) * guide_hr + ups(b_acc)


# ----------------------------------------------------------------------------
if __name__ == "__main__":
    B, C, H, W = 2, 4, 16, 16
    Hh, Wh = 32, 32
    NS = 3

    key = jax.random.PRNGKey(0)
    k1, k2, k3 = jax.random.split(key, 3)
    guide_hr = jax.random.normal(k1, (B, C, Hh, Wh), jnp.float32)
    guide = jax.random.normal(k2, (B, C, H, W), jnp.float32)
    target = jax.random.normal(k3, (B, C, H, W), jnp.float32)

    kernel_sizes = get_kernel_sizes(H, W, NS)   # [(3,3), (9,9), (16,16)]
    box_h = jnp.asarray(np.stack([box_matrix(H, kh) for kh, _ in kernel_sizes]))
    box_w = jnp.asarray(np.stack([box_matrix(W, kw) for _, kw in kernel_sizes]))
    up_h = jnp.asarray(bilinear_matrix(Hh, H))
    up_w = jnp.asarray(bilinear_matrix(Wh, W))
    eps_np, wts_np = build_params(NS)
    eps = jnp.asarray(eps_np)
    wts = jnp.asarray(wts_np)

    ref = jax.block_until_ready(
        reference(guide_hr, guide, target, box_h, box_w, up_h, up_w, eps, wts))

    # Strict-accuracy path (f32 upsample); explicit channel_tile exercises the
    # channel grid axis.
    out = jax.block_until_ready(
        lmsgf_forward(guide_hr, guide, target, box_h, box_w, up_h, up_w,
                      eps, wts, channel_tile=2))
    np.testing.assert_allclose(np.asarray(out), np.asarray(ref),
                               rtol=5e-3, atol=5e-3)

    # bf16-upsample fast path (MXU bf16 rate) with auto channel tile; looser
    # tolerance because A/b and the bilinear weights are rounded to bf16.
    out_bf16 = jax.block_until_ready(
        lmsgf_forward(guide_hr, guide, target, box_h, box_w, up_h, up_w,
                      eps, wts, upsample_bf16=True))
    np.testing.assert_allclose(np.asarray(out_bf16), np.asarray(ref),
                               rtol=5e-2, atol=5e-2)

    print("KERNEL_OK")
</pallas_src>

<mosaic_0001>
module attributes {stable_mosaic.version = 11 : i64} {
  func.func @_lmsgf_kernel(%arg0: i32, %arg1: i32, %arg2: memref<1x2x32x32xf32, #tpu.memory_space<vmem>>, %arg3: memref<1x2x16x16xf32, #tpu.memory_space<vmem>>, %arg4: memref<1x2x16x16xf32, #tpu.memory_space<vmem>>, %arg5: memref<3x16x16xf32, #tpu.memory_space<vmem>>, %arg6: memref<16x48xf32, #tpu.memory_space<vmem>>, %arg7: memref<16x32xf32, #tpu.memory_space<vmem>>, %arg8: memref<16x32xf32, #tpu.memory_space<vmem>>, %arg9: memref<3xf32, #tpu.memory_space<smem>>, %arg10: memref<3xf32, #tpu.memory_space<smem>>, %arg11: memref<1x2x32x32xf32, #tpu.memory_space<vmem>>) attributes {dimension_semantics = [#tpu.dimension_semantics<parallel>, #tpu.dimension_semantics<parallel>], iteration_bounds = array<i64: 2, 2>, scalar_prefetch = 0 : i64, scratch_operands = 0 : i64, tpu.core_type = #tpu.core_type<tc>, window_params = [{transform_indices = @transform_0, window_bounds = array<i64: 1, 2, 32, 32>}, {transform_indices = @transform_1, window_bounds = array<i64: 1, 2, 16, 16>}, {transform_indices = @transform_2, window_bounds = array<i64: 1, 2, 16, 16>}, {pipeline_mode = #tpu.pipeline_mode<synchronous>, transform_indices = @transform_3, window_bounds = array<i64: 3, 16, 16>}, {pipeline_mode = #tpu.pipeline_mode<synchronous>, transform_indices = @transform_4, window_bounds = array<i64: 16, 48>}, {pipeline_mode = #tpu.pipeline_mode<synchronous>, transform_indices = @transform_5, window_bounds = array<i64: 16, 32>}, {pipeline_mode = #tpu.pipeline_mode<synchronous>, transform_indices = @transform_6, window_bounds = array<i64: 16, 32>}, {transform_indices = @transform_7, window_bounds = array<i64: 3>}, {transform_indices = @transform_8, window_bounds = array<i64: 3>}, {transform_indices = @transform_9, window_bounds = array<i64: 1, 2, 32, 32>}]} {
    %c0 = arith.constant 0 : index
    %c0_0 = arith.constant 0 : index
    %c0_1 = arith.constant 0 : index
    %c0_2 = arith.constant 0 : index
    %0 = vector.load %arg4[%c0, %c0_0, %c0_1, %c0_2] : memref<1x2x16x16xf32, #tpu.memory_space<vmem>>, vector<1x2x16x16xf32>
    %1 = vector.shape_cast %0 : vector<1x2x16x16xf32> to vector<2x16x16xf32>
    %c0_3 = arith.constant 0 : index
    %c0_4 = arith.constant 0 : index
    %c0_5 = arith.constant 0 : index
    %c0_6 = arith.constant 0 : index
    %2 = vector.load %arg3[%c0_3, %c0_4, %c0_5, %c0_6] : memref<1x2x16x16xf32, #tpu.memory_space<vmem>>, vector<1x2x16x16xf32>
    %3 = vector.shape_cast %2 : vector<1x2x16x16xf32> to vector<2x16x16xf32>
    %4 = arith.mulf %1, %3 : vector<2x16x16xf32>
    %5 = arith.mulf %3, %3 : vector<2x16x16xf32>
    %6 = tpu.concatenate %1, %3, %4, %5 in 0 : vector<2x16x16xf32>, vector<2x16x16xf32>, vector<2x16x16xf32>, vector<2x16x16xf32> -> vector<8x16x16xf32>
    %7 = vector.shape_cast %6 : vector<8x16x16xf32> to vector<128x16xf32>
    %c0_7 = arith.constant 0 : index
    %c0_8 = arith.constant 0 : index
    %8 = vector.load %arg6[%c0_7, %c0_8] : memref<16x48xf32, #tpu.memory_space<vmem>>, vector<16x48xf32>
    %cst = arith.constant dense<0.000000e+00> : vector<128x48xf32>
    %9 = tpu.matmul %7, %8, %cst {dimension_numbers = #tpu.dot_dimension_numbers<[1], [0], [0], [1], [0, 0, 1, 1], [], []>} : vector<128x16xf32>, vector<16x48xf32>, vector<128x48xf32> -> vector<128x48xf32>
    %10 = vector.shape_cast %9 : vector<128x48xf32> to vector<8x16x48xf32>
    %11 = vector.extract_strided_slice %10 {offsets = [0, 0, 0], sizes = [8, 16, 16], strides = [1, 1, 1]} : vector<8x16x48xf32> to vector<8x16x16xf32>
    %12 = tpu.transpose %11, [0, 2, 1] : vector<8x16x16xf32> -> vector<8x16x16xf32>
    %13 = vector.shape_cast %12 : vector<8x16x16xf32> to vector<128x16xf32>
    %c0_9 = arith.constant 0 : index
    %c0_10 = arith.constant 0 : index
    %c0_11 = arith.constant 0 : index
    %14 = vector.load %arg5[%c0_9, %c0_10, %c0_11] : memref<3x16x16xf32, #tpu.memory_space<vmem>>, vector<1x16x16xf32>
    %15 = vector.shape_cast %14 : vector<1x16x16xf32> to vector<16x16xf32>
    %cst_12 = arith.constant dense<0.000000e+00> : vector<128x16xf32>
    %16 = tpu.matmul %13, %15, %cst_12 {dimension_numbers = #tpu.dot_dimension_numbers<[1], [0], [0], [1], [0, 0, 1, 1], [], []>} : vector<128x16xf32>, vector<16x16xf32>, vector<128x16xf32> -> vector<128x16xf32>
    %17 = vector.shape_cast %16 : vector<128x16xf32> to vector<8x16x16xf32>
    %18 = vector.extract_strided_slice %17 {offsets = [0, 0, 0], sizes = [2, 16, 16], strides = [1, 1, 1]} : vector<8x16x16xf32> to vector<2x16x16xf32>
    %19 = vector.extract_strided_slice %17 {offsets = [2, 0, 0], sizes = [2, 16, 16], strides = [1, 1, 1]} : vector<8x16x16xf32> to vector<2x16x16xf32>
    %20 = vector.extract_strided_slice %17 {offsets = [4, 0, 0], sizes = [2, 16, 16], strides = [1, 1, 1]} : vector<8x16x16xf32> to vector<2x16x16xf32>
    %21 = vector.extract_strided_slice %17 {offsets = [6, 0, 0], sizes = [2, 16, 16], strides = [1, 1, 1]} : vector<8x16x16xf32> to vector<2x16x16xf32>
    %22 = arith.mulf %18, %19 : vector<2x16x16xf32>
    %23 = arith.subf %20, %22 : vector<2x16x16xf32>
    %24 = arith.mulf %19, %19 : vector<2x16x16xf32>
    %25 = arith.subf %21, %24 : vector<2x16x16xf32>
    %c0_13 = arith.constant 0 : index
    %26 = memref.load %arg9[%c0_13] : memref<3xf32, #tpu.memory_space<smem>>
    %27 = vector.broadcast %26 : f32 to vector<2x16x16xf32>
    %28 = arith.addf %25, %27 : vector<2x16x16xf32>
    %29 = tpu.reciprocal %28 : vector<2x16x16xf32> -> vector<2x16x16xf32>
    %30 = arith.mulf %23, %29 : vector<2x16x16xf32>
    %31 = arith.mulf %30, %19 : vector<2x16x16xf32>
    %32 = arith.subf %18, %31 : vector<2x16x16xf32>
    %c0_14 = arith.constant 0 : index
    %33 = memref.load %arg10[%c0_14] : memref<3xf32, #tpu.memory_space<smem>>
    %34 = vector.broadcast %33 : f32 to vector<2x16x16xf32>
    %35 = arith.mulf %34, %30 : vector<2x16x16xf32>
    %36 = vector.broadcast %33 : f32 to vector<2x16x16xf32>
    %37 = arith.mulf %36, %32 : vector<2x16x16xf32>
    %38 = vector.extract_strided_slice %10 {offsets = [0, 0, 16], sizes = [8, 16, 16], strides = [1, 1, 1]} : vector<8x16x48xf32> to vector<8x16x16xf32>
    %39 = tpu.transpose %38, [0, 2, 1] : vector<8x16x16xf32> -> vector<8x16x16xf32>
    %40 = vector.shape_cast %39 : vector<8x16x16xf32> to vector<128x16xf32>
    %c1 = arith.constant 1 : index
    %c0_15 = arith.constant 0 : index
    %c0_16 = arith.constant 0 : index
    %41 = vector.load %arg5[%c1, %c0_15, %c0_16] : memref<3x16x16xf32, #tpu.memory_space<vmem>>, vector<1x16x16xf32>
    %42 = vector.shape_cast %41 : vector<1x16x16xf32> to vector<16x16xf32>
    %cst_17 = arith.constant dense<0.000000e+00> : vector<128x16xf32>
    %43 = tpu.matmul %40, %42, %cst_17 {dimension_numbers = #tpu.dot_dimension_numbers<[1], [0], [0], [1], [0, 0, 1, 1], [], []>} : vector<128x16xf32>, vector<16x16xf32>, vector<128x16xf32> -> vector<128x16xf32>
    %44 = vector.shape_cast %43 : vector<128x16xf32> to vector<8x16x16xf32>
    %45 = vector.extract_strided_slice %44 {offsets = [0, 0, 0], sizes = [2, 16, 16], strides = [1, 1, 1]} : vector<8x16x16xf32> to vector<2x16x16xf32>
    %46 = vector.extract_strided_slice %44 {offsets = [2, 0, 0], sizes = [2, 16, 16], strides = [1, 1, 1]} : vector<8x16x16xf32> to vector<2x16x16xf32>
    %47 = vector.extract_strided_slice %44 {offsets = [4, 0, 0], sizes = [2, 16, 16], strides = [1, 1, 1]} : vector<8x16x16xf32> to vector<2x16x16xf32>
    %48 = vector.extract_strided_slice %44 {offsets = [6, 0, 0], sizes = [2, 16, 16], strides = [1, 1, 1]} : vector<8x16x16xf32> to vector<2x16x16xf32>
    %49 = arith.mulf %45, %46 : vector<2x16x16xf32>
    %50 = arith.subf %47, %49 : vector<2x16x16xf32>
    %51 = arith.mulf %46, %46 : vector<2x16x16xf32>
    %52 = arith.subf %48, %51 : vector<2x16x16xf32>
    %c1_18 = arith.constant 1 : index
    %53 = memref.load %arg9[%c1_18] : memref<3xf32, #tpu.memory_space<smem>>
    %54 = vector.broadcast %53 : f32 to vector<2x16x16xf32>
    %55 = arith.addf %52, %54 : vector<2x16x16xf32>
    %56 = tpu.reciprocal %55 : vector<2x16x16xf32> -> vector<2x16x16xf32>
    %57 = arith.mulf %50, %56 : vector<2x16x16xf32>
    %58 = arith.mulf %57, %46 : vector<2x16x16xf32>
    %59 = arith.subf %45, %58 : vector<2x16x16xf32>
    %c1_19 = arith.constant 1 : index
    %60 = memref.load %arg10[%c1_19] : memref<3xf32, #tpu.memory_space<smem>>
    %61 = vector.broadcast %60 : f32 to vector<2x16x16xf32>
    %62 = arith.mulf %61, %57 : vector<2x16x16xf32>
    %63 = arith.addf %35, %62 : vector<2x16x16xf32>
    %64 = vector.broadcast %60 : f32 to vector<2x16x16xf32>
    %65 = arith.mulf %64, %59 : vector<2x16x16xf32>
    %66 = arith.addf %37, %65 : vector<2x16x16xf32>
    %67 = vector.extract_strided_slice %10 {offsets = [0, 0, 32], sizes = [8, 16, 16], strides = [1, 1, 1]} : vector<8x16x48xf32> to vector<8x16x16xf32>
    %68 = tpu.transpose %67, [0, 2, 1] : vector<8x16x16xf32> -> vector<8x16x16xf32>
    %69 = vector.shape_cast %68 : vector<8x16x16xf32> to vector<128x16xf32>
    %c2 = arith.constant 2 : index
    %c0_20 = arith.constant 0 : index
    %c0_21 = arith.constant 0 : index
    %70 = vector.load %arg5[%c2, %c0_20, %c0_21] : memref<3x16x16xf32, #tpu.memory_space<vmem>>, vector<1x16x16xf32>
    %71 = vector.shape_cast %70 : vector<1x16x16xf32> to vector<16x16xf32>
    %cst_22 = arith.constant dense<0.000000e+00> : vector<128x16xf32>
    %72 = tpu.matmul %69, %71, %cst_22 {dimension_numbers = #tpu.dot_dimension_numbers<[1], [0], [0], [1], [0, 0, 1, 1], [], []>} : vector<128x16xf32>, vector<16x16xf32>, vector<128x16xf32> -> vector<128x16xf32>
    %73 = vector.shape_cast %72 : vector<128x16xf32> to vector<8x16x16xf32>
    %74 = vector.extract_strided_slice %73 {offsets = [0, 0, 0], sizes = [2, 16, 16], strides = [1, 1, 1]} : vector<8x16x16xf32> to vector<2x16x16xf32>
    %75 = vector.extract_strided_slice %73 {offsets = [2, 0, 0], sizes = [2, 16, 16], strides = [1, 1, 1]} : vector<8x16x16xf32> to vector<2x16x16xf32>
    %76 = vector.extract_strided_slice %73 {offsets = [4, 0, 0], sizes = [2, 16, 16], strides = [1, 1, 1]} : vector<8x16x16xf32> to vector<2x16x16xf32>
    %77 = vector.extract_strided_slice %73 {offsets = [6, 0, 0], sizes = [2, 16, 16], strides = [1, 1, 1]} : vector<8x16x16xf32> to vector<2x16x16xf32>
    %78 = arith.mulf %74, %75 : vector<2x16x16xf32>
    %79 = arith.subf %76, %78 : vector<2x16x16xf32>
    %80 = arith.mulf %75, %75 : vector<2x16x16xf32>
    %81 = arith.subf %77, %80 : vector<2x16x16xf32>
    %c2_23 = arith.constant 2 : index
    %82 = memref.load %arg9[%c2_23] : memref<3xf32, #tpu.memory_space<smem>>
    %83 = vector.broadcast %82 : f32 to vector<2x16x16xf32>
    %84 = arith.addf %81, %83 : vector<2x16x16xf32>
    %85 = tpu.reciprocal %84 : vector<2x16x16xf32> -> vector<2x16x16xf32>
    %86 = arith.mulf %79, %85 : vector<2x16x16xf32>
    %87 = arith.mulf %86, %75 : vector<2x16x16xf32>
    %88 = arith.subf %74, %87 : vector<2x16x16xf32>
    %c2_24 = arith.constant 2 : index
    %89 = memref.load %arg10[%c2_24] : memref<3xf32, #tpu.memory_space<smem>>
    %90 = vector.broadcast %89 : f32 to vector<2x16x16xf32>
    %91 = arith.mulf %90, %86 : vector<2x16x16xf32>
    %92 = arith.addf %63, %91 : vector<2x16x16xf32>
    %93 = vector.broadcast %89 : f32 to vector<2x16x16xf32>
    %94 = arith.mulf %93, %88 : vector<2x16x16xf32>
    %95 = arith.addf %66, %94 : vector<2x16x16xf32>
    %96 = tpu.concatenate %92, %95 in 0 : vector<2x16x16xf32>, vector<2x16x16xf32> -> vector<4x16x16xf32>
    %97 = vector.shape_cast %96 : vector<4x16x16xf32> to vector<64x16xf32>
    %c0_25 = arith.constant 0 : index
    %c0_26 = arith.constant 0 : index
    %98 = vector.load %arg7[%c0_25, %c0_26] : memref<16x32xf32, #tpu.memory_space<vmem>>, vector<16x32xf32>
    %c0_27 = arith.constant 0 : index
    %c0_28 = arith.constant 0 : index
    %99 = vector.load %arg8[%c0_27, %c0_28] : memref<16x32xf32, #tpu.memory_space<vmem>>, vector<16x32xf32>
    %cst_29 = arith.constant dense<0.000000e+00> : vector<64x32xf32>
    %100 = tpu.matmul %97, %98, %cst_29 {dimension_numbers = #tpu.dot_dimension_numbers<[1], [0], [0], [1], [0, 0, 1, 1], [], []>} : vector<64x16xf32>, vector<16x32xf32>, vector<64x32xf32> -> vector<64x32xf32>
    %101 = vector.shape_cast %100 : vector<64x32xf32> to vector<4x16x32xf32>
    %102 = tpu.transpose %101, [0, 2, 1] : vector<4x16x32xf32> -> vector<4x32x16xf32>
    %103 = vector.shape_cast %102 : vector<4x32x16xf32> to vector<128x16xf32>
    %cst_30 = arith.constant dense<0.000000e+00> : vector<128x32xf32>
    %104 = tpu.matmul %103, %99, %cst_30 {dimension_numbers = #tpu.dot_dimension_numbers<[1], [0], [0], [1], [0, 0, 1, 1], [], []>} : vector<128x16xf32>, vector<16x32xf32>, vector<128x32xf32> -> vector<128x32xf32>
    %105 = vector.shape_cast %104 : vector<128x32xf32> to vector<4x32x32xf32>
    %106 = vector.extract_strided_slice %105 {offsets = [0, 0, 0], sizes = [2, 32, 32], strides = [1, 1, 1]} : vector<4x32x32xf32> to vector<2x32x32xf32>
    %107 = vector.extract_strided_slice %105 {offsets = [2, 0, 0], sizes = [2, 32, 32], strides = [1, 1, 1]} : vector<4x32x32xf32> to vector<2x32x32xf32>
    %c0_31 = arith.constant 0 : index
    %c0_32 = arith.constant 0 : index
    %c0_33 = arith.constant 0 : index
    %c0_34 = arith.constant 0 : index
    %108 = vector.load %arg2[%c0_31, %c0_32, %c0_33, %c0_34] : memref<1x2x32x32xf32, #tpu.memory_space<vmem>>, vector<1x2x32x32xf32>
    %109 = vector.shape_cast %108 : vector<1x2x32x32xf32> to vector<2x32x32xf32>
    %110 = arith.mulf %106, %109 : vector<2x32x32xf32>
    %111 = arith.addf %110, %107 : vector<2x32x32xf32>
    %c0_35 = arith.constant 0 : index
    %c0_36 = arith.constant 0 : index
    %c0_37 = arith.constant 0 : index
    %c0_38 = arith.constant 0 : index
    %112 = vector.load %arg11[%c0_35, %c0_36, %c0_37, %c0_38] : memref<1x2x32x32xf32, #tpu.memory_space<vmem>>, vector<1x2x32x32xf32>
    %113 = vector.shape_cast %112 : vector<1x2x32x32xf32> to vector<2x32x32xf32>
    %114 = vector.shape_cast %111 : vector<2x32x32xf32> to vector<1x2x32x32xf32>
    tpu.vector_store %arg11[%c0_35, %c0_36, %c0_37, %c0_38], %114 {strides = array<i32>} : memref<1x2x32x32xf32, #tpu.memory_space<vmem>>, vector<1x2x32x32xf32>,
    return
  }
  func.func @transform_0(%arg0: i32, %arg1: i32) -> (i32, i32, i32, i32) {
    %c0_i32 = arith.constant 0 : i32
    %c0_i32_0 = arith.constant 0 : i32
    %c0_i32_1 = arith.constant 0 : i32
    return %arg0, %arg1, %c0_i32, %c0_i32_0 : i32, i32, i32, i32
  }
  func.func @transform_1(%arg0: i32, %arg1: i32) -> (i32, i32, i32, i32) {
    %c0_i32 = arith.constant 0 : i32
    %c0_i32_0 = arith.constant 0 : i32
    %c0_i32_1 = arith.constant 0 : i32
    return %arg0, %arg1, %c0_i32, %c0_i32_0 : i32, i32, i32, i32
  }
  func.func @transform_2(%arg0: i32, %arg1: i32) -> (i32, i32, i32, i32) {
    %c0_i32 = arith.constant 0 : i32
    %c0_i32_0 = arith.constant 0 : i32
    %c0_i32_1 = arith.constant 0 : i32
    return %arg0, %arg1, %c0_i32, %c0_i32_0 : i32, i32, i32, i32
  }
  func.func @transform_3(%arg0: i32, %arg1: i32) -> (i32, i32, i32) {
    %c0_i32 = arith.constant 0 : i32
    %c0_i32_0 = arith.constant 0 : i32
    %c0_i32_1 = arith.constant 0 : i32
    %c0_i32_2 = arith.constant 0 : i32
    return %c0_i32, %c0_i32_0, %c0_i32_1 : i32, i32, i32
  }
  func.func @transform_4(%arg0: i32, %arg1: i32) -> (i32, i32) {
    %c0_i32 = arith.constant 0 : i32
    %c0_i32_0 = arith.constant 0 : i32
    %c0_i32_1 = arith.constant 0 : i32
    return %c0_i32, %c0_i32_0 : i32, i32
  }
  func.func @transform_5(%arg0: i32, %arg1: i32) -> (i32, i32) {
    %c0_i32 = arith.constant 0 : i32
    %c0_i32_0 = arith.constant 0 : i32
    %c0_i32_1 = arith.constant 0 : i32
    return %c0_i32, %c0_i32_0 : i32, i32
  }
  func.func @transform_6(%arg0: i32, %arg1: i32) -> (i32, i32) {
    %c0_i32 = arith.constant 0 : i32
    %c0_i32_0 = arith.constant 0 : i32
    %c0_i32_1 = arith.constant 0 : i32
    return %c0_i32, %c0_i32_0 : i32, i32
  }
  func.func @transform_7(%arg0: i32, %arg1: i32) -> i32 {
    %c0_i32 = arith.constant 0 : i32
    %c0_i32_0 = arith.constant 0 : i32
    return %c0_i32 : i32
  }
  func.func @transform_8(%arg0: i32, %arg1: i32) -> i32 {
    %c0_i32 = arith.constant 0 : i32
    %c0_i32_0 = arith.constant 0 : i32
    return %c0_i32 : i32
  }
  func.func @transform_9(%arg0: i32, %arg1: i32) -> (i32, i32, i32, i32) {
    %c0_i32 = arith.constant 0 : i32
    %c0_i32_0 = arith.constant 0 : i32
    %c0_i32_1 = arith.constant 0 : i32
    return %arg0, %arg1, %c0_i32, %c0_i32_0 : i32, i32, i32, i32
  }
}

module attributes {stable_mosaic.version = 11 : i64} {
  func.func @_lmsgf_kernel(%arg0: i32, %arg1: i32, %arg2: memref<1x2x32x32xf32, #tpu.memory_space<vmem>>, %arg3: memref<1x2x16x16xf32, #tpu.memory_space<vmem>>, %arg4: memref<1x2x16x16xf32, #tpu.memory_space<vmem>>, %arg5: memref<3x16x16xf32, #tpu.memory_space<vmem>>, %arg6: memref<16x48xf32, #tpu.memory_space<vmem>>, %arg7: memref<16x32xf32, #tpu.memory_space<vmem>>, %arg8: memref<16x32xf32, #tpu.memory_space<vmem>>, %arg9: memref<3xf32, #tpu.memory_space<smem>>, %arg10: memref<3xf32, #tpu.memory_space<smem>>, %arg11: memref<1x2x32x32xf32, #tpu.memory_space<vmem>>) attributes {dimension_semantics = [#tpu.dimension_semantics<parallel>, #tpu.dimension_semantics<parallel>], iteration_bounds = array<i64: 2, 2>, scalar_prefetch = 0 : i64, scratch_operands = 0 : i64, tpu.core_type = #tpu.core_type<tc>, window_params = [{transform_indices = @transform_0, window_bounds = array<i64: 1, 2, 32, 32>}, {transform_indices = @transform_1, window_bounds = array<i64: 1, 2, 16, 16>}, {transform_indices = @transform_2, window_bounds = array<i64: 1, 2, 16, 16>}, {pipeline_mode = #tpu.pipeline_mode<synchronous>, transform_indices = @transform_3, window_bounds = array<i64: 3, 16, 16>}, {pipeline_mode = #tpu.pipeline_mode<synchronous>, transform_indices = @transform_4, window_bounds = array<i64: 16, 48>}, {pipeline_mode = #tpu.pipeline_mode<synchronous>, transform_indices = @transform_5, window_bounds = array<i64: 16, 32>}, {pipeline_mode = #tpu.pipeline_mode<synchronous>, transform_indices = @transform_6, window_bounds = array<i64: 16, 32>}, {transform_indices = @transform_7, window_bounds = array<i64: 3>}, {transform_indices = @transform_8, window_bounds = array<i64: 3>}, {transform_indices = @transform_9, window_bounds = array<i64: 1, 2, 32, 32>}]} {
    %c0 = arith.constant 0 : index
    %c0_0 = arith.constant 0 : index
    %c0_1 = arith.constant 0 : index
    %c0_2 = arith.constant 0 : index
    %0 = vector.load %arg4[%c0, %c0_0, %c0_1, %c0_2] : memref<1x2x16x16xf32, #tpu.memory_space<vmem>>, vector<1x2x16x16xf32>
    %1 = vector.shape_cast %0 : vector<1x2x16x16xf32> to vector<2x16x16xf32>
    %c0_3 = arith.constant 0 : index
    %c0_4 = arith.constant 0 : index
    %c0_5 = arith.constant 0 : index
    %c0_6 = arith.constant 0 : index
    %2 = vector.load %arg3[%c0_3, %c0_4, %c0_5, %c0_6] : memref<1x2x16x16xf32, #tpu.memory_space<vmem>>, vector<1x2x16x16xf32>
    %3 = vector.shape_cast %2 : vector<1x2x16x16xf32> to vector<2x16x16xf32>
    %4 = arith.mulf %1, %3 : vector<2x16x16xf32>
    %5 = arith.mulf %3, %3 : vector<2x16x16xf32>
    %6 = tpu.concatenate %1, %3, %4, %5 in 0 : vector<2x16x16xf32>, vector<2x16x16xf32>, vector<2x16x16xf32>, vector<2x16x16xf32> -> vector<8x16x16xf32>
    %7 = vector.shape_cast %6 : vector<8x16x16xf32> to vector<128x16xf32>
    %c0_7 = arith.constant 0 : index
    %c0_8 = arith.constant 0 : index
    %8 = vector.load %arg6[%c0_7, %c0_8] : memref<16x48xf32, #tpu.memory_space<vmem>>, vector<16x48xf32>
    %cst = arith.constant dense<0.000000e+00> : vector<128x48xf32>
    %9 = tpu.matmul %7, %8, %cst {dimension_numbers = #tpu.dot_dimension_numbers<[1], [0], [0], [1], [0, 0, 1, 1], [], []>} : vector<128x16xf32>, vector<16x48xf32>, vector<128x48xf32> -> vector<128x48xf32>
    %10 = vector.shape_cast %9 : vector<128x48xf32> to vector<8x16x48xf32>
    %11 = vector.extract_strided_slice %10 {offsets = [0, 0, 0], sizes = [8, 16, 16], strides = [1, 1, 1]} : vector<8x16x48xf32> to vector<8x16x16xf32>
    %12 = tpu.transpose %11, [0, 2, 1] : vector<8x16x16xf32> -> vector<8x16x16xf32>
    %13 = vector.shape_cast %12 : vector<8x16x16xf32> to vector<128x16xf32>
    %c0_9 = arith.constant 0 : index
    %c0_10 = arith.constant 0 : index
    %c0_11 = arith.constant 0 : index
    %14 = vector.load %arg5[%c0_9, %c0_10, %c0_11] : memref<3x16x16xf32, #tpu.memory_space<vmem>>, vector<1x16x16xf32>
    %15 = vector.shape_cast %14 : vector<1x16x16xf32> to vector<16x16xf32>
    %cst_12 = arith.constant dense<0.000000e+00> : vector<128x16xf32>
    %16 = tpu.matmul %13, %15, %cst_12 {dimension_numbers = #tpu.dot_dimension_numbers<[1], [0], [0], [1], [0, 0, 1, 1], [], []>} : vector<128x16xf32>, vector<16x16xf32>, vector<128x16xf32> -> vector<128x16xf32>
    %17 = vector.shape_cast %16 : vector<128x16xf32> to vector<8x16x16xf32>
    %18 = vector.extract_strided_slice %17 {offsets = [0, 0, 0], sizes = [2, 16, 16], strides = [1, 1, 1]} : vector<8x16x16xf32> to vector<2x16x16xf32>
    %19 = vector.extract_strided_slice %17 {offsets = [2, 0, 0], sizes = [2, 16, 16], strides = [1, 1, 1]} : vector<8x16x16xf32> to vector<2x16x16xf32>
    %20 = vector.extract_strided_slice %17 {offsets = [4, 0, 0], sizes = [2, 16, 16], strides = [1, 1, 1]} : vector<8x16x16xf32> to vector<2x16x16xf32>
    %21 = vector.extract_strided_slice %17 {offsets = [6, 0, 0], sizes = [2, 16, 16], strides = [1, 1, 1]} : vector<8x16x16xf32> to vector<2x16x16xf32>
    %22 = arith.mulf %18, %19 : vector<2x16x16xf32>
    %23 = arith.subf %20, %22 : vector<2x16x16xf32>
    %24 = arith.mulf %19, %19 : vector<2x16x16xf32>
    %25 = arith.subf %21, %24 : vector<2x16x16xf32>
    %c0_13 = arith.constant 0 : index
    %26 = memref.load %arg9[%c0_13] : memref<3xf32, #tpu.memory_space<smem>>
    %27 = vector.broadcast %26 : f32 to vector<2x16x16xf32>
    %28 = arith.addf %25, %27 : vector<2x16x16xf32>
    %29 = tpu.reciprocal %28 : vector<2x16x16xf32> -> vector<2x16x16xf32>
    %30 = arith.mulf %23, %29 : vector<2x16x16xf32>
    %31 = arith.mulf %30, %19 : vector<2x16x16xf32>
    %32 = arith.subf %18, %31 : vector<2x16x16xf32>
    %c0_14 = arith.constant 0 : index
    %33 = memref.load %arg10[%c0_14] : memref<3xf32, #tpu.memory_space<smem>>
    %34 = vector.broadcast %33 : f32 to vector<2x16x16xf32>
    %35 = arith.mulf %34, %30 : vector<2x16x16xf32>
    %36 = vector.broadcast %33 : f32 to vector<2x16x16xf32>
    %37 = arith.mulf %36, %32 : vector<2x16x16xf32>
    %38 = vector.extract_strided_slice %10 {offsets = [0, 0, 16], sizes = [8, 16, 16], strides = [1, 1, 1]} : vector<8x16x48xf32> to vector<8x16x16xf32>
    %39 = tpu.transpose %38, [0, 2, 1] : vector<8x16x16xf32> -> vector<8x16x16xf32>
    %40 = vector.shape_cast %39 : vector<8x16x16xf32> to vector<128x16xf32>
    %c1 = arith.constant 1 : index
    %c0_15 = arith.constant 0 : index
    %c0_16 = arith.constant 0 : index
    %41 = vector.load %arg5[%c1, %c0_15, %c0_16] : memref<3x16x16xf32, #tpu.memory_space<vmem>>, vector<1x16x16xf32>
    %42 = vector.shape_cast %41 : vector<1x16x16xf32> to vector<16x16xf32>
    %cst_17 = arith.constant dense<0.000000e+00> : vector<128x16xf32>
    %43 = tpu.matmul %40, %42, %cst_17 {dimension_numbers = #tpu.dot_dimension_numbers<[1], [0], [0], [1], [0, 0, 1, 1], [], []>} : vector<128x16xf32>, vector<16x16xf32>, vector<128x16xf32> -> vector<128x16xf32>
    %44 = vector.shape_cast %43 : vector<128x16xf32> to vector<8x16x16xf32>
    %45 = vector.extract_strided_slice %44 {offsets = [0, 0, 0], sizes = [2, 16, 16], strides = [1, 1, 1]} : vector<8x16x16xf32> to vector<2x16x16xf32>
    %46 = vector.extract_strided_slice %44 {offsets = [2, 0, 0], sizes = [2, 16, 16], strides = [1, 1, 1]} : vector<8x16x16xf32> to vector<2x16x16xf32>
    %47 = vector.extract_strided_slice %44 {offsets = [4, 0, 0], sizes = [2, 16, 16], strides = [1, 1, 1]} : vector<8x16x16xf32> to vector<2x16x16xf32>
    %48 = vector.extract_strided_slice %44 {offsets = [6, 0, 0], sizes = [2, 16, 16], strides = [1, 1, 1]} : vector<8x16x16xf32> to vector<2x16x16xf32>
    %49 = arith.mulf %45, %46 : vector<2x16x16xf32>
    %50 = arith.subf %47, %49 : vector<2x16x16xf32>
    %51 = arith.mulf %46, %46 : vector<2x16x16xf32>
    %52 = arith.subf %48, %51 : vector<2x16x16xf32>
    %c1_18 = arith.constant 1 : index
    %53 = memref.load %arg9[%c1_18] : memref<3xf32, #tpu.memory_space<smem>>
    %54 = vector.broadcast %53 : f32 to vector<2x16x16xf32>
    %55 = arith.addf %52, %54 : vector<2x16x16xf32>
    %56 = tpu.reciprocal %55 : vector<2x16x16xf32> -> vector<2x16x16xf32>
    %57 = arith.mulf %50, %56 : vector<2x16x16xf32>
    %58 = arith.mulf %57, %46 : vector<2x16x16xf32>
    %59 = arith.subf %45, %58 : vector<2x16x16xf32>
    %c1_19 = arith.constant 1 : index
    %60 = memref.load %arg10[%c1_19] : memref<3xf32, #tpu.memory_space<smem>>
    %61 = vector.broadcast %60 : f32 to vector<2x16x16xf32>
    %62 = arith.mulf %61, %57 : vector<2x16x16xf32>
    %63 = arith.addf %35, %62 : vector<2x16x16xf32>
    %64 = vector.broadcast %60 : f32 to vector<2x16x16xf32>
    %65 = arith.mulf %64, %59 : vector<2x16x16xf32>
    %66 = arith.addf %37, %65 : vector<2x16x16xf32>
    %67 = vector.extract_strided_slice %10 {offsets = [0, 0, 32], sizes = [8, 16, 16], strides = [1, 1, 1]} : vector<8x16x48xf32> to vector<8x16x16xf32>
    %68 = tpu.transpose %67, [0, 2, 1] : vector<8x16x16xf32> -> vector<8x16x16xf32>
    %69 = vector.shape_cast %68 : vector<8x16x16xf32> to vector<128x16xf32>
    %c2 = arith.constant 2 : index
    %c0_20 = arith.constant 0 : index
    %c0_21 = arith.constant 0 : index
    %70 = vector.load %arg5[%c2, %c0_20, %c0_21] : memref<3x16x16xf32, #tpu.memory_space<vmem>>, vector<1x16x16xf32>
    %71 = vector.shape_cast %70 : vector<1x16x16xf32> to vector<16x16xf32>
    %cst_22 = arith.constant dense<0.000000e+00> : vector<128x16xf32>
    %72 = tpu.matmul %69, %71, %cst_22 {dimension_numbers = #tpu.dot_dimension_numbers<[1], [0], [0], [1], [0, 0, 1, 1], [], []>} : vector<128x16xf32>, vector<16x16xf32>, vector<128x16xf32> -> vector<128x16xf32>
    %73 = vector.shape_cast %72 : vector<128x16xf32> to vector<8x16x16xf32>
    %74 = vector.extract_strided_slice %73 {offsets = [0, 0, 0], sizes = [2, 16, 16], strides = [1, 1, 1]} : vector<8x16x16xf32> to vector<2x16x16xf32>
    %75 = vector.extract_strided_slice %73 {offsets = [2, 0, 0], sizes = [2, 16, 16], strides = [1, 1, 1]} : vector<8x16x16xf32> to vector<2x16x16xf32>
    %76 = vector.extract_strided_slice %73 {offsets = [4, 0, 0], sizes = [2, 16, 16], strides = [1, 1, 1]} : vector<8x16x16xf32> to vector<2x16x16xf32>
    %77 = vector.extract_strided_slice %73 {offsets = [6, 0, 0], sizes = [2, 16, 16], strides = [1, 1, 1]} : vector<8x16x16xf32> to vector<2x16x16xf32>
    %78 = arith.mulf %74, %75 : vector<2x16x16xf32>
    %79 = arith.subf %76, %78 : vector<2x16x16xf32>
    %80 = arith.mulf %75, %75 : vector<2x16x16xf32>
    %81 = arith.subf %77, %80 : vector<2x16x16xf32>
    %c2_23 = arith.constant 2 : index
    %82 = memref.load %arg9[%c2_23] : memref<3xf32, #tpu.memory_space<smem>>
    %83 = vector.broadcast %82 : f32 to vector<2x16x16xf32>
    %84 = arith.addf %81, %83 : vector<2x16x16xf32>
    %85 = tpu.reciprocal %84 : vector<2x16x16xf32> -> vector<2x16x16xf32>
    %86 = arith.mulf %79, %85 : vector<2x16x16xf32>
    %87 = arith.mulf %86, %75 : vector<2x16x16xf32>
    %88 = arith.subf %74, %87 : vector<2x16x16xf32>
    %c2_24 = arith.constant 2 : index
    %89 = memref.load %arg10[%c2_24] : memref<3xf32, #tpu.memory_space<smem>>
    %90 = vector.broadcast %89 : f32 to vector<2x16x16xf32>
    %91 = arith.mulf %90, %86 : vector<2x16x16xf32>
    %92 = arith.addf %63, %91 : vector<2x16x16xf32>
    %93 = vector.broadcast %89 : f32 to vector<2x16x16xf32>
    %94 = arith.mulf %93, %88 : vector<2x16x16xf32>
    %95 = arith.addf %66, %94 : vector<2x16x16xf32>
    %96 = tpu.concatenate %92, %95 in 0 : vector<2x16x16xf32>, vector<2x16x16xf32> -> vector<4x16x16xf32>
    %97 = vector.shape_cast %96 : vector<4x16x16xf32> to vector<64x16xf32>
    %c0_25 = arith.constant 0 : index
    %c0_26 = arith.constant 0 : index
    %98 = vector.load %arg7[%c0_25, %c0_26] : memref<16x32xf32, #tpu.memory_space<vmem>>, vector<16x32xf32>
    %c0_27 = arith.constant 0 : index
    %c0_28 = arith.constant 0 : index
    %99 = vector.load %arg8[%c0_27, %c0_28] : memref<16x32xf32, #tpu.memory_space<vmem>>, vector<16x32xf32>
    %cst_29 = arith.constant dense<0.000000e+00> : vector<64x32xf32>
    %100 = tpu.matmul %97, %98, %cst_29 {dimension_numbers = #tpu.dot_dimension_numbers<[1], [0], [0], [1], [0, 0, 1, 1], [], []>} : vector<64x16xf32>, vector<16x32xf32>, vector<64x32xf32> -> vector<64x32xf32>
    %101 = vector.shape_cast %100 : vector<64x32xf32> to vector<4x16x32xf32>
    %102 = tpu.transpose %101, [0, 2, 1] : vector<4x16x32xf32> -> vector<4x32x16xf32>
    %103 = vector.shape_cast %102 : vector<4x32x16xf32> to vector<128x16xf32>
    %cst_30 = arith.constant dense<0.000000e+00> : vector<128x32xf32>
    %104 = tpu.matmul %103, %99, %cst_30 {dimension_numbers = #tpu.dot_dimension_numbers<[1], [0], [0], [1], [0, 0, 1, 1], [], []>} : vector<128x16xf32>, vector<16x32xf32>, vector<128x32xf32> -> vector<128x32xf32>
    %105 = vector.shape_cast %104 : vector<128x32xf32> to vector<4x32x32xf32>
    %106 = vector.extract_strided_slice %105 {offsets = [0, 0, 0], sizes = [2, 32, 32], strides = [1, 1, 1]} : vector<4x32x32xf32> to vector<2x32x32xf32>
    %107 = vector.extract_strided_slice %105 {offsets = [2, 0, 0], sizes = [2, 32, 32], strides = [1, 1, 1]} : vector<4x32x32xf32> to vector<2x32x32xf32>
    %c0_31 = arith.constant 0 : index
    %c0_32 = arith.constant 0 : index
    %c0_33 = arith.constant 0 : index
    %c0_34 = arith.constant 0 : index
    %108 = vector.load %arg2[%c0_31, %c0_32, %c0_33, %c0_34] : memref<1x2x32x32xf32, #tpu.memory_space<vmem>>, vector<1x2x32x32xf32>
    %109 = vector.shape_cast %108 : vector<1x2x32x32xf32> to vector<2x32x32xf32>
    %110 = arith.mulf %106, %109 : vector<2x32x32xf32>
    %111 = arith.addf %110, %107 : vector<2x32x32xf32>
    %c0_35 = arith.constant 0 : index
    %c0_36 = arith.constant 0 : index
    %c0_37 = arith.constant 0 : index
    %c0_38 = arith.constant 0 : index
    %112 = vector.load %arg11[%c0_35, %c0_36, %c0_37, %c0_38] : memref<1x2x32x32xf32, #tpu.memory_space<vmem>>, vector<1x2x32x32xf32>
    %113 = vector.shape_cast %112 : vector<1x2x32x32xf32> to vector<2x32x32xf32>
    %114 = vector.shape_cast %111 : vector<2x32x32xf32> to vector<1x2x32x32xf32>
    tpu.vector_store %arg11[%c0_35, %c0_36, %c0_37, %c0_38], %114 {strides = array<i32>} : memref<1x2x32x32xf32, #tpu.memory_space<vmem>>, vector<1x2x32x32xf32>,
    return
  }
  func.func @transform_0(%arg0: i32, %arg1: i32) -> (i32, i32, i32, i32) {
    %c0_i32 = arith.constant 0 : i32
    %c0_i32_0 = arith.constant 0 : i32
    %c0_i32_1 = arith.constant 0 : i32
    return %arg0, %arg1, %c0_i32, %c0_i32_0 : i32, i32, i32, i32
  }
  func.func @transform_1(%arg0: i32, %arg1: i32) -> (i32, i32, i32, i32) {
    %c0_i32 = arith.constant 0 : i32
    %c0_i32_0 = arith.constant 0 : i32
    %c0_i32_1 = arith.constant 0 : i32
    return %arg0, %arg1, %c0_i32, %c0_i32_0 : i32, i32, i32, i32
  }
  func.func @transform_2(%arg0: i32, %arg1: i32) -> (i32, i32, i32, i32) {
    %c0_i32 = arith.constant 0 : i32
    %c0_i32_0 = arith.constant 0 : i32
    %c0_i32_1 = arith.constant 0 : i32
    return %arg0, %arg1, %c0_i32, %c0_i32_0 : i32, i32, i32, i32
  }
  func.func @transform_3(%arg0: i32, %arg1: i32) -> (i32, i32, i32) {
    %c0_i32 = arith.constant 0 : i32
    %c0_i32_0 = arith.constant 0 : i32
    %c0_i32_1 = arith.constant 0 : i32
    %c0_i32_2 = arith.constant 0 : i32
    return %c0_i32, %c0_i32_0, %c0_i32_1 : i32, i32, i32
  }
  func.func @transform_4(%arg0: i32, %arg1: i32) -> (i32, i32) {
    %c0_i32 = arith.constant 0 : i32
    %c0_i32_0 = arith.constant 0 : i32
    %c0_i32_1 = arith.constant 0 : i32
    return %c0_i32, %c0_i32_0 : i32, i32
  }
  func.func @transform_5(%arg0: i32, %arg1: i32) -> (i32, i32) {
    %c0_i32 = arith.constant 0 : i32
    %c0_i32_0 = arith.constant 0 : i32
    %c0_i32_1 = arith.constant 0 : i32
    return %c0_i32, %c0_i32_0 : i32, i32
  }
  func.func @transform_6(%arg0: i32, %arg1: i32) -> (i32, i32) {
    %c0_i32 = arith.constant 0 : i32
    %c0_i32_0 = arith.constant 0 : i32
    %c0_i32_1 = arith.constant 0 : i32
    return %c0_i32, %c0_i32_0 : i32, i32
  }
  func.func @transform_7(%arg0: i32, %arg1: i32) -> i32 {
    %c0_i32 = arith.constant 0 : i32
    %c0_i32_0 = arith.constant 0 : i32
    return %c0_i32 : i32
  }
  func.func @transform_8(%arg0: i32, %arg1: i32) -> i32 {
    %c0_i32 = arith.constant 0 : i32
    %c0_i32_0 = arith.constant 0 : i32
    return %c0_i32 : i32
  }
  func.func @transform_9(%arg0: i32, %arg1: i32) -> (i32, i32, i32, i32) {
    %c0_i32 = arith.constant 0 : i32
    %c0_i32_0 = arith.constant 0 : i32
    %c0_i32_1 = arith.constant 0 : i32
    return %arg0, %arg1, %c0_i32, %c0_i32_0 : i32, i32, i32, i32
  }
}

</mosaic_0001>

<llo_original>
// kernel: tpu_custom_call.1
$region0: #{tpu_custom_call.1}
  #allocation0 [shape = 'u32[]', space=smem, size = 0x4, offset = 0x4, fixed_abs, tag = 'smem constant byte address 0x4 - core index']
  #allocation1 [shape = 'u32[144,128]{1,0:T(1,128)}', space=vmem, size = 0x12000, scoped, tag = 'internal scratch']
  %s0 = inlined_call_operand.hbm [shape: f32[2,4,32,32], index: 0, kind: input, shape index: {}]
  %s1 = inlined_call_operand.hbm [shape: f32[2,4,16,16], index: 1, kind: input, shape index: {}]
  %s2 = inlined_call_operand.hbm [shape: f32[2,4,16,16], index: 2, kind: input, shape index: {}]
  %s3 = inlined_call_operand.hbm [shape: f32[3,16,16], index: 3, kind: input, shape index: {}]
  %s4 = inlined_call_operand.hbm [shape: f32[16,48], index: 4, kind: input, shape index: {}]
  %s5 = inlined_call_operand.hbm [shape: f32[16,32], index: 5, kind: input, shape index: {}]
  %s6 = inlined_call_operand.hbm [shape: f32[16,32], index: 6, kind: input, shape index: {}]
  %s7 = inlined_call_operand.vmem [shape: f32[3], index: 7, kind: input, shape index: {}]
  %s8 = inlined_call_operand.vmem [shape: f32[3], index: 8, kind: input, shape index: {}]
  %s9 = inlined_call_operand.hbm [shape: f32[2,4,32,32], index: 9, kind: output, shape index: {}]
  %s10 = sld [smem:[#allocation0]]
  $region105: #{tpu_custom_call.1} parent=0
    _
  %s12 = ssub.s32 1, %s10
  %s13 = scalar_select 0, %s12, %s10
  $region1: #{tpu_custom_call.1} parent=0
    #allocation2 [shape = 'u8[65536]{0}', space=vmem, size = 0x10000, scoped, tag = 'input window, operand 0']
    #allocation3 [shape = 's32[2]{0}', space=sflag, size = 0x8, scoped, tag = 'scoped memory for tpu_custom_call.1']
    #allocation4 [shape = 's32[2]{0}', space=sflag, size = 0x8, scoped, tag = 'scoped memory for tpu_custom_call.1']
    #allocation5 [shape = 's32[2]{0}', space=sflag, size = 0x8, scoped, tag = 'scoped memory for tpu_custom_call.1']
    #allocation6 [shape = 'u8[32768]{0}', space=vmem, size = 0x8000, scoped, tag = 'input window, operand 1']
    #allocation7 [shape = 's32[2]{0}', space=sflag, size = 0x8, scoped, tag = 'scoped memory for tpu_custom_call.1']
    #allocation8 [shape = 'u8[32768]{0}', space=vmem, size = 0x8000, scoped, tag = 'input window, operand 2']
    #allocation9 [shape = 'u8[24576]{0}', space=vmem, size = 0x6000, scoped, tag = 'input window, operand 3, single buffered']
    #allocation10 [shape = 's32[1]{0}', space=sflag, size = 0x4, scoped, tag = 'scoped memory for tpu_custom_call.1']
    #allocation11 [shape = 'u8[8192]{0}', space=vmem, size = 0x2000, scoped, tag = 'input window, operand 4, single buffered']
    #allocation12 [shape = 'u8[8192]{0}', space=vmem, size = 0x2000, scoped, tag = 'input window, operand 5, single buffered']
    #allocation13 [shape = 's32[1]{0}', space=sflag, size = 0x4, scoped, tag = 'scoped memory for tpu_custom_call.1']
    #allocation14 [shape = 'u8[8192]{0}', space=vmem, size = 0x2000, scoped, tag = 'input window, operand 6, single buffered']
    #allocation15 [shape = 'u8[512]{0}', space=smem, size = 0x200, scoped, tag = 'input window, operand 7, single buffered']
    #allocation16 [shape = 'u8[512]{0}', space=smem, size = 0x200, scoped, tag = 'input window, operand 8, single buffered']
    #allocation17 [shape = 's32[1]{0}', space=sflag, size = 0x4, scoped, tag = 'scoped memory for tpu_custom_call.1']
    #allocation18 [shape = 'u8[65536]{0}', space=vmem, size = 0x10000, scoped, tag = 'output window, operand 0']
    %14 = vsyncpa [#allocation3], 0
    %s15 = scalar_lea.sflag [#allocation3], 1
    %16 = vsyncpa %s15, 0
    %17 = vsyncpa [#allocation7], 0
    %s18 = scalar_lea.sflag [#allocation7], 1
    %19 = vsyncpa %s18, 0
    %20 = vsyncpa [#allocation10], 0
    %21 = vsyncpa [#allocation13], 0
    %22 = vsyncpa [#allocation5], 0
    %23 = vsyncpa [#allocation17], 0
    %24 = vsyncpa [#allocation4], 0
    %s25 = scalar_lea.sflag [#allocation4], 1
    %26 = vsyncpa %s25, 0
    loop: start=0, step=1, limit=6
    $region2: #{tpu_custom_call.1} parent=1 // loop_pre_header
      _
    $region3: #{tpu_custom_call.1} parent=1 // loop_header
      %s28 = sphi 0, %s32
      %p29 = scmp.ge.s32.totalorder %s28, 6
      %s35 = sphi 0, %s47
      %s36 = sphi 0, %s43
      %s37 = sphi 0, %s35
      %s38 = sphi 0, %s36
      %s39 = sphi 0, %s37
      %s40 = sphi 0, %s38
      %s52 = sphi 0, %s54
      %s55 = sphi 0, %s52
      %s56 = sphi 0, %s55
      %s72 = sphi 0, %s56
      %s80 = sphi 0, %s82
      %s83 = sphi 0, %s80
      %s84 = sphi 0, %s83
      %s100 = sphi 0, %s84
      %s108 = sphi 0, %s110
      %s111 = sphi 0, %s108
      %s112 = sphi 0, %s111
      %s128 = sphi 0, %s112
      %s132 = sphi 0, %s132
      %s134 = sphi 0, %s132
      %s135 = sphi 0, %s134
      %s149 = sphi 0, %s135
      %s153 = sphi 0, %s153
      %s155 = sphi 0, %s153
      %s156 = sphi 0, %s155
      %s170 = sphi 0, %s156
      %s174 = sphi 0, %s174
      %s176 = sphi 0, %s174
      %s177 = sphi 0, %s176
      %s191 = sphi 0, %s177
      %s195 = sphi 0, %s195
      %s197 = sphi 0, %s195
      %s198 = sphi 0, %s197
      %s212 = sphi 0, %s198
      %s216 = sphi 0, %s216
      %s218 = sphi 0, %s216
      %s219 = sphi 0, %s218
      %s233 = sphi 0, %s219
      %s237 = sphi 0, %s237
      %s239 = sphi 0, %s237
      %s240 = sphi 0, %s239
      %s254 = sphi 0, %s240
      %s262 = sphi 0, %s264
      %s265 = sphi 0, %s262
      %s266 = sphi 0, %s265
      %s282 = sphi 0, %s266
    $region4: #{tpu_custom_call.1} parent=1 // loop_header_branch
      %31 = sbr.rel (%p29) target = $region8
    $region5: #{tpu_custom_call.1} parent=1 // loop_body
      %s33 = ssub.s32 %s28, 1
      %s34 = ssub.s32 %s28, 2
      %s41 = sadd.s32 1, %s36
      %p42 = scmp.ge.s32.totalorder %s41, 2
      %s43 = scalar_select %p42, 0, %s41
      %s44 = sadd.s32 1, %s35
      %s45 = scalar_select %p42, %s44, %s35
      %p46 = scmp.ge.s32.totalorder %s45, 2
      %s47 = scalar_select %p46, 0, %s45
      %s48 = ssub.s32 %s35, %s47
      %s49 = ssub.s32 %s36, %s43
      %s50 = sor.u32 %s48, %s49
      %p51 = scmp.eq.s32.totalorder %s50, 0
      %s53 = sadd.s32 %s52, 1
      %s54 = scalar_select %p51, %s52, %s53
      %p57 = pneg %p51
      %p58 = scmp.eq.s32.totalorder %s28, 3
      %p59 = por %p57, %p58
      %p60 = scmp.ne.s32.totalorder %s52, %s55
      %p61 = scmp.eq.s32.totalorder %s28, 0
      %p62 = por %p60, %p61
      %p63 = scmp.ne.s32.totalorder %s52, %s55
      %p64 = scmp.eq.s32.totalorder %s33, 3
      %p65 = por %p63, %p64
      %p66 = scmp.ne.s32.totalorder %s55, %s56
      %p67 = scmp.eq.s32.totalorder %s33, 0
      %p68 = por %p66, %p67
      %p69 = scmp.ne.s32.totalorder %s55, %s56
      %p70 = scmp.eq.s32.totalorder %s34, 3
      %p71 = por %p69, %p70
      %p73 = scmp.ne.s32.totalorder %s56, %s72
      %p74 = scmp.eq.s32.totalorder %s34, 0
      %p75 = por %p73, %p74
      %s76 = ssub.s32 %s35, %s47
      %s77 = ssub.s32 %s36, %s43
      %s78 = sor.u32 %s76, %s77
      %p79 = scmp.eq.s32.totalorder %s78, 0
      %s81 = sadd.s32 %s80, 1
      %s82 = scalar_select %p79, %s80, %s81
      %p85 = pneg %p79
      %p86 = scmp.eq.s32.totalorder %s28, 3
      %p87 = por %p85, %p86
      %p88 = scmp.ne.s32.totalorder %s80, %s83
      %p89 = scmp.eq.s32.totalorder %s28, 0
      %p90 = por %p88, %p89
      %p91 = scmp.ne.s32.totalorder %s80, %s83
      %p92 = scmp.eq.s32.totalorder %s33, 3
      %p93 = por %p91, %p92
      %p94 = scmp.ne.s32.totalorder %s83, %s84
      %p95 = scmp.eq.s32.totalorder %s33, 0
      %p96 = por %p94, %p95
      %p97 = scmp.ne.s32.totalorder %s83, %s84
      %p98 = scmp.eq.s32.totalorder %s34, 3
      %p99 = por %p97, %p98
      %p101 = scmp.ne.s32.totalorder %s84, %s100
      %p102 = scmp.eq.s32.totalorder %s34, 0
      %p103 = por %p101, %p102
      %s104 = ssub.s32 %s35, %s47
      %s105 = ssub.s32 %s36, %s43
      %s106 = sor.u32 %s104, %s105
      %p107 = scmp.eq.s32.totalorder %s106, 0
      %s109 = sadd.s32 %s108, 1
      %s110 = scalar_select %p107, %s108, %s109
      %p113 = pneg %p107
      %p114 = scmp.eq.s32.totalorder %s28, 3
      %p115 = por %p113, %p114
      %p116 = scmp.ne.s32.totalorder %s108, %s111
      %p117 = scmp.eq.s32.totalorder %s28, 0
      %p118 = por %p116, %p117
      %p119 = scmp.ne.s32.totalorder %s108, %s111
      %p120 = scmp.eq.s32.totalorder %s33, 3
      %p121 = por %p119, %p120
      %p122 = scmp.ne.s32.totalorder %s111, %s112
      %p123 = scmp.eq.s32.totalorder %s33, 0
      %p124 = por %p122, %p123
      %p125 = scmp.ne.s32.totalorder %s111, %s112
      %p126 = scmp.eq.s32.totalorder %s34, 3
      %p127 = por %p125, %p126
      %p129 = scmp.ne.s32.totalorder %s112, %s128
      %p130 = scmp.eq.s32.totalorder %s34, 0
      %p131 = por %p129, %p130
      %s133 = sadd.s32 %s132, 1
      %p136 = scmp.eq.s32.totalorder %s28, 3
      %p137 = scmp.ne.s32.totalorder %s132, %s134
      %p138 = scmp.eq.s32.totalorder %s28, 0
      %p139 = por %p137, %p138
      %p140 = scmp.ne.s32.totalorder %s132, %s134
      %p141 = scmp.eq.s32.totalorder %s33, 3
      %p142 = por %p140, %p141
      %p143 = scmp.ne.s32.totalorder %s134, %s135
      %p144 = scmp.eq.s32.totalorder %s33, 0
      %p145 = por %p143, %p144
      %p146 = scmp.ne.s32.totalorder %s134, %s135
      %p147 = scmp.eq.s32.totalorder %s34, 3
      %p148 = por %p146, %p147
      %p150 = scmp.ne.s32.totalorder %s135, %s149
      %p151 = scmp.eq.s32.totalorder %s34, 0
      %p152 = por %p150, %p151
      %s154 = sadd.s32 %s153, 1
      %p157 = scmp.eq.s32.totalorder %s28, 3
      %p158 = scmp.ne.s32.totalorder %s153, %s155
      %p159 = scmp.eq.s32.totalorder %s28, 0
      %p160 = por %p158, %p159
      %p161 = scmp.ne.s32.totalorder %s153, %s155
      %p162 = scmp.eq.s32.totalorder %s33, 3
      %p163 = por %p161, %p162
      %p164 = scmp.ne.s32.totalorder %s155, %s156
      %p165 = scmp.eq.s32.totalorder %s33, 0
      %p166 = por %p164, %p165
      %p167 = scmp.ne.s32.totalorder %s155, %s156
      %p168 = scmp.eq.s32.totalorder %s34, 3
      %p169 = por %p167, %p168
      %p171 = scmp.ne.s32.totalorder %s156, %s170
      %p172 = scmp.eq.s32.totalorder %s34, 0
      %p173 = por %p171, %p172
      %s175 = sadd.s32 %s174, 1
      %p178 = scmp.eq.s32.totalorder %s28, 3
      %p179 = scmp.ne.s32.totalorder %s174, %s176
      %p180 = scmp.eq.s32.totalorder %s28, 0
      %p181 = por %p179, %p180
      %p182 = scmp.ne.s32.totalorder %s174, %s176
      %p183 = scmp.eq.s32.totalorder %s33, 3
      %p184 = por %p182, %p183
      %p185 = scmp.ne.s32.totalorder %s176, %s177
      %p186 = scmp.eq.s32.totalorder %s33, 0
      %p187 = por %p185, %p186
      %p188 = scmp.ne.s32.totalorder %s176, %s177
      %p189 = scmp.eq.s32.totalorder %s34, 3
      %p190 = por %p188, %p189
      %p192 = scmp.ne.s32.totalorder %s177, %s191
      %p193 = scmp.eq.s32.totalorder %s34, 0
      %p194 = por %p192, %p193
      %s196 = sadd.s32 %s195, 1
      %p199 = scmp.eq.s32.totalorder %s28, 3
      %p200 = scmp.ne.s32.totalorder %s195, %s197
      %p201 = scmp.eq.s32.totalorder %s28, 0
      %p202 = por %p200, %p201
      %p203 = scmp.ne.s32.totalorder %s195, %s197
      %p204 = scmp.eq.s32.totalorder %s33, 3
      %p205 = por %p203, %p204
      %p206 = scmp.ne.s32.totalorder %s197, %s198
      %p207 = scmp.eq.s32.totalorder %s33, 0
      %p208 = por %p206, %p207
      %p209 = scmp.ne.s32.totalorder %s197, %s198
      %p210 = scmp.eq.s32.totalorder %s34, 3
      %p211 = por %p209, %p210
      %p213 = scmp.ne.s32.totalorder %s198, %s212
      %p214 = scmp.eq.s32.totalorder %s34, 0
      %p215 = por %p213, %p214
      %s217 = sadd.s32 %s216, 1
      %p220 = scmp.eq.s32.totalorder %s28, 3
      %p221 = scmp.ne.s32.totalorder %s216, %s218
      %p222 = scmp.eq.s32.totalorder %s28, 0
      %p223 = por %p221, %p222
      %p224 = scmp.ne.s32.totalorder %s216, %s218
      %p225 = scmp.eq.s32.totalorder %s33, 3
      %p226 = por %p224, %p225
      %p227 = scmp.ne.s32.totalorder %s218, %s219
      %p228 = scmp.eq.s32.totalorder %s33, 0
      %p229 = por %p227, %p228
      %p230 = scmp.ne.s32.totalorder %s218, %s219
      %p231 = scmp.eq.s32.totalorder %s34, 3
      %p232 = por %p230, %p231
      %p234 = scmp.ne.s32.totalorder %s219, %s233
      %p235 = scmp.eq.s32.totalorder %s34, 0
      %p236 = por %p234, %p235
      %s238 = sadd.s32 %s237, 1
      %p241 = scmp.eq.s32.totalorder %s28, 3
      %p242 = scmp.ne.s32.totalorder %s237, %s239
      %p243 = scmp.eq.s32.totalorder %s28, 0
      %p244 = por %p242, %p243
      %p245 = scmp.ne.s32.totalorder %s237, %s239
      %p246 = scmp.eq.s32.totalorder %s33, 3
      %p247 = por %p245, %p246
      %p248 = scmp.ne.s32.totalorder %s239, %s240
      %p249 = scmp.eq.s32.totalorder %s33, 0
      %p250 = por %p248, %p249
      %p251 = scmp.ne.s32.totalorder %s239, %s240
      %p252 = scmp.eq.s32.totalorder %s34, 3
      %p253 = por %p251, %p252
      %p255 = scmp.ne.s32.totalorder %s240, %s254
      %p256 = scmp.eq.s32.totalorder %s34, 0
      %p257 = por %p255, %p256
      %s258 = ssub.s32 %s35, %s47
      %s259 = ssub.s32 %s36, %s43
      %s260 = sor.u32 %s258, %s259
      %p261 = scmp.eq.s32.totalorder %s260, 0
      %s263 = sadd.s32 %s262, 1
      %s264 = scalar_select %p261, %s262, %s263
      %p267 = pneg %p261
      %p268 = scmp.eq.s32.totalorder %s28, 3
      %p269 = por %p267, %p268
      %p270 = scmp.ne.s32.totalorder %s262, %s265
      %p271 = scmp.eq.s32.totalorder %s28, 0
      %p272 = por %p270, %p271
      %p273 = scmp.ne.s32.totalorder %s262, %s265
      %p274 = scmp.eq.s32.totalorder %s33, 3
      %p275 = por %p273, %p274
      %p276 = scmp.ne.s32.totalorder %s265, %s266
      %p277 = scmp.eq.s32.totalorder %s33, 0
      %p278 = por %p276, %p277
      %p279 = scmp.ne.s32.totalorder %s265, %s266
      %p280 = scmp.eq.s32.totalorder %s34, 3
      %p281 = por %p279, %p280
      %p283 = scmp.ne.s32.totalorder %s266, %s282
      %p284 = scmp.eq.s32.totalorder %s34, 0
      %p285 = por %p283, %p284
      %p286 = scmp.le.s32.totalorder 1, %s28
      %p287 = scmp.lt.s32.totalorder %s28, 5
      %p288 = pnand %p286, %p287
      %p289 = pneg %p288
      // Predicated region
      $region9: #{tpu_custom_call.1} parent=5 // pred_check
        _
      $region10: #{tpu_custom_call.1} parent=5 // pred_check_branch
        %291 = sbr.rel (%p288) target = $region12
      $region11: #{tpu_custom_call.1} parent=5 // pred_region
        %s292 = ssub.s32 %s28, 1
        // Predicated region
        $region13: #{tpu_custom_call.1} parent=11 // pred_check
          %p293 = pneg %p145
        $region14: #{tpu_custom_call.1} parent=11 // pred_check_branch
          %295 = sbr.rel (%p293) target = $region16
        $region15: #{tpu_custom_call.1} parent=11 // pred_region
          %s297 = ssub.s32 768, 768
          %298 = vsyncadd [#allocation10], %s297
          %s299 = sshll.u32 [#allocation9], 4
          %s300 = int_to_ptr.vmem [resolvable:$true] %s299
          %305 = dma.hbm_to_vmem [thread:$0]  %s3, 768, %s300, [#allocation10], 128, 128, 8
        $region16: #{tpu_custom_call.1} parent=11 // pred_fallthru
          _
        // Predicated region
        $region17: #{tpu_custom_call.1} parent=11 // pred_check
          %p306 = pneg %p166
        $region18: #{tpu_custom_call.1} parent=11 // pred_check_branch
          %308 = sbr.rel (%p306) target = $region20
        $region19: #{tpu_custom_call.1} parent=11 // pred_region
          %s310 = ssub.s32 256, 256
          %311 = vsyncadd [#allocation10], %s310
          %s312 = sshll.u32 [#allocation11], 4
          %s313 = int_to_ptr.vmem [resolvable:$true] %s312
          %318 = dma.hbm_to_vmem [thread:$0]  %s4, 256, %s313, [#allocation10], 128, 128, 8
        $region20: #{tpu_custom_call.1} parent=11 // pred_fallthru
          _
        // Predicated region
        $region21: #{tpu_custom_call.1} parent=11 // pred_check
          %p319 = pneg %p187
        $region22: #{tpu_custom_call.1} parent=11 // pred_check_branch
          %321 = sbr.rel (%p319) target = $region24
        $region23: #{tpu_custom_call.1} parent=11 // pred_region
          %s323 = ssub.s32 256, 256
          %324 = vsyncadd [#allocation13], %s323
          %s325 = sshll.u32 [#allocation12], 4
          %s326 = int_to_ptr.vmem [resolvable:$true] %s325
          %331 = dma.hbm_to_vmem [thread:$0]  %s5, 256, %s326, [#allocation13], 128, 128, 8
        $region24: #{tpu_custom_call.1} parent=11 // pred_fallthru
          _
        // Predicated region
        $region25: #{tpu_custom_call.1} parent=11 // pred_check
          %p332 = pneg %p208
        $region26: #{tpu_custom_call.1} parent=11 // pred_check_branch
          %334 = sbr.rel (%p332) target = $region28
        $region27: #{tpu_custom_call.1} parent=11 // pred_region
          %s336 = ssub.s32 256, 256
          %337 = vsyncadd [#allocation13], %s336
          %s338 = sshll.u32 [#allocation14], 4
          %s339 = int_to_ptr.vmem [resolvable:$true] %s338
          %344 = dma.hbm_to_vmem [thread:$0]  %s6, 256, %s339, [#allocation13], 128, 128, 8
        $region28: #{tpu_custom_call.1} parent=11 // pred_fallthru
          _
        // Predicated region
        $region29: #{tpu_custom_call.1} parent=11 // pred_check
          %p345 = pneg %p229
        $region30: #{tpu_custom_call.1} parent=11 // pred_check_branch
          %347 = sbr.rel (%p345) target = $region32
        $region31: #{tpu_custom_call.1} parent=11 // pred_region
          %s349 = ssub.s32 16, 16
          %350 = vsyncadd [#allocation5], %s349
          %s352 = sshll.u32 %s7, 4
          %s353 = int_to_ptr.vmem [resolvable:$true] %s352
          %355 = dma.vmem_to_smem %s353, 16, [#allocation15], [#allocation5]
        $region32: #{tpu_custom_call.1} parent=11 // pred_fallthru
          _
        // Predicated region
        $region33: #{tpu_custom_call.1} parent=11 // pred_check
          %p356 = pneg %p250
        $region34: #{tpu_custom_call.1} parent=11 // pred_check_branch
          %358 = sbr.rel (%p356) target = $region36
        $region35: #{tpu_custom_call.1} parent=11 // pred_region
          %s360 = ssub.s32 16, 16
          %361 = vsyncadd [#allocation17], %s360
          %s363 = sshll.u32 %s8, 4
          %s364 = int_to_ptr.vmem [resolvable:$true] %s363
          %366 = dma.vmem_to_smem %s364, 16, [#allocation16], [#allocation17]
        $region36: #{tpu_custom_call.1} parent=11 // pred_fallthru
          _
      $region12: #{tpu_custom_call.1} parent=5 // pred_fallthru
        _
      %p367 = scmp.lt.s32.totalorder %s28, 4
      // Predicated region
      $region37: #{tpu_custom_call.1} parent=5 // pred_check
        %p368 = pneg %p367
      $region38: #{tpu_custom_call.1} parent=5 // pred_check_branch
        %370 = sbr.rel (%p368) target = $region40
      $region39: #{tpu_custom_call.1} parent=5 // pred_region
        // Predicated region
        $region41: #{tpu_custom_call.1} parent=39 // pred_check
          %p371 = pneg %p62
        $region42: #{tpu_custom_call.1} parent=39 // pred_check_branch
          %373 = sbr.rel (%p371) target = $region44
        $region43: #{tpu_custom_call.1} parent=39 // pred_region
          %s374 = sand.u32 %s52, 1
          %s375 = scalar_lea.sflag [#allocation3], %s374
          %s376 = sand.u32 %s52, 1
          %s377 = smul.addr %s376, 64
          %s378 = scalar_lea.vmem [#allocation2], %s377
          %s379 = smul.u32 2, %s36
          %s381 = ssub.s32 1024, 1024
          %382 = vsyncadd %s375, %s381
          %s383 = smul.addr %s379, 4
          %s384 = smul.addr %s35, 16
          %s385 = sadd.s32 %s383, %s384
          %s386 = smul.addr %s385, 128
          %s387 = scalar_lea.hbm %s0, %s386
          %s388 = sshll.u32 %s378, 4
          %s389 = int_to_ptr.vmem [resolvable:$true] %s388
          %394 = dma.hbm_to_vmem [thread:$0]  %s387, 1024, %s389, %s375, 128, 128, 8
        $region44: #{tpu_custom_call.1} parent=39 // pred_fallthru
          _
        // Predicated region
        $region45: #{tpu_custom_call.1} parent=39 // pred_check
          %p395 = pneg %p90
        $region46: #{tpu_custom_call.1} parent=39 // pred_check_branch
          %397 = sbr.rel (%p395) target = $region48
        $region47: #{tpu_custom_call.1} parent=39 // pred_region
          %s398 = sand.u32 %s28, 1
          %s399 = scalar_lea.sflag [#allocation7], %s398
          %s400 = sand.u32 %s80, 1
          %s401 = smul.addr %s400, 32
          %s402 = scalar_lea.vmem [#allocation6], %s401
          %s403 = smul.u32 2, %s36
          %s405 = ssub.s32 512, 512
          %406 = vsyncadd %s399, %s405
          %s407 = smul.addr %s403, 2
          %s408 = smul.addr %s35, 8
          %s409 = sadd.s32 %s407, %s408
          %s410 = smul.addr %s409, 128
          %s411 = scalar_lea.hbm %s1, %s410
          %s412 = sshll.u32 %s402, 4
          %s413 = int_to_ptr.vmem [resolvable:$true] %s412
          %418 = dma.hbm_to_vmem [thread:$0]  %s411, 512, %s413, %s399, 128, 128, 8
        $region48: #{tpu_custom_call.1} parent=39 // pred_fallthru
          _
        // Predicated region
        $region49: #{tpu_custom_call.1} parent=39 // pred_check
          %p419 = pneg %p118
        $region50: #{tpu_custom_call.1} parent=39 // pred_check_branch
          %421 = sbr.rel (%p419) target = $region52
        $region51: #{tpu_custom_call.1} parent=39 // pred_region
          %s422 = sand.u32 %s28, 1
          %s423 = scalar_lea.sflag [#allocation7], %s422
          %s424 = sand.u32 %s108, 1
          %s425 = smul.addr %s424, 32
          %s426 = scalar_lea.vmem [#allocation8], %s425
          %s427 = smul.u32 2, %s36
          %s429 = ssub.s32 512, 512
          %430 = vsyncadd %s423, %s429
          %s431 = smul.addr %s427, 2
          %s432 = smul.addr %s35, 8
          %s433 = sadd.s32 %s431, %s432
          %s434 = smul.addr %s433, 128
          %s435 = scalar_lea.hbm %s2, %s434
          %s436 = sshll.u32 %s426, 4
          %s437 = int_to_ptr.vmem [resolvable:$true] %s436
          %442 = dma.hbm_to_vmem [thread:$0]  %s435, 512, %s437, %s423, 128, 128, 8
        $region52: #{tpu_custom_call.1} parent=39 // pred_fallthru
          _
      $region40: #{tpu_custom_call.1} parent=5 // pred_fallthru
        _
      %p443 = scmp.le.s32.totalorder 1, %s28
      %p444 = scmp.lt.s32.totalorder %s28, 5
      %p445 = pnand %p443, %p444
      %p446 = pneg %p445
      // Predicated region
      $region53: #{tpu_custom_call.1} parent=5 // pred_check
        _
      $region54: #{tpu_custom_call.1} parent=5 // pred_check_branch
        %448 = sbr.rel (%p445) target = $region56
      $region55: #{tpu_custom_call.1} parent=5 // pred_region
        %s449 = ssub.s32 %s28, 1
        %s450 = sand.u32 %s55, 1
        %s451 = scalar_lea.sflag [#allocation3], %s450
        %s452 = sand.u32 %s55, 1
        %s453 = smul.addr %s452, 64
        %s454 = scalar_lea.vmem [#allocation2], %s453
        // Predicated region
        $region57: #{tpu_custom_call.1} parent=55 // pred_check
          %p455 = pneg %p68
        $region58: #{tpu_custom_call.1} parent=55 // pred_check_branch
          %457 = sbr.rel (%p455) target = $region60
        $region59: #{tpu_custom_call.1} parent=55 // pred_region
          %458 = dma.done %s451, 1024
        $region60: #{tpu_custom_call.1} parent=55 // pred_fallthru
          _
        %s459 = sand.u32 %s33, 1
        %s460 = scalar_lea.sflag [#allocation7], %s459
        %s461 = sand.u32 %s83, 1
        %s462 = smul.addr %s461, 32
        %s463 = scalar_lea.vmem [#allocation6], %s462
        // Predicated region
        $region61: #{tpu_custom_call.1} parent=55 // pred_check
          %p464 = pneg %p96
        $region62: #{tpu_custom_call.1} parent=55 // pred_check_branch
          %466 = sbr.rel (%p464) target = $region64
        $region63: #{tpu_custom_call.1} parent=55 // pred_region
          %467 = dma.done %s460, 512
        $region64: #{tpu_custom_call.1} parent=55 // pred_fallthru
          _
        %s468 = sand.u32 %s33, 1
        %s469 = scalar_lea.sflag [#allocation7], %s468
        %s470 = sand.u32 %s111, 1
        %s471 = smul.addr %s470, 32
        %s472 = scalar_lea.vmem [#allocation8], %s471
        // Predicated region
        $region65: #{tpu_custom_call.1} parent=55 // pred_check
          %p473 = pneg %p124
        $region66: #{tpu_custom_call.1} parent=55 // pred_check_branch
          %475 = sbr.rel (%p473) target = $region68
        $region67: #{tpu_custom_call.1} parent=55 // pred_region
          %476 = dma.done %s469, 512
        $region68: #{tpu_custom_call.1} parent=55 // pred_fallthru
          _
        // Predicated region
        $region69: #{tpu_custom_call.1} parent=55 // pred_check
          %p477 = pneg %p145
        $region70: #{tpu_custom_call.1} parent=55 // pred_check_branch
          %479 = sbr.rel (%p477) target = $region72
        $region71: #{tpu_custom_call.1} parent=55 // pred_region
          %480 = dma.done [#allocation10], 768
        $region72: #{tpu_custom_call.1} parent=55 // pred_fallthru
          _
        // Predicated region
        $region73: #{tpu_custom_call.1} parent=55 // pred_check
          %p481 = pneg %p166
        $region74: #{tpu_custom_call.1} parent=55 // pred_check_branch
          %483 = sbr.rel (%p481) target = $region76
        $region75: #{tpu_custom_call.1} parent=55 // pred_region
          %484 = dma.done [#allocation10], 256
        $region76: #{tpu_custom_call.1} parent=55 // pred_fallthru
          _
        // Predicated region
        $region77: #{tpu_custom_call.1} parent=55 // pred_check
          %p485 = pneg %p187
        $region78: #{tpu_custom_call.1} parent=55 // pred_check_branch
          %487 = sbr.rel (%p485) target = $region80
        $region79: #{tpu_custom_call.1} parent=55 // pred_region
          %488 = dma.done [#allocation13], 256
        $region80: #{tpu_custom_call.1} parent=55 // pred_fallthru
          _
        // Predicated region
        $region81: #{tpu_custom_call.1} parent=55 // pred_check
          %p489 = pneg %p208
        $region82: #{tpu_custom_call.1} parent=55 // pred_check_branch
          %491 = sbr.rel (%p489) target = $region84
        $region83: #{tpu_custom_call.1} parent=55 // pred_region
          %492 = dma.done [#allocation13], 256
        $region84: #{tpu_custom_call.1} parent=55 // pred_fallthru
          _
        // Predicated region
        $region85: #{tpu_custom_call.1} parent=55 // pred_check
          %p493 = pneg %p229
        $region86: #{tpu_custom_call.1} parent=55 // pred_check_branch
          %495 = sbr.rel (%p493) target = $region88
        $region87: #{tpu_custom_call.1} parent=55 // pred_region
          %496 = dma.done [#allocation5], 16
        $region88: #{tpu_custom_call.1} parent=55 // pred_fallthru
          _
        // Predicated region
        $region89: #{tpu_custom_call.1} parent=55 // pred_check
          %p497 = pneg %p250
        $region90: #{tpu_custom_call.1} parent=55 // pred_check_branch
          %499 = sbr.rel (%p497) target = $region92
        $region91: #{tpu_custom_call.1} parent=55 // pred_region
          %500 = dma.done [#allocation17], 16
        $region92: #{tpu_custom_call.1} parent=55 // pred_fallthru
          _
        %501 = sfence
        %s502 = sand.u32 %s55, 1
        %s503 = scalar_lea.sflag [#allocation3], %s502
        %s504 = sand.u32 %s55, 1
        %s505 = smul.addr %s504, 64
        %s506 = scalar_lea.vmem [#allocation2], %s505
        %p507 = pneg %p68
        %p508 = pneg %p65
        %s509 = sand.u32 %s33, 1
        %s510 = scalar_lea.sflag [#allocation7], %s509
        %s511 = sand.u32 %s83, 1
        %s512 = smul.addr %s511, 32
        %s513 = scalar_lea.vmem [#allocation6], %s512
        %p514 = pneg %p96
        %p515 = pneg %p93
        %s516 = sand.u32 %s33, 1
        %s517 = scalar_lea.sflag [#allocation7], %s516
        %s518 = sand.u32 %s111, 1
        %s519 = smul.addr %s518, 32
        %s520 = scalar_lea.vmem [#allocation8], %s519
        %p521 = pneg %p124
        %p522 = pneg %p121
        %p523 = pneg %p145
        %p524 = pneg %p142
        %p525 = pneg %p166
        %p526 = pneg %p163
        %p527 = pneg %p187
        %p528 = pneg %p184
        %p529 = pneg %p208
        %p530 = pneg %p205
        %p531 = pneg %p229
        %p532 = pneg %p226
        %p533 = pneg %p250
        %p534 = pneg %p247
        %p535 = pneg %p278
        %p536 = pneg %p275
        %s537 = sand.u32 %s265, 1
        %s538 = scalar_lea.sflag [#allocation4], %s537
        %s539 = sand.u32 %s265, 1
        %s540 = smul.addr %s539, 64
        %s541 = scalar_lea.vmem [#allocation18], %s540
        %s542 = smul.u32 2, %s38
        %s543 = smul.u32 2, %s38
        %s544 = smul.u32 2, %s38
        %s545 = smul.u32 2, %s38
        %v546 = vld [vmem:[%s472] sm:$0xff]
        %v547 = vld [vmem:[%s472 + $0x8] sm:$0xff]
        %v548 = vld [vmem:[%s472 + $0x10] sm:$0xff]
        %v549 = vld [vmem:[%s472 + $0x18] sm:$0xff]
        %v550 = vld [vmem:[%s463] sm:$0xff]
        %v551 = vld [vmem:[%s463 + $0x8] sm:$0xff]
        %v552 = vld [vmem:[%s463 + $0x10] sm:$0xff]
        %v553 = vld [vmem:[%s463 + $0x18] sm:$0xff]
        %v554 = vmul.f32 %v546, %v550
        %v555 = vmul.f32 %v547, %v551
        %v556 = vmul.f32 %v548, %v552
        %v557 = vmul.f32 %v549, %v553
        %v558 = vmul.f32 %v550, %v550
        %v559 = vmul.f32 %v551, %v551
        %v560 = vmul.f32 %v552, %v552
        %v561 = vmul.f32 %v553, %v553
        %v562 = vld [vmem:[#allocation11] sm:$0xff]
        %v563 = vld [vmem:[#allocation11 + $0x8] sm:$0xff]
        %vm564 = vcmask 130048
        %v566 = vsel %vm564, %v546, 0
        %v569 = vsel %vm564, %v547, 0
        %v572 = vsel %vm564, %v548, 0
        %v575 = vsel %vm564, %v549, 0
        %v578 = vsel %vm564, %v550, 0
        %v581 = vsel %vm564, %v551, 0
        %v584 = vsel %vm564, %v552, 0
        %v587 = vsel %vm564, %v553, 0
        %v590 = vsel %vm564, %v554, 0
        %v593 = vsel %vm564, %v555, 0
        %v596 = vsel %vm564, %v556, 0
        %v599 = vsel %vm564, %v557, 0
        %v602 = vsel %vm564, %v558, 0
        %v605 = vsel %vm564, %v559, 0
        %v608 = vsel %vm564, %v560, 0
        %v611 = vsel %vm564, %v561, 0
        %613 = vmatprep.subr.mxu0 0.0
        %614 = vmatpush1.msra.mxu0 0.0
        %615 = vmatprep.subr.mxu0 0.0
        %616 = vmatpush1.msra.mxu0 0.0
        %617 = vmatprep.subr.mxu0 0.0
        %618 = vmatpush1.msra.mxu0 0.0
        %619 = vmatprep.subr.mxu0 0.0
        %620 = vmatpush1.msra.mxu0 0.0
        %621 = vmatprep.subr.mxu0 0.0
        %622 = vmatpush1.msra.mxu0 0.0
        %623 = vmatprep.subr.mxu0 0.0
        %624 = vmatpush1.msra.mxu0 0.0
        %625 = vmatprep.subr.mxu0 0.0
        %626 = vmatpush1.msra.mxu0 0.0
        %627 = vmatprep.subr.mxu0 0.0
        %628 = vmatpush1.msra.mxu0 0.0
        %629 = vmatprep.subr.mxu0 0.0
        %630 = vmatpush1.msra.mxu0 0.0
        %631 = vmatprep.subr.mxu0 0.0
        %632 = vmatpush1.msra.mxu0 0.0
        %633 = vmatprep.subr.mxu0 0.0
        %634 = vmatpush1.msra.mxu0 0.0
        %635 = vmatprep.subr.mxu0 0.0
        %636 = vmatpush1.msra.mxu0 0.0
        %637 = vmatprep.subr.mxu0 0.0
        %638 = vmatpush1.msra.mxu0 0.0
        %639 = vmatprep.subr.mxu0 0.0
        %640 = vmatpush1.msra.mxu0 0.0
        %641 = vmatprep.subr.mxu0 0.0
        %642 = vmatpush1.msra.mxu0 %v563
        %643 = vmatprep.subr.mxu0 0.0
        %644 = vmatpush1.msra.mxu0 %v562
        %645 = vmatprep.subr.mxu0 0.0
        %646 = vmatpush2.msra.mxu0 0.0
        %647 = vmatprep.subr.mxu0 0.0
        %648 = vmatpush2.msra.mxu0 0.0
        %649 = vmatprep.subr.mxu0 0.0
        %650 = vmatpush2.msra.mxu0 0.0
        %651 = vmatprep.subr.mxu0 0.0
        %652 = vmatpush2.msra.mxu0 0.0
        %653 = vmatprep.subr.mxu0 0.0
        %654 = vmatpush2.msra.mxu0 0.0
        %655 = vmatprep.subr.mxu0 0.0
        %656 = vmatpush2.msra.mxu0 0.0
        %657 = vmatprep.subr.mxu0 0.0
        %658 = vmatpush2.msra.mxu0 0.0
        %659 = vmatprep.subr.mxu0 0.0
        %660 = vmatpush2.msra.mxu0 0.0
        %661 = vmatprep.subr.mxu0 0.0
        %662 = vmatpush2.msra.mxu0 0.0
        %663 = vmatprep.subr.mxu0 0.0
        %664 = vmatpush2.msra.mxu0 0.0
        %665 = vmatprep.subr.mxu0 0.0
        %666 = vmatpush2.msra.mxu0 0.0
        %667 = vmatprep.subr.mxu0 0.0
        %668 = vmatpush2.msra.mxu0 0.0
        %669 = vmatprep.subr.mxu0 0.0
        %670 = vmatpush2.msra.mxu0 0.0
        %671 = vmatprep.subr.mxu0 0.0
        %672 = vmatpush2.msra.mxu0 0.0
        %673 = vmatprep.subr.mxu0 0.0
        %674 = vmatpush2.msra.mxu0 0.0
        %675 = vmatprep.subr.mxu0 0.0
        %676 = vmatpush2.msra.mxu0 0.0
        %677 = vmatprep.mubr.f32.mxu0 0.0
        %678 = vmatmul.mubr.f32.gmra.mxu0 %v566
        %v679 = vpop.f32.mrf.mxu0
        %v680 = vadd.f32 0.0, %v679
        %v681 = vpop.f32.mrf.mxu0
        %682 = vmatprep.mubr.f32.mxu0 0.0
        %683 = vmatmul.mubr.f32.gmra.mxu0 %v569
        %v684 = vpop.f32.mrf.mxu0
        %v685 = vadd.f32 0.0, %v684
        %v686 = vpop.f32.mrf.mxu0
        %687 = vmatprep.mubr.f32.mxu0 0.0
        %688 = vmatmul.mubr.f32.gmra.mxu0 %v572
        %v689 = vpop.f32.mrf.mxu0
        %v690 = vadd.f32 0.0, %v689
        %v691 = vpop.f32.mrf.mxu0
        %692 = vmatprep.mubr.f32.mxu0 0.0
        %693 = vmatmul.mubr.f32.gmra.mxu0 %v575
        %v694 = vpop.f32.mrf.mxu0
        %v695 = vadd.f32 0.0, %v694
        %v696 = vpop.f32.mrf.mxu0
        %697 = vmatprep.mubr.f32.mxu0 0.0
        %698 = vmatmul.mubr.f32.gmra.mxu0 %v578
        %v699 = vpop.f32.mrf.mxu0
        %v700 = vadd.f32 0.0, %v699
        %v701 = vpop.f32.mrf.mxu0
        %702 = vmatprep.mubr.f32.mxu0 0.0
        %703 = vmatmul.mubr.f32.gmra.mxu0 %v581
        %v704 = vpop.f32.mrf.mxu0
        %v705 = vadd.f32 0.0, %v704
        %v706 = vpop.f32.mrf.mxu0
        %707 = vmatprep.mubr.f32.mxu0 0.0
        %708 = vmatmul.mubr.f32.gmra.mxu0 %v584
        %v709 = vpop.f32.mrf.mxu0
        %v710 = vadd.f32 0.0, %v709
        %v711 = vpop.f32.mrf.mxu0
        %712 = vmatprep.mubr.f32.mxu0 0.0
        %713 = vmatmul.mubr.f32.gmra.mxu0 %v587
        %v714 = vpop.f32.mrf.mxu0
        %v715 = vadd.f32 0.0, %v714
        %v716 = vpop.f32.mrf.mxu0
        %717 = vmatprep.mubr.f32.mxu0 0.0
        %718 = vmatmul.mubr.f32.gmra.mxu0 %v590
        %v719 = vpop.f32.mrf.mxu0
        %v720 = vadd.f32 0.0, %v719
        %v721 = vpop.f32.mrf.mxu0
        %722 = vmatprep.mubr.f32.mxu0 0.0
        %723 = vmatmul.mubr.f32.gmra.mxu0 %v593
        %v724 = vpop.f32.mrf.mxu0
        %v725 = vadd.f32 0.0, %v724
        %v726 = vpop.f32.mrf.mxu0
        %727 = vmatprep.mubr.f32.mxu0 0.0
        %728 = vmatmul.mubr.f32.gmra.mxu0 %v596
        %v729 = vpop.f32.mrf.mxu0
        %v730 = vadd.f32 0.0, %v729
        %v731 = vpop.f32.mrf.mxu0
        %732 = vmatprep.mubr.f32.mxu0 0.0
        %733 = vmatmul.mubr.f32.gmra.mxu0 %v599
        %v734 = vpop.f32.mrf.mxu0
        %v735 = vadd.f32 0.0, %v734
        %v736 = vpop.f32.mrf.mxu0
        %737 = vmatprep.mubr.f32.mxu0 0.0
        %738 = vmatmul.mubr.f32.gmra.mxu0 %v602
        %v739 = vpop.f32.mrf.mxu0
        %v740 = vadd.f32 0.0, %v739
        %v741 = vpop.f32.mrf.mxu0
        %742 = vmatprep.mubr.f32.mxu0 0.0
        %743 = vmatmul.mubr.f32.gmra.mxu0 %v605
        %v744 = vpop.f32.mrf.mxu0
        %v745 = vadd.f32 0.0, %v744
        %v746 = vpop.f32.mrf.mxu0
        %747 = vmatprep.mubr.f32.mxu0 0.0
        %748 = vmatmul.mubr.f32.gmra.mxu0 %v608
        %v749 = vpop.f32.mrf.mxu0
        %v750 = vadd.f32 0.0, %v749
        %v751 = vpop.f32.mrf.mxu0
        %752 = vmatprep.mubr.f32.mxu0 0.0
        %753 = vmatmul.mubr.f32.gmra.mxu0 %v611
        %v754 = vpop.f32.mrf.mxu0
        %v755 = vadd.f32 0.0, %v754
        %v756 = vpop.f32.mrf.mxu0
        %757 = vdwg.mxu0
        %758 = vxpose.xlu0.b32.start [1/16] %v680, 128
        %759 = vxpose.xlu0.b32.cont [2/16] %v685, 128
        %760 = vxpose.xlu0.b32.cont [3/16] 0.0, 128
        %761 = vxpose.xlu0.b32.cont [4/16] 0.0, 128
        %762 = vxpose.xlu0.b32.cont [5/16] 0.0, 128
        %763 = vxpose.xlu0.b32.cont [6/16] 0.0, 128
        %764 = vxpose.xlu0.b32.cont [7/16] 0.0, 128
        %765 = vxpose.xlu0.b32.cont [8/16] 0.0, 128
        %766 = vxpose.xlu0.b32.cont [9/16] 0.0, 128
        %767 = vxpose.xlu0.b32.cont [10/16] 0.0, 128
        %768 = vxpose.xlu0.b32.cont [11/16] 0.0, 128
        %769 = vxpose.xlu0.b32.cont [12/16] 0.0, 128
        %770 = vxpose.xlu0.b32.cont [13/16] 0.0, 128
        %771 = vxpose.xlu0.b32.cont [14/16] 0.0, 128
        %772 = vxpose.xlu0.b32.cont [15/16] 0.0, 128
        %773 = vxpose.xlu0.b32.end [16/16] 0.0, 128
        %v774 = vpop.trf.xlu0
        %v775 = vpop.trf.xlu0
        %v776 = vpop.trf.xlu0
        %v777 = vpop.trf.xlu0
        %v778 = vpop.trf.xlu0
        %v779 = vpop.trf.xlu0
        %v780 = vpop.trf.xlu0
        %v781 = vpop.trf.xlu0
        %v782 = vpop.trf.xlu0
        %v783 = vpop.trf.xlu0
        %v784 = vpop.trf.xlu0
        %v785 = vpop.trf.xlu0
        %v786 = vpop.trf.xlu0
        %v787 = vpop.trf.xlu0
        %v788 = vpop.trf.xlu0
        %v789 = vpop.trf.xlu0
        %790 = vxpose.xlu0.b32.start [1/16] %v690, 128
        %791 = vxpose.xlu0.b32.cont [2/16] %v695, 128
        %792 = vxpose.xlu0.b32.cont [3/16] 0.0, 128
        %793 = vxpose.xlu0.b32.cont [4/16] 0.0, 128
        %794 = vxpose.xlu0.b32.cont [5/16] 0.0, 128
        %795 = vxpose.xlu0.b32.cont [6/16] 0.0, 128
        %796 = vxpose.xlu0.b32.cont [7/16] 0.0, 128
        %797 = vxpose.xlu0.b32.cont [8/16] 0.0, 128
        %798 = vxpose.xlu0.b32.cont [9/16] 0.0, 128
        %799 = vxpose.xlu0.b32.cont [10/16] 0.0, 128
        %800 = vxpose.xlu0.b32.cont [11/16] 0.0, 128
        %801 = vxpose.xlu0.b32.cont [12/16] 0.0, 128
        %802 = vxpose.xlu0.b32.cont [13/16] 0.0, 128
        %803 = vxpose.xlu0.b32.cont [14/16] 0.0, 128
        %804 = vxpose.xlu0.b32.cont [15/16] 0.0, 128
        %805 = vxpose.xlu0.b32.end [16/16] 0.0, 128
        %v806 = vpop.trf.xlu0
        %v807 = vpop.trf.xlu0
        %v808 = vpop.trf.xlu0
        %v809 = vpop.trf.xlu0
        %v810 = vpop.trf.xlu0
        %v811 = vpop.trf.xlu0
        %v812 = vpop.trf.xlu0
        %v813 = vpop.trf.xlu0
        %v814 = vpop.trf.xlu0
        %v815 = vpop.trf.xlu0
        %v816 = vpop.trf.xlu0
        %v817 = vpop.trf.xlu0
        %v818 = vpop.trf.xlu0
        %v819 = vpop.trf.xlu0
        %v820 = vpop.trf.xlu0
        %v821 = vpop.trf.xlu0
        %822 = vxpose.xlu0.b32.start [1/16] %v700, 128
        %823 = vxpose.xlu0.b32.cont [2/16] %v705, 128
        %824 = vxpose.xlu0.b32.cont [3/16] 0.0, 128
        %825 = vxpose.xlu0.b32.cont [4/16] 0.0, 128
        %826 = vxpose.xlu0.b32.cont [5/16] 0.0, 128
        %827 = vxpose.xlu0.b32.cont [6/16] 0.0, 128
        %828 = vxpose.xlu0.b32.cont [7/16] 0.0, 128
        %829 = vxpose.xlu0.b32.cont [8/16] 0.0, 128
        %830 = vxpose.xlu0.b32.cont [9/16] 0.0, 128
        %831 = vxpose.xlu0.b32.cont [10/16] 0.0, 128
        %832 = vxpose.xlu0.b32.cont [11/16] 0.0, 128
        %833 = vxpose.xlu0.b32.cont [12/16] 0.0, 128
        %834 = vxpose.xlu0.b32.cont [13/16] 0.0, 128
        %835 = vxpose.xlu0.b32.cont [14/16] 0.0, 128
        %836 = vxpose.xlu0.b32.cont [15/16] 0.0, 128
        %837 = vxpose.xlu0.b32.end [16/16] 0.0, 128
        %v838 = vpop.trf.xlu0
        %v839 = vpop.trf.xlu0
        %v840 = vpop.trf.xlu0
        %v841 = vpop.trf.xlu0
        %v842 = vpop.trf.xlu0
        %v843 = vpop.trf.xlu0
        %v844 = vpop.trf.xlu0
        %v845 = vpop.trf.xlu0
        %v846 = vpop.trf.xlu0
        %v847 = vpop.trf.xlu0
        %v848 = vpop.trf.xlu0
        %v849 = vpop.trf.xlu0
        %v850 = vpop.trf.xlu0
        %v851 = vpop.trf.xlu0
        %v852 = vpop.trf.xlu0
        %v853 = vpop.trf.xlu0
        %854 = vxpose.xlu0.b32.start [1/16] %v710, 128
        %855 = vxpose.xlu0.b32.cont [2/16] %v715, 128
        %856 = vxpose.xlu0.b32.cont [3/16] 0.0, 128
        %857 = vxpose.xlu0.b32.cont [4/16] 0.0, 128
        %858 = vxpose.xlu0.b32.cont [5/16] 0.0, 128
        %859 = vxpose.xlu0.b32.cont [6/16] 0.0, 128
        %860 = vxpose.xlu0.b32.cont [7/16] 0.0, 128
        %861 = vxpose.xlu0.b32.cont [8/16] 0.0, 128
        %862 = vxpose.xlu0.b32.cont [9/16] 0.0, 128
        %863 = vxpose.xlu0.b32.cont [10/16] 0.0, 128
        %864 = vxpose.xlu0.b32.cont [11/16] 0.0, 128
        %865 = vxpose.xlu0.b32.cont [12/16] 0.0, 128
        %866 = vxpose.xlu0.b32.cont [13/16] 0.0, 128
        %867 = vxpose.xlu0.b32.cont [14/16] 0.0, 128
        %868 = vxpose.xlu0.b32.cont [15/16] 0.0, 128
        %869 = vxpose.xlu0.b32.end [16/16] 0.0, 128
        %v870 = vpop.trf.xlu0
        %v871 = vpop.trf.xlu0
        %v872 = vpop.trf.xlu0
        %v873 = vpop.trf.xlu0
        %v874 = vpop.trf.xlu0
        %v875 = vpop.trf.xlu0
        %v876 = vpop.trf.xlu0
        %v877 = vpop.trf.xlu0
        %v878 = vpop.trf.xlu0
        %v879 = vpop.trf.xlu0
        %v880 = vpop.trf.xlu0
        %v881 = vpop.trf.xlu0
        %v882 = vpop.trf.xlu0
        %v883 = vpop.trf.xlu0
        %v884 = vpop.trf.xlu0
        %v885 = vpop.trf.xlu0
        %886 = vxpose.xlu0.b32.start [1/16] %v720, 128
        %887 = vxpose.xlu0.b32.cont [2/16] %v725, 128
        %888 = vxpose.xlu0.b32.cont [3/16] 0.0, 128
        %889 = vxpose.xlu0.b32.cont [4/16] 0.0, 128
        %890 = vxpose.xlu0.b32.cont [5/16] 0.0, 128
        %891 = vxpose.xlu0.b32.cont [6/16] 0.0, 128
        %892 = vxpose.xlu0.b32.cont [7/16] 0.0, 128
        %893 = vxpose.xlu0.b32.cont [8/16] 0.0, 128
        %894 = vxpose.xlu0.b32.cont [9/16] 0.0, 128
        %895 = vxpose.xlu0.b32.cont [10/16] 0.0, 128
        %896 = vxpose.xlu0.b32.cont [11/16] 0.0, 128
        %897 = vxpose.xlu0.b32.cont [12/16] 0.0, 128
        %898 = vxpose.xlu0.b32.cont [13/16] 0.0, 128
        %899 = vxpose.xlu0.b32.cont [14/16] 0.0, 128
        %900 = vxpose.xlu0.b32.cont [15/16] 0.0, 128
        %901 = vxpose.xlu0.b32.end [16/16] 0.0, 128
        %v902 = vpop.trf.xlu0
        %v903 = vpop.trf.xlu0
        %v904 = vpop.trf.xlu0
        %v905 = vpop.trf.xlu0
        %v906 = vpop.trf.xlu0
        %v907 = vpop.trf.xlu0
        %v908 = vpop.trf.xlu0
        %v909 = vpop.trf.xlu0
        %v910 = vpop.trf.xlu0
        %v911 = vpop.trf.xlu0
        %v912 = vpop.trf.xlu0
        %v913 = vpop.trf.xlu0
        %v914 = vpop.trf.xlu0
        %v915 = vpop.trf.xlu0
        %v916 = vpop.trf.xlu0
        %v917 = vpop.trf.xlu0
        %918 = vxpose.xlu0.b32.start [1/16] %v730, 128
        %919 = vxpose.xlu0.b32.cont [2/16] %v735, 128
        %920 = vxpose.xlu0.b32.cont [3/16] 0.0, 128
        %921 = vxpose.xlu0.b32.cont [4/16] 0.0, 128
        %922 = vxpose.xlu0.b32.cont [5/16] 0.0, 128
        %923 = vxpose.xlu0.b32.cont [6/16] 0.0, 128
        %924 = vxpose.xlu0.b32.cont [7/16] 0.0, 128
        %925 = vxpose.xlu0.b32.cont [8/16] 0.0, 128
        %926 = vxpose.xlu0.b32.cont [9/16] 0.0, 128
        %927 = vxpose.xlu0.b32.cont [10/16] 0.0, 128
        %928 = vxpose.xlu0.b32.cont [11/16] 0.0, 128
        %929 = vxpose.xlu0.b32.cont [12/16] 0.0, 128
        %930 = vxpose.xlu0.b32.cont [13/16] 0.0, 128
        %931 = vxpose.xlu0.b32.cont [14/16] 0.0, 128
        %932 = vxpose.xlu0.b32.cont [15/16] 0.0, 128
        %933 = vxpose.xlu0.b32.end [16/16] 0.0, 128
        %v934 = vpop.trf.xlu0
        %v935 = vpop.trf.xlu0
        %v936 = vpop.trf.xlu0
        %v937 = vpop.trf.xlu0
        %v938 = vpop.trf.xlu0
        %v939 = vpop.trf.xlu0
        %v940 = vpop.trf.xlu0
        %v941 = vpop.trf.xlu0
        %v942 = vpop.trf.xlu0
        %v943 = vpop.trf.xlu0
        %v944 = vpop.trf.xlu0
        %v945 = vpop.trf.xlu0
        %v946 = vpop.trf.xlu0
        %v947 = vpop.trf.xlu0
        %v948 = vpop.trf.xlu0
        %v949 = vpop.trf.xlu0
        %950 = vxpose.xlu0.b32.start [1/16] %v740, 128
        %951 = vxpose.xlu0.b32.cont [2/16] %v745, 128
        %952 = vxpose.xlu0.b32.cont [3/16] 0.0, 128
        %953 = vxpose.xlu0.b32.cont [4/16] 0.0, 128
        %954 = vxpose.xlu0.b32.cont [5/16] 0.0, 128
        %955 = vxpose.xlu0.b32.cont [6/16] 0.0, 128
        %956 = vxpose.xlu0.b32.cont [7/16] 0.0, 128
        %957 = vxpose.xlu0.b32.cont [8/16] 0.0, 128
        %958 = vxpose.xlu0.b32.cont [9/16] 0.0, 128
        %959 = vxpose.xlu0.b32.cont [10/16] 0.0, 128
        %960 = vxpose.xlu0.b32.cont [11/16] 0.0, 128
        %961 = vxpose.xlu0.b32.cont [12/16] 0.0, 128
        %962 = vxpose.xlu0.b32.cont [13/16] 0.0, 128
        %963 = vxpose.xlu0.b32.cont [14/16] 0.0, 128
        %964 = vxpose.xlu0.b32.cont [15/16] 0.0, 128
        %965 = vxpose.xlu0.b32.end [16/16] 0.0, 128
        %v966 = vpop.trf.xlu0
        %v967 = vpop.trf.xlu0
        %v968 = vpop.trf.xlu0
        %v969 = vpop.trf.xlu0
        %v970 = vpop.trf.xlu0
        %v971 = vpop.trf.xlu0
        %v972 = vpop.trf.xlu0
        %v973 = vpop.trf.xlu0
        %v974 = vpop.trf.xlu0
        %v975 = vpop.trf.xlu0
        %v976 = vpop.trf.xlu0
        %v977 = vpop.trf.xlu0
        %v978 = vpop.trf.xlu0
        %v979 = vpop.trf.xlu0
        %v980 = vpop.trf.xlu0
        %v981 = vpop.trf.xlu0
        %982 = vxpose.xlu0.b32.start [1/16] %v750, 128
        %983 = vxpose.xlu0.b32.cont [2/16] %v755, 128
        %984 = vxpose.xlu0.b32.cont [3/16] 0.0, 128
        %985 = vxpose.xlu0.b32.cont [4/16] 0.0, 128
        %986 = vxpose.xlu0.b32.cont [5/16] 0.0, 128
        %987 = vxpose.xlu0.b32.cont [6/16] 0.0, 128
        %988 = vxpose.xlu0.b32.cont [7/16] 0.0, 128
        %989 = vxpose.xlu0.b32.cont [8/16] 0.0, 128
        %990 = vxpose.xlu0.b32.cont [9/16] 0.0, 128
        %991 = vxpose.xlu0.b32.cont [10/16] 0.0, 128
        %992 = vxpose.xlu0.b32.cont [11/16] 0.0, 128
        %993 = vxpose.xlu0.b32.cont [12/16] 0.0, 128
        %994 = vxpose.xlu0.b32.cont [13/16] 0.0, 128
        %995 = vxpose.xlu0.b32.cont [14/16] 0.0, 128
        %996 = vxpose.xlu0.b32.cont [15/16] 0.0, 128
        %997 = vxpose.xlu0.b32.end [16/16] 0.0, 128
        %v998 = vpop.trf.xlu0
        %v999 = vpop.trf.xlu0
        %v1000 = vpop.trf.xlu0
        %v1001 = vpop.trf.xlu0
        %v1002 = vpop.trf.xlu0
        %v1003 = vpop.trf.xlu0
        %v1004 = vpop.trf.xlu0
        %v1005 = vpop.trf.xlu0
        %v1006 = vpop.trf.xlu0
        %v1007 = vpop.trf.xlu0
        %v1008 = vpop.trf.xlu0
        %v1009 = vpop.trf.xlu0
        %v1010 = vpop.trf.xlu0
        %v1011 = vpop.trf.xlu0
        %v1012 = vpop.trf.xlu0
        %v1013 = vpop.trf.xlu0
        %v1014 = vld [vmem:[#allocation9] sm:$0xff]
        %v1015 = vld [vmem:[#allocation9 + $0x8] sm:$0xff]
        %v1017 = vsel %vm564, %v774, 0
        %v1020 = vsel %vm564, %v775, 0
        %v1023 = vsel %vm564, %v806, 0
        %v1026 = vsel %vm564, %v807, 0
        %v1029 = vsel %vm564, %v838, 0
        %v1032 = vsel %vm564, %v839, 0
        %v1035 = vsel %vm564, %v870, 0
        %v1038 = vsel %vm564, %v871, 0
        %v1041 = vsel %vm564, %v902, 0
        %v1044 = vsel %vm564, %v903, 0
        %v1047 = vsel %vm564, %v934, 0
        %v1050 = vsel %vm564, %v935, 0
        %v1053 = vsel %vm564, %v966, 0
        %v1056 = vsel %vm564, %v967, 0
        %v1059 = vsel %vm564, %v998, 0
        %v1062 = vsel %vm564, %v999, 0
        %1064 = vmatprep.subr.mxu0 0.0
        %1065 = vmatpush1.msra.mxu0 0.0
        %1066 = vmatprep.subr.mxu0 0.0
        %1067 = vmatpush1.msra.mxu0 0.0
        %1068 = vmatprep.subr.mxu0 0.0
        %1069 = vmatpush1.msra.mxu0 0.0
        %1070 = vmatprep.subr.mxu0 0.0
        %1071 = vmatpush1.msra.mxu0 0.0
        %1072 = vmatprep.subr.mxu0 0.0
        %1073 = vmatpush1.msra.mxu0 0.0
        %1074 = vmatprep.subr.mxu0 0.0
        %1075 = vmatpush1.msra.mxu0 0.0
        %1076 = vmatprep.subr.mxu0 0.0
        %1077 = vmatpush1.msra.mxu0 0.0
        %1078 = vmatprep.subr.mxu0 0.0
        %1079 = vmatpush1.msra.mxu0 0.0
        %1080 = vmatprep.subr.mxu0 0.0
        %1081 = vmatpush1.msra.mxu0 0.0
        %1082 = vmatprep.subr.mxu0 0.0
        %1083 = vmatpush1.msra.mxu0 0.0
        %1084 = vmatprep.subr.mxu0 0.0
        %1085 = vmatpush1.msra.mxu0 0.0
        %1086 = vmatprep.subr.mxu0 0.0
        %1087 = vmatpush1.msra.mxu0 0.0
        %1088 = vmatprep.subr.mxu0 0.0
        %1089 = vmatpush1.msra.mxu0 0.0
        %1090 = vmatprep.subr.mxu0 0.0
        %1091 = vmatpush1.msra.mxu0 0.0
        %1092 = vmatprep.subr.mxu0 0.0
        %1093 = vmatpush1.msra.mxu0 %v1015
        %1094 = vmatprep.subr.mxu0 0.0
        %1095 = vmatpush1.msra.mxu0 %v1014
        %1096 = vmatprep.subr.mxu0 0.0
        %1097 = vmatpush2.msra.mxu0 0.0
        %1098 = vmatprep.subr.mxu0 0.0
        %1099 = vmatpush2.msra.mxu0 0.0
        %1100 = vmatprep.subr.mxu0 0.0
        %1101 = vmatpush2.msra.mxu0 0.0
        %1102 = vmatprep.subr.mxu0 0.0
        %1103 = vmatpush2.msra.mxu0 0.0
        %1104 = vmatprep.subr.mxu0 0.0
        %1105 = vmatpush2.msra.mxu0 0.0
        %1106 = vmatprep.subr.mxu0 0.0
        %1107 = vmatpush2.msra.mxu0 0.0
        %1108 = vmatprep.subr.mxu0 0.0
        %1109 = vmatpush2.msra.mxu0 0.0
        %1110 = vmatprep.subr.mxu0 0.0
        %1111 = vmatpush2.msra.mxu0 0.0
        %1112 = vmatprep.subr.mxu0 0.0
        %1113 = vmatpush2.msra.mxu0 0.0
        %1114 = vmatprep.subr.mxu0 0.0
        %1115 = vmatpush2.msra.mxu0 0.0
        %1116 = vmatprep.subr.mxu0 0.0
        %1117 = vmatpush2.msra.mxu0 0.0
        %1118 = vmatprep.subr.mxu0 0.0
        %1119 = vmatpush2.msra.mxu0 0.0
        %1120 = vmatprep.subr.mxu0 0.0
        %1121 = vmatpush2.msra.mxu0 0.0
        %1122 = vmatprep.subr.mxu0 0.0
        %1123 = vmatpush2.msra.mxu0 0.0
        %1124 = vmatprep.subr.mxu0 0.0
        %1125 = vmatpush2.msra.mxu0 0.0
        %1126 = vmatprep.subr.mxu0 0.0
        %1127 = vmatpush2.msra.mxu0 0.0
        %1128 = vmatprep.mubr.f32.mxu0 0.0
        %1129 = vmatmul.mubr.f32.gmra.mxu0 %v1017
        %v1130 = vpop.f32.mrf.mxu0
        %v1131 = vadd.f32 0.0, %v1130
        %v1132 = vpop.f32.mrf.mxu0
        %1133 = vmatprep.mubr.f32.mxu0 0.0
        %1134 = vmatmul.mubr.f32.gmra.mxu0 %v1020
        %v1135 = vpop.f32.mrf.mxu0
        %v1136 = vadd.f32 0.0, %v1135
        %v1137 = vpop.f32.mrf.mxu0
        %1138 = vmatprep.mubr.f32.mxu0 0.0
        %1139 = vmatmul.mubr.f32.gmra.mxu0 %v1023
        %v1140 = vpop.f32.mrf.mxu0
        %v1141 = vadd.f32 0.0, %v1140
        %v1142 = vpop.f32.mrf.mxu0
        %1143 = vmatprep.mubr.f32.mxu0 0.0
        %1144 = vmatmul.mubr.f32.gmra.mxu0 %v1026
        %v1145 = vpop.f32.mrf.mxu0
        %v1146 = vadd.f32 0.0, %v1145
        %v1147 = vpop.f32.mrf.mxu0
        %1148 = vmatprep.mubr.f32.mxu0 0.0
        %1149 = vmatmul.mubr.f32.gmra.mxu0 %v1029
        %v1150 = vpop.f32.mrf.mxu0
        %v1151 = vadd.f32 0.0, %v1150
        %v1152 = vpop.f32.mrf.mxu0
        %1153 = vmatprep.mubr.f32.mxu0 0.0
        %1154 = vmatmul.mubr.f32.gmra.mxu0 %v1032
        %v1155 = vpop.f32.mrf.mxu0
        %v1156 = vadd.f32 0.0, %v1155
        %v1157 = vpop.f32.mrf.mxu0
        %1158 = vmatprep.mubr.f32.mxu0 0.0
        %1159 = vmatmul.mubr.f32.gmra.mxu0 %v1035
        %v1160 = vpop.f32.mrf.mxu0
        %v1161 = vadd.f32 0.0, %v1160
        %v1162 = vpop.f32.mrf.mxu0
        %1163 = vmatprep.mubr.f32.mxu0 0.0
        %1164 = vmatmul.mubr.f32.gmra.mxu0 %v1038
        %v1165 = vpop.f32.mrf.mxu0
        %v1166 = vadd.f32 0.0, %v1165
        %v1167 = vpop.f32.mrf.mxu0
        %1168 = vmatprep.mubr.f32.mxu0 0.0
        %1169 = vmatmul.mubr.f32.gmra.mxu0 %v1041
        %v1170 = vpop.f32.mrf.mxu0
        %v1171 = vadd.f32 0.0, %v1170
        %v1172 = vpop.f32.mrf.mxu0
        %1173 = vmatprep.mubr.f32.mxu0 0.0
        %1174 = vmatmul.mubr.f32.gmra.mxu0 %v1044
        %v1175 = vpop.f32.mrf.mxu0
        %v1176 = vadd.f32 0.0, %v1175
        %v1177 = vpop.f32.mrf.mxu0
        %1178 = vmatprep.mubr.f32.mxu0 0.0
        %1179 = vmatmul.mubr.f32.gmra.mxu0 %v1047
        %v1180 = vpop.f32.mrf.mxu0
        %v1181 = vadd.f32 0.0, %v1180
        %v1182 = vpop.f32.mrf.mxu0
        %1183 = vmatprep.mubr.f32.mxu0 0.0
        %1184 = vmatmul.mubr.f32.gmra.mxu0 %v1050
        %v1185 = vpop.f32.mrf.mxu0
        %v1186 = vadd.f32 0.0, %v1185
        %v1187 = vpop.f32.mrf.mxu0
        %1188 = vmatprep.mubr.f32.mxu0 0.0
        %1189 = vmatmul.mubr.f32.gmra.mxu0 %v1053
        %v1190 = vpop.f32.mrf.mxu0
        %v1191 = vadd.f32 0.0, %v1190
        %v1192 = vpop.f32.mrf.mxu0
        %1193 = vmatprep.mubr.f32.mxu0 0.0
        %1194 = vmatmul.mubr.f32.gmra.mxu0 %v1056
        %v1195 = vpop.f32.mrf.mxu0
        %v1196 = vadd.f32 0.0, %v1195
        %v1197 = vpop.f32.mrf.mxu0
        %1198 = vmatprep.mubr.f32.mxu0 0.0
        %1199 = vmatmul.mubr.f32.gmra.mxu0 %v1059
        %v1200 = vpop.f32.mrf.mxu0
        %v1201 = vadd.f32 0.0, %v1200
        %v1202 = vpop.f32.mrf.mxu0
        %1203 = vmatprep.mubr.f32.mxu0 0.0
        %1204 = vmatmul.mubr.f32.gmra.mxu0 %v1062
        %v1205 = vpop.f32.mrf.mxu0
        %v1206 = vadd.f32 0.0, %v1205
        %v1207 = vpop.f32.mrf.mxu0
        %1208 = vdwg.mxu0
        %v1209 = vmul.f32 %v1131, %v1151
        %v1210 = vmul.f32 %v1136, %v1156
        %v1211 = vmul.f32 %v1141, %v1161
        %v1212 = vmul.f32 %v1146, %v1166
        %v1213 = vsub.f32 %v1171, %v1209
        %v1214 = vsub.f32 %v1176, %v1210
        %v1215 = vsub.f32 %v1181, %v1211
        %v1216 = vsub.f32 %v1186, %v1212
        %v1217 = vmul.f32 %v1151, %v1151
        %v1218 = vmul.f32 %v1156, %v1156
        %v1219 = vmul.f32 %v1161, %v1161
        %v1220 = vmul.f32 %v1166, %v1166
        %v1221 = vsub.f32 %v1191, %v1217
        %v1222 = vsub.f32 %v1196, %v1218
        %v1223 = vsub.f32 %v1201, %v1219
        %v1224 = vsub.f32 %v1206, %v1220
        %s1225 = sld [smem:[#allocation15]]
        %v1226 = vstv %s1225
        %v1227 = vadd.f32 %v1221, %v1226
        %v1228 = vadd.f32 %v1222, %v1226
        %v1229 = vadd.f32 %v1223, %v1226
        %v1230 = vadd.f32 %v1224, %v1226
        %v1231 = vrcp.pop %v1227
        %v1232 = vrcp.pop %v1228
        %v1233 = vrcp.pop %v1229
        %v1234 = vrcp.pop %v1230
        %v1235 = vmul.f32 %v1213, %v1231
        %v1236 = vmul.f32 %v1214, %v1232
        %v1237 = vmul.f32 %v1215, %v1233
        %v1238 = vmul.f32 %v1216, %v1234
        %v1239 = vmul.f32 %v1235, %v1151
        %v1240 = vmul.f32 %v1236, %v1156
        %v1241 = vmul.f32 %v1237, %v1161
        %v1242 = vmul.f32 %v1238, %v1166
        %v1243 = vsub.f32 %v1131, %v1239
        %v1244 = vsub.f32 %v1136, %v1240
        %v1245 = vsub.f32 %v1141, %v1241
        %v1246 = vsub.f32 %v1146, %v1242
        %s1247 = sld [smem:[#allocation16]]
        %v1248 = vstv %s1247
        %v1249 = vmul.f32 %v1248, %v1235
        %v1250 = vmul.f32 %v1248, %v1236
        %v1251 = vmul.f32 %v1248, %v1237
        %v1252 = vmul.f32 %v1248, %v1238
        %v1253 = vmul.f32 %v1248, %v1243
        %v1254 = vmul.f32 %v1248, %v1244
        %v1255 = vmul.f32 %v1248, %v1245
        %v1256 = vmul.f32 %v1248, %v1246
        %1273 = vrot.lane.b32.xlu0 %v680, 112
        %v1274 = vpop.permute.xlu0 %1273
        %1275 = vrot.lane.b32.xlu0 %v685, 112
        %v1276 = vpop.permute.xlu0 %1275
        %1277 = vrot.lane.b32.xlu0 %v690, 112
        %v1278 = vpop.permute.xlu0 %1277
        %1279 = vrot.lane.b32.xlu0 %v695, 112
        %v1280 = vpop.permute.xlu0 %1279
        %1281 = vrot.lane.b32.xlu0 %v700, 112
        %v1282 = vpop.permute.xlu0 %1281
        %1283 = vrot.lane.b32.xlu0 %v705, 112
        %v1284 = vpop.permute.xlu0 %1283
        %1285 = vrot.lane.b32.xlu0 %v710, 112
        %v1286 = vpop.permute.xlu0 %1285
        %1287 = vrot.lane.b32.xlu0 %v715, 112
        %v1288 = vpop.permute.xlu0 %1287
        %1289 = vrot.lane.b32.xlu0 %v720, 112
        %v1290 = vpop.permute.xlu0 %1289
        %1291 = vrot.lane.b32.xlu0 %v725, 112
        %v1292 = vpop.permute.xlu0 %1291
        %1293 = vrot.lane.b32.xlu0 %v730, 112
        %v1294 = vpop.permute.xlu0 %1293
        %1295 = vrot.lane.b32.xlu0 %v735, 112
        %v1296 = vpop.permute.xlu0 %1295
        %1297 = vrot.lane.b32.xlu0 %v740, 112
        %v1298 = vpop.permute.xlu0 %1297
        %1299 = vrot.lane.b32.xlu0 %v745, 112
        %v1300 = vpop.permute.xlu0 %1299
        %1301 = vrot.lane.b32.xlu0 %v750, 112
        %v1302 = vpop.permute.xlu0 %1301
        %1303 = vrot.lane.b32.xlu0 %v755, 112
        %v1304 = vpop.permute.xlu0 %1303
        %1321 = vxpose.xlu0.b32.start [1/16] %v1274, 128
        %1322 = vxpose.xlu0.b32.cont [2/16] %v1276, 128
        %1323 = vxpose.xlu0.b32.cont [3/16] 0.0, 128
        %1324 = vxpose.xlu0.b32.cont [4/16] 0.0, 128
        %1325 = vxpose.xlu0.b32.cont [5/16] 0.0, 128
        %1326 = vxpose.xlu0.b32.cont [6/16] 0.0, 128
        %1327 = vxpose.xlu0.b32.cont [7/16] 0.0, 128
        %1328 = vxpose.xlu0.b32.cont [8/16] 0.0, 128
        %1329 = vxpose.xlu0.b32.cont [9/16] 0.0, 128
        %1330 = vxpose.xlu0.b32.cont [10/16] 0.0, 128
        %1331 = vxpose.xlu0.b32.cont [11/16] 0.0, 128
        %1332 = vxpose.xlu0.b32.cont [12/16] 0.0, 128
        %1333 = vxpose.xlu0.b32.cont [13/16] 0.0, 128
        %1334 = vxpose.xlu0.b32.cont [14/16] 0.0, 128
        %1335 = vxpose.xlu0.b32.cont [15/16] 0.0, 128
        %1336 = vxpose.xlu0.b32.end [16/16] 0.0, 128
        %v1337 = vpop.trf.xlu0
        %v1338 = vpop.trf.xlu0
        %v1339 = vpop.trf.xlu0
        %v1340 = vpop.trf.xlu0
        %v1341 = vpop.trf.xlu0
        %v1342 = vpop.trf.xlu0
        %v1343 = vpop.trf.xlu0
        %v1344 = vpop.trf.xlu0
        %v1345 = vpop.trf.xlu0
        %v1346 = vpop.trf.xlu0
        %v1347 = vpop.trf.xlu0
        %v1348 = vpop.trf.xlu0
        %v1349 = vpop.trf.xlu0
        %v1350 = vpop.trf.xlu0
        %v1351 = vpop.trf.xlu0
        %v1352 = vpop.trf.xlu0
        %1353 = vxpose.xlu0.b32.start [1/16] %v1278, 128
        %1354 = vxpose.xlu0.b32.cont [2/16] %v1280, 128
        %1355 = vxpose.xlu0.b32.cont [3/16] 0.0, 128
        %1356 = vxpose.xlu0.b32.cont [4/16] 0.0, 128
        %1357 = vxpose.xlu0.b32.cont [5/16] 0.0, 128
        %1358 = vxpose.xlu0.b32.cont [6/16] 0.0, 128
        %1359 = vxpose.xlu0.b32.cont [7/16] 0.0, 128
        %1360 = vxpose.xlu0.b32.cont [8/16] 0.0, 128
        %1361 = vxpose.xlu0.b32.cont [9/16] 0.0, 128
        %1362 = vxpose.xlu0.b32.cont [10/16] 0.0, 128
        %1363 = vxpose.xlu0.b32.cont [11/16] 0.0, 128
        %1364 = vxpose.xlu0.b32.cont [12/16] 0.0, 128
        %1365 = vxpose.xlu0.b32.cont [13/16] 0.0, 128
        %1366 = vxpose.xlu0.b32.cont [14/16] 0.0, 128
        %1367 = vxpose.xlu0.b32.cont [15/16] 0.0, 128
        %1368 = vxpose.xlu0.b32.end [16/16] 0.0, 128
        %v1369 = vpop.trf.xlu0
        %v1370 = vpop.trf.xlu0
        %v1371 = vpop.trf.xlu0
        %v1372 = vpop.trf.xlu0
        %v1373 = vpop.trf.xlu0
        %v1374 = vpop.trf.xlu0
        %v1375 = vpop.trf.xlu0
        %v1376 = vpop.trf.xlu0
        %v1377 = vpop.trf.xlu0
        %v1378 = vpop.trf.xlu0
        %v1379 = vpop.trf.xlu0
        %v1380 = vpop.trf.xlu0
        %v1381 = vpop.trf.xlu0
        %v1382 = vpop.trf.xlu0
        %v1383 = vpop.trf.xlu0
        %v1384 = vpop.trf.xlu0
        %1385 = vxpose.xlu0.b32.start [1/16] %v1282, 128
        %1386 = vxpose.xlu0.b32.cont [2/16] %v1284, 128
        %1387 = vxpose.xlu0.b32.cont [3/16] 0.0, 128
        %1388 = vxpose.xlu0.b32.cont [4/16] 0.0, 128
        %1389 = vxpose.xlu0.b32.cont [5/16] 0.0, 128
        %1390 = vxpose.xlu0.b32.cont [6/16] 0.0, 128
        %1391 = vxpose.xlu0.b32.cont [7/16] 0.0, 128
        %1392 = vxpose.xlu0.b32.cont [8/16] 0.0, 128
        %1393 = vxpose.xlu0.b32.cont [9/16] 0.0, 128
        %1394 = vxpose.xlu0.b32.cont [10/16] 0.0, 128
        %1395 = vxpose.xlu0.b32.cont [11/16] 0.0, 128
        %1396 = vxpose.xlu0.b32.cont [12/16] 0.0, 128
        %1397 = vxpose.xlu0.b32.cont [13/16] 0.0, 128
        %1398 = vxpose.xlu0.b32.cont [14/16] 0.0, 128
        %1399 = vxpose.xlu0.b32.cont [15/16] 0.0, 128
        %1400 = vxpose.xlu0.b32.end [16/16] 0.0, 128
        %v1401 = vpop.trf.xlu0
        %v1402 = vpop.trf.xlu0
        %v1403 = vpop.trf.xlu0
        %v1404 = vpop.trf.xlu0
        %v1405 = vpop.trf.xlu0
        %v1406 = vpop.trf.xlu0
        %v1407 = vpop.trf.xlu0
        %v1408 = vpop.trf.xlu0
        %v1409 = vpop.trf.xlu0
        %v1410 = vpop.trf.xlu0
        %v1411 = vpop.trf.xlu0
        %v1412 = vpop.trf.xlu0
        %v1413 = vpop.trf.xlu0
        %v1414 = vpop.trf.xlu0
        %v1415 = vpop.trf.xlu0
        %v1416 = vpop.trf.xlu0
        %1417 = vxpose.xlu0.b32.start [1/16] %v1286, 128
        %1418 = vxpose.xlu0.b32.cont [2/16] %v1288, 128
        %1419 = vxpose.xlu0.b32.cont [3/16] 0.0, 128
        %1420 = vxpose.xlu0.b32.cont [4/16] 0.0, 128
        %1421 = vxpose.xlu0.b32.cont [5/16] 0.0, 128
        %1422 = vxpose.xlu0.b32.cont [6/16] 0.0, 128
        %1423 = vxpose.xlu0.b32.cont [7/16] 0.0, 128
        %1424 = vxpose.xlu0.b32.cont [8/16] 0.0, 128
        %1425 = vxpose.xlu0.b32.cont [9/16] 0.0, 128
        %1426 = vxpose.xlu0.b32.cont [10/16] 0.0, 128
        %1427 = vxpose.xlu0.b32.cont [11/16] 0.0, 128
        %1428 = vxpose.xlu0.b32.cont [12/16] 0.0, 128
        %1429 = vxpose.xlu0.b32.cont [13/16] 0.0, 128
        %1430 = vxpose.xlu0.b32.cont [14/16] 0.0, 128
        %1431 = vxpose.xlu0.b32.cont [15/16] 0.0, 128
        %1432 = vxpose.xlu0.b32.end [16/16] 0.0, 128
        %v1433 = vpop.trf.xlu0
        %v1434 = vpop.trf.xlu0
        %v1435 = vpop.trf.xlu0
        %v1436 = vpop.trf.xlu0
        %v1437 = vpop.trf.xlu0
        %v1438 = vpop.trf.xlu0
        %v1439 = vpop.trf.xlu0
        %v1440 = vpop.trf.xlu0
        %v1441 = vpop.trf.xlu0
        %v1442 = vpop.trf.xlu0
        %v1443 = vpop.trf.xlu0
        %v1444 = vpop.trf.xlu0
        %v1445 = vpop.trf.xlu0
        %v1446 = vpop.trf.xlu0
        %v1447 = vpop.trf.xlu0
        %v1448 = vpop.trf.xlu0
        %1449 = vxpose.xlu0.b32.start [1/16] %v1290, 128
        %1450 = vxpose.xlu0.b32.cont [2/16] %v1292, 128
        %1451 = vxpose.xlu0.b32.cont [3/16] 0.0, 128
        %1452 = vxpose.xlu0.b32.cont [4/16] 0.0, 128
        %1453 = vxpose.xlu0.b32.cont [5/16] 0.0, 128
        %1454 = vxpose.xlu0.b32.cont [6/16] 0.0, 128
        %1455 = vxpose.xlu0.b32.cont [7/16] 0.0, 128
        %1456 = vxpose.xlu0.b32.cont [8/16] 0.0, 128
        %1457 = vxpose.xlu0.b32.cont [9/16] 0.0, 128
        %1458 = vxpose.xlu0.b32.cont [10/16] 0.0, 128
        %1459 = vxpose.xlu0.b32.cont [11/16] 0.0, 128
        %1460 = vxpose.xlu0.b32.cont [12/16] 0.0, 128
        %1461 = vxpose.xlu0.b32.cont [13/16] 0.0, 128
        %1462 = vxpose.xlu0.b32.cont [14/16] 0.0, 128
        %1463 = vxpose.xlu0.b32.cont [15/16] 0.0, 128
        %1464 = vxpose.xlu0.b32.end [16/16] 0.0, 128
        %v1465 = vpop.trf.xlu0
        %v1466 = vpop.trf.xlu0
        %v1467 = vpop.trf.xlu0
        %v1468 = vpop.trf.xlu0
        %v1469 = vpop.trf.xlu0
        %v1470 = vpop.trf.xlu0
        %v1471 = vpop.trf.xlu0
        %v1472 = vpop.trf.xlu0
        %v1473 = vpop.trf.xlu0
        %v1474 = vpop.trf.xlu0
        %v1475 = vpop.trf.xlu0
        %v1476 = vpop.trf.xlu0
        %v1477 = vpop.trf.xlu0
        %v1478 = vpop.trf.xlu0
        %v1479 = vpop.trf.xlu0
        %v1480 = vpop.trf.xlu0
        %1481 = vxpose.xlu0.b32.start [1/16] %v1294, 128
        %1482 = vxpose.xlu0.b32.cont [2/16] %v1296, 128
        %1483 = vxpose.xlu0.b32.cont [3/16] 0.0, 128
        %1484 = vxpose.xlu0.b32.cont [4/16] 0.0, 128
        %1485 = vxpose.xlu0.b32.cont [5/16] 0.0, 128
        %1486 = vxpose.xlu0.b32.cont [6/16] 0.0, 128
        %1487 = vxpose.xlu0.b32.cont [7/16] 0.0, 128
        %1488 = vxpose.xlu0.b32.cont [8/16] 0.0, 128
        %1489 = vxpose.xlu0.b32.cont [9/16] 0.0, 128
        %1490 = vxpose.xlu0.b32.cont [10/16] 0.0, 128
        %1491 = vxpose.xlu0.b32.cont [11/16] 0.0, 128
        %1492 = vxpose.xlu0.b32.cont [12/16] 0.0, 128
        %1493 = vxpose.xlu0.b32.cont [13/16] 0.0, 128
        %1494 = vxpose.xlu0.b32.cont [14/16] 0.0, 128
        %1495 = vxpose.xlu0.b32.cont [15/16] 0.0, 128
        %1496 = vxpose.xlu0.b32.end [16/16] 0.0, 128
        %v1497 = vpop.trf.xlu0
        %v1498 = vpop.trf.xlu0
        %v1499 = vpop.trf.xlu0
        %v1500 = vpop.trf.xlu0
        %v1501 = vpop.trf.xlu0
        %v1502 = vpop.trf.xlu0
        %v1503 = vpop.trf.xlu0
        %v1504 = vpop.trf.xlu0
        %v1505 = vpop.trf.xlu0
        %v1506 = vpop.trf.xlu0
        %v1507 = vpop.trf.xlu0
        %v1508 = vpop.trf.xlu0
        %v1509 = vpop.trf.xlu0
        %v1510 = vpop.trf.xlu0
        %v1511 = vpop.trf.xlu0
        %v1512 = vpop.trf.xlu0
        %1513 = vxpose.xlu0.b32.start [1/16] %v1298, 128
        %1514 = vxpose.xlu0.b32.cont [2/16] %v1300, 128
        %1515 = vxpose.xlu0.b32.cont [3/16] 0.0, 128
        %1516 = vxpose.xlu0.b32.cont [4/16] 0.0, 128
        %1517 = vxpose.xlu0.b32.cont [5/16] 0.0, 128
        %1518 = vxpose.xlu0.b32.cont [6/16] 0.0, 128
        %1519 = vxpose.xlu0.b32.cont [7/16] 0.0, 128
        %1520 = vxpose.xlu0.b32.cont [8/16] 0.0, 128
        %1521 = vxpose.xlu0.b32.cont [9/16] 0.0, 128
        %1522 = vxpose.xlu0.b32.cont [10/16] 0.0, 128
        %1523 = vxpose.xlu0.b32.cont [11/16] 0.0, 128
        %1524 = vxpose.xlu0.b32.cont [12/16] 0.0, 128
        %1525 = vxpose.xlu0.b32.cont [13/16] 0.0, 128
        %1526 = vxpose.xlu0.b32.cont [14/16] 0.0, 128
        %1527 = vxpose.xlu0.b32.cont [15/16] 0.0, 128
        %1528 = vxpose.xlu0.b32.end [16/16] 0.0, 128
        %v1529 = vpop.trf.xlu0
        %v1530 = vpop.trf.xlu0
        %v1531 = vpop.trf.xlu0
        %v1532 = vpop.trf.xlu0
        %v1533 = vpop.trf.xlu0
        %v1534 = vpop.trf.xlu0
        %v1535 = vpop.trf.xlu0
        %v1536 = vpop.trf.xlu0
        %v1537 = vpop.trf.xlu0
        %v1538 = vpop.trf.xlu0
        %v1539 = vpop.trf.xlu0
        %v1540 = vpop.trf.xlu0
        %v1541 = vpop.trf.xlu0
        %v1542 = vpop.trf.xlu0
        %v1543 = vpop.trf.xlu0
        %v1544 = vpop.trf.xlu0
        %1545 = vxpose.xlu0.b32.start [1/16] %v1302, 128
        %1546 = vxpose.xlu0.b32.cont [2/16] %v1304, 128
        %1547 = vxpose.xlu0.b32.cont [3/16] 0.0, 128
        %1548 = vxpose.xlu0.b32.cont [4/16] 0.0, 128
        %1549 = vxpose.xlu0.b32.cont [5/16] 0.0, 128
        %1550 = vxpose.xlu0.b32.cont [6/16] 0.0, 128
        %1551 = vxpose.xlu0.b32.cont [7/16] 0.0, 128
        %1552 = vxpose.xlu0.b32.cont [8/16] 0.0, 128
        %1553 = vxpose.xlu0.b32.cont [9/16] 0.0, 128
        %1554 = vxpose.xlu0.b32.cont [10/16] 0.0, 128
        %1555 = vxpose.xlu0.b32.cont [11/16] 0.0, 128
        %1556 = vxpose.xlu0.b32.cont [12/16] 0.0, 128
        %1557 = vxpose.xlu0.b32.cont [13/16] 0.0, 128
        %1558 = vxpose.xlu0.b32.cont [14/16] 0.0, 128
        %1559 = vxpose.xlu0.b32.cont [15/16] 0.0, 128
        %1560 = vxpose.xlu0.b32.end [16/16] 0.0, 128
        %v1561 = vpop.trf.xlu0
        %v1562 = vpop.trf.xlu0
        %v1563 = vpop.trf.xlu0
        %v1564 = vpop.trf.xlu0
        %v1565 = vpop.trf.xlu0
        %v1566 = vpop.trf.xlu0
        %v1567 = vpop.trf.xlu0
        %v1568 = vpop.trf.xlu0
        %v1569 = vpop.trf.xlu0
        %v1570 = vpop.trf.xlu0
        %v1571 = vpop.trf.xlu0
        %v1572 = vpop.trf.xlu0
        %v1573 = vpop.trf.xlu0
        %v1574 = vpop.trf.xlu0
        %v1575 = vpop.trf.xlu0
        %v1576 = vpop.trf.xlu0
        %s1577 = scalar_lea.vmem [#allocation9], 16
        %v1578 = vld [vmem:[%s1577] sm:$0xff]
        %v1579 = vld [vmem:[%s1577 + $0x8] sm:$0xff]
        %v1581 = vsel %vm564, %v1337, 0
        %v1584 = vsel %vm564, %v1338, 0
        %v1587 = vsel %vm564, %v1369, 0
        %v1590 = vsel %vm564, %v1370, 0
        %v1593 = vsel %vm564, %v1401, 0
        %v1596 = vsel %vm564, %v1402, 0
        %v1599 = vsel %vm564, %v1433, 0
        %v1602 = vsel %vm564, %v1434, 0
        %v1605 = vsel %vm564, %v1465, 0
        %v1608 = vsel %vm564, %v1466, 0
        %v1611 = vsel %vm564, %v1497, 0
        %v1614 = vsel %vm564, %v1498, 0
        %v1617 = vsel %vm564, %v1529, 0
        %v1620 = vsel %vm564, %v1530, 0
        %v1623 = vsel %vm564, %v1561, 0
        %v1626 = vsel %vm564, %v1562, 0
        %1628 = vmatprep.subr.mxu0 0.0
        %1629 = vmatpush1.msra.mxu0 0.0
        %1630 = vmatprep.subr.mxu0 0.0
        %1631 = vmatpush1.msra.mxu0 0.0
        %1632 = vmatprep.subr.mxu0 0.0
        %1633 = vmatpush1.msra.mxu0 0.0
        %1634 = vmatprep.subr.mxu0 0.0
        %1635 = vmatpush1.msra.mxu0 0.0
        %1636 = vmatprep.subr.mxu0 0.0
        %1637 = vmatpush1.msra.mxu0 0.0
        %1638 = vmatprep.subr.mxu0 0.0
        %1639 = vmatpush1.msra.mxu0 0.0
        %1640 = vmatprep.subr.mxu0 0.0
        %1641 = vmatpush1.msra.mxu0 0.0
        %1642 = vmatprep.subr.mxu0 0.0
        %1643 = vmatpush1.msra.mxu0 0.0
        %1644 = vmatprep.subr.mxu0 0.0
        %1645 = vmatpush1.msra.mxu0 0.0
        %1646 = vmatprep.subr.mxu0 0.0
        %1647 = vmatpush1.msra.mxu0 0.0
        %1648 = vmatprep.subr.mxu0 0.0
        %1649 = vmatpush1.msra.mxu0 0.0
        %1650 = vmatprep.subr.mxu0 0.0
        %1651 = vmatpush1.msra.mxu0 0.0
        %1652 = vmatprep.subr.mxu0 0.0
        %1653 = vmatpush1.msra.mxu0 0.0
        %1654 = vmatprep.subr.mxu0 0.0
        %1655 = vmatpush1.msra.mxu0 0.0
        %1656 = vmatprep.subr.mxu0 0.0
        %1657 = vmatpush1.msra.mxu0 %v1579
        %1658 = vmatprep.subr.mxu0 0.0
        %1659 = vmatpush1.msra.mxu0 %v1578
        %1660 = vmatprep.subr.mxu0 0.0
        %1661 = vmatpush2.msra.mxu0 0.0
        %1662 = vmatprep.subr.mxu0 0.0
        %1663 = vmatpush2.msra.mxu0 0.0
        %1664 = vmatprep.subr.mxu0 0.0
        %1665 = vmatpush2.msra.mxu0 0.0
        %1666 = vmatprep.subr.mxu0 0.0
        %1667 = vmatpush2.msra.mxu0 0.0
        %1668 = vmatprep.subr.mxu0 0.0
        %1669 = vmatpush2.msra.mxu0 0.0
        %1670 = vmatprep.subr.mxu0 0.0
        %1671 = vmatpush2.msra.mxu0 0.0
        %1672 = vmatprep.subr.mxu0 0.0
        %1673 = vmatpush2.msra.mxu0 0.0
        %1674 = vmatprep.subr.mxu0 0.0
        %1675 = vmatpush2.msra.mxu0 0.0
        %1676 = vmatprep.subr.mxu0 0.0
        %1677 = vmatpush2.msra.mxu0 0.0
        %1678 = vmatprep.subr.mxu0 0.0
        %1679 = vmatpush2.msra.mxu0 0.0
        %1680 = vmatprep.subr.mxu0 0.0
        %1681 = vmatpush2.msra.mxu0 0.0
        %1682 = vmatprep.subr.mxu0 0.0
        %1683 = vmatpush2.msra.mxu0 0.0
        %1684 = vmatprep.subr.mxu0 0.0
        %1685 = vmatpush2.msra.mxu0 0.0
        %1686 = vmatprep.subr.mxu0 0.0
        %1687 = vmatpush2.msra.mxu0 0.0
        %1688 = vmatprep.subr.mxu0 0.0
        %1689 = vmatpush2.msra.mxu0 0.0
        %1690 = vmatprep.subr.mxu0 0.0
        %1691 = vmatpush2.msra.mxu0 0.0
        %1692 = vmatprep.mubr.f32.mxu0 0.0
        %1693 = vmatmul.mubr.f32.gmra.mxu0 %v1581
        %v1694 = vpop.f32.mrf.mxu0
        %v1695 = vadd.f32 0.0, %v1694
        %v1696 = vpop.f32.mrf.mxu0
        %1697 = vmatprep.mubr.f32.mxu0 0.0
        %1698 = vmatmul.mubr.f32.gmra.mxu0 %v1584
        %v1699 = vpop.f32.mrf.mxu0
        %v1700 = vadd.f32 0.0, %v1699
        %v1701 = vpop.f32.mrf.mxu0
        %1702 = vmatprep.mubr.f32.mxu0 0.0
        %1703 = vmatmul.mubr.f32.gmra.mxu0 %v1587
        %v1704 = vpop.f32.mrf.mxu0
        %v1705 = vadd.f32 0.0, %v1704
        %v1706 = vpop.f32.mrf.mxu0
        %1707 = vmatprep.mubr.f32.mxu0 0.0
        %1708 = vmatmul.mubr.f32.gmra.mxu0 %v1590
        %v1709 = vpop.f32.mrf.mxu0
        %v1710 = vadd.f32 0.0, %v1709
        %v1711 = vpop.f32.mrf.mxu0
        %1712 = vmatprep.mubr.f32.mxu0 0.0
        %1713 = vmatmul.mubr.f32.gmra.mxu0 %v1593
        %v1714 = vpop.f32.mrf.mxu0
        %v1715 = vadd.f32 0.0, %v1714
        %v1716 = vpop.f32.mrf.mxu0
        %1717 = vmatprep.mubr.f32.mxu0 0.0
        %1718 = vmatmul.mubr.f32.gmra.mxu0 %v1596
        %v1719 = vpop.f32.mrf.mxu0
        %v1720 = vadd.f32 0.0, %v1719
        %v1721 = vpop.f32.mrf.mxu0
        %1722 = vmatprep.mubr.f32.mxu0 0.0
        %1723 = vmatmul.mubr.f32.gmra.mxu0 %v1599
        %v1724 = vpop.f32.mrf.mxu0
        %v1725 = vadd.f32 0.0, %v1724
        %v1726 = vpop.f32.mrf.mxu0
        %1727 = vmatprep.mubr.f32.mxu0 0.0
        %1728 = vmatmul.mubr.f32.gmra.mxu0 %v1602
        %v1729 = vpop.f32.mrf.mxu0
        %v1730 = vadd.f32 0.0, %v1729
        %v1731 = vpop.f32.mrf.mxu0
        %1732 = vmatprep.mubr.f32.mxu0 0.0
        %1733 = vmatmul.mubr.f32.gmra.mxu0 %v1605
        %v1734 = vpop.f32.mrf.mxu0
        %v1735 = vadd.f32 0.0, %v1734
        %v1736 = vpop.f32.mrf.mxu0
        %1737 = vmatprep.mubr.f32.mxu0 0.0
        %1738 = vmatmul.mubr.f32.gmra.mxu0 %v1608
        %v1739 = vpop.f32.mrf.mxu0
        %v1740 = vadd.f32 0.0, %v1739
        %v1741 = vpop.f32.mrf.mxu0
        %1742 = vmatprep.mubr.f32.mxu0 0.0
        %1743 = vmatmul.mubr.f32.gmra.mxu0 %v1611
        %v1744 = vpop.f32.mrf.mxu0
        %v1745 = vadd.f32 0.0, %v1744
        %v1746 = vpop.f32.mrf.mxu0
        %1747 = vmatprep.mubr.f32.mxu0 0.0
        %1748 = vmatmul.mubr.f32.gmra.mxu0 %v1614
        %v1749 = vpop.f32.mrf.mxu0
        %v1750 = vadd.f32 0.0, %v1749
        %v1751 = vpop.f32.mrf.mxu0
        %1752 = vmatprep.mubr.f32.mxu0 0.0
        %1753 = vmatmul.mubr.f32.gmra.mxu0 %v1617
        %v1754 = vpop.f32.mrf.mxu0
        %v1755 = vadd.f32 0.0, %v1754
        %v1756 = vpop.f32.mrf.mxu0
        %1757 = vmatprep.mubr.f32.mxu0 0.0
        %1758 = vmatmul.mubr.f32.gmra.mxu0 %v1620
        %v1759 = vpop.f32.mrf.mxu0
        %v1760 = vadd.f32 0.0, %v1759
        %v1761 = vpop.f32.mrf.mxu0
        %1762 = vmatprep.mubr.f32.mxu0 0.0
        %1763 = vmatmul.mubr.f32.gmra.mxu0 %v1623
        %v1764 = vpop.f32.mrf.mxu0
        %v1765 = vadd.f32 0.0, %v1764
        %v1766 = vpop.f32.mrf.mxu0
        %1767 = vmatprep.mubr.f32.mxu0 0.0
        %1768 = vmatmul.mubr.f32.gmra.mxu0 %v1626
        %v1769 = vpop.f32.mrf.mxu0
        %v1770 = vadd.f32 0.0, %v1769
        %v1771 = vpop.f32.mrf.mxu0
        %1772 = vdwg.mxu0
        %v1773 = vmul.f32 %v1695, %v1715
        %v1774 = vmul.f32 %v1700, %v1720
        %v1775 = vmul.f32 %v1705, %v1725
        %v1776 = vmul.f32 %v1710, %v1730
        %v1777 = vsub.f32 %v1735, %v1773
        %v1778 = vsub.f32 %v1740, %v1774
        %v1779 = vsub.f32 %v1745, %v1775
        %v1780 = vsub.f32 %v1750, %v1776
        %v1781 = vmul.f32 %v1715, %v1715
        %v1782 = vmul.f32 %v1720, %v1720
        %v1783 = vmul.f32 %v1725, %v1725
        %v1784 = vmul.f32 %v1730, %v1730
        %v1785 = vsub.f32 %v1755, %v1781
        %v1786 = vsub.f32 %v1760, %v1782
        %v1787 = vsub.f32 %v1765, %v1783
        %v1788 = vsub.f32 %v1770, %v1784
        %s1789 = sld [smem:[#allocation15 + $0x1]]
        %v1790 = vstv %s1789
        %v1791 = vadd.f32 %v1785, %v1790
        %v1792 = vadd.f32 %v1786, %v1790
        %v1793 = vadd.f32 %v1787, %v1790
        %v1794 = vadd.f32 %v1788, %v1790
        %v1795 = vrcp.pop %v1791
        %v1796 = vrcp.pop %v1792
        %v1797 = vrcp.pop %v1793
        %v1798 = vrcp.pop %v1794
        %v1799 = vmul.f32 %v1777, %v1795
        %v1800 = vmul.f32 %v1778, %v1796
        %v1801 = vmul.f32 %v1779, %v1797
        %v1802 = vmul.f32 %v1780, %v1798
        %v1803 = vmul.f32 %v1799, %v1715
        %v1804 = vmul.f32 %v1800, %v1720
        %v1805 = vmul.f32 %v1801, %v1725
        %v1806 = vmul.f32 %v1802, %v1730
        %v1807 = vsub.f32 %v1695, %v1803
        %v1808 = vsub.f32 %v1700, %v1804
        %v1809 = vsub.f32 %v1705, %v1805
        %v1810 = vsub.f32 %v1710, %v1806
        %s1811 = sld [smem:[#allocation16 + $0x1]]
        %v1812 = vstv %s1811
        %v1813 = vmul.f32 %v1812, %v1799
        %v1814 = vmul.f32 %v1812, %v1800
        %v1815 = vmul.f32 %v1812, %v1801
        %v1816 = vmul.f32 %v1812, %v1802
        %v1817 = vadd.f32 %v1249, %v1813
        %v1818 = vadd.f32 %v1250, %v1814
        %v1819 = vadd.f32 %v1251, %v1815
        %v1820 = vadd.f32 %v1252, %v1816
        %v1821 = vmul.f32 %v1812, %v1807
        %v1822 = vmul.f32 %v1812, %v1808
        %v1823 = vmul.f32 %v1812, %v1809
        %v1824 = vmul.f32 %v1812, %v1810
        %v1825 = vadd.f32 %v1253, %v1821
        %v1826 = vadd.f32 %v1254, %v1822
        %v1827 = vadd.f32 %v1255, %v1823
        %v1828 = vadd.f32 %v1256, %v1824
        %1829 = vrot.lane.b32.xlu0 %v680, 96
        %v1830 = vpop.permute.xlu0 %1829
        %1831 = vrot.lane.b32.xlu0 %v685, 96
        %v1832 = vpop.permute.xlu0 %1831
        %1833 = vrot.lane.b32.xlu0 %v690, 96
        %v1834 = vpop.permute.xlu0 %1833
        %1835 = vrot.lane.b32.xlu0 %v695, 96
        %v1836 = vpop.permute.xlu0 %1835
        %1837 = vrot.lane.b32.xlu0 %v700, 96
        %v1838 = vpop.permute.xlu0 %1837
        %1839 = vrot.lane.b32.xlu0 %v705, 96
        %v1840 = vpop.permute.xlu0 %1839
        %1841 = vrot.lane.b32.xlu0 %v710, 96
        %v1842 = vpop.permute.xlu0 %1841
        %1843 = vrot.lane.b32.xlu0 %v715, 96
        %v1844 = vpop.permute.xlu0 %1843
        %1845 = vrot.lane.b32.xlu0 %v720, 96
        %v1846 = vpop.permute.xlu0 %1845
        %1847 = vrot.lane.b32.xlu0 %v725, 96
        %v1848 = vpop.permute.xlu0 %1847
        %1849 = vrot.lane.b32.xlu0 %v730, 96
        %v1850 = vpop.permute.xlu0 %1849
        %1851 = vrot.lane.b32.xlu0 %v735, 96
        %v1852 = vpop.permute.xlu0 %1851
        %1853 = vrot.lane.b32.xlu0 %v740, 96
        %v1854 = vpop.permute.xlu0 %1853
        %1855 = vrot.lane.b32.xlu0 %v745, 96
        %v1856 = vpop.permute.xlu0 %1855
        %1857 = vrot.lane.b32.xlu0 %v750, 96
        %v1858 = vpop.permute.xlu0 %1857
        %1859 = vrot.lane.b32.xlu0 %v755, 96
        %v1860 = vpop.permute.xlu0 %1859
        %1877 = vxpose.xlu0.b32.start [1/16] %v1830, 128
        %1878 = vxpose.xlu0.b32.cont [2/16] %v1832, 128
        %1879 = vxpose.xlu0.b32.cont [3/16] 0.0, 128
        %1880 = vxpose.xlu0.b32.cont [4/16] 0.0, 128
        %1881 = vxpose.xlu0.b32.cont [5/16] 0.0, 128
        %1882 = vxpose.xlu0.b32.cont [6/16] 0.0, 128
        %1883 = vxpose.xlu0.b32.cont [7/16] 0.0, 128
        %1884 = vxpose.xlu0.b32.cont [8/16] 0.0, 128
        %1885 = vxpose.xlu0.b32.cont [9/16] 0.0, 128
        %1886 = vxpose.xlu0.b32.cont [10/16] 0.0, 128
        %1887 = vxpose.xlu0.b32.cont [11/16] 0.0, 128
        %1888 = vxpose.xlu0.b32.cont [12/16] 0.0, 128
        %1889 = vxpose.xlu0.b32.cont [13/16] 0.0, 128
        %1890 = vxpose.xlu0.b32.cont [14/16] 0.0, 128
        %1891 = vxpose.xlu0.b32.cont [15/16] 0.0, 128
        %1892 = vxpose.xlu0.b32.end [16/16] 0.0, 128
        %v1893 = vpop.trf.xlu0
        %v1894 = vpop.trf.xlu0
        %v1895 = vpop.trf.xlu0
        %v1896 = vpop.trf.xlu0
        %v1897 = vpop.trf.xlu0
        %v1898 = vpop.trf.xlu0
        %v1899 = vpop.trf.xlu0
        %v1900 = vpop.trf.xlu0
        %v1901 = vpop.trf.xlu0
        %v1902 = vpop.trf.xlu0
        %v1903 = vpop.trf.xlu0
        %v1904 = vpop.trf.xlu0
        %v1905 = vpop.trf.xlu0
        %v1906 = vpop.trf.xlu0
        %v1907 = vpop.trf.xlu0
        %v1908 = vpop.trf.xlu0
        %1909 = vxpose.xlu0.b32.start [1/16] %v1834, 128
        %1910 = vxpose.xlu0.b32.cont [2/16] %v1836, 128
        %1911 = vxpose.xlu0.b32.cont [3/16] 0.0, 128
        %1912 = vxpose.xlu0.b32.cont [4/16] 0.0, 128
        %1913 = vxpose.xlu0.b32.cont [5/16] 0.0, 128
        %1914 = vxpose.xlu0.b32.cont [6/16] 0.0, 128
        %1915 = vxpose.xlu0.b32.cont [7/16] 0.0, 128
        %1916 = vxpose.xlu0.b32.cont [8/16] 0.0, 128
        %1917 = vxpose.xlu0.b32.cont [9/16] 0.0, 128
        %1918 = vxpose.xlu0.b32.cont [10/16] 0.0, 128
        %1919 = vxpose.xlu0.b32.cont [11/16] 0.0, 128
        %1920 = vxpose.xlu0.b32.cont [12/16] 0.0, 128
        %1921 = vxpose.xlu0.b32.cont [13/16] 0.0, 128
        %1922 = vxpose.xlu0.b32.cont [14/16] 0.0, 128
        %1923 = vxpose.xlu0.b32.cont [15/16] 0.0, 128
        %1924 = vxpose.xlu0.b32.end [16/16] 0.0, 128
        %v1925 = vpop.trf.xlu0
        %v1926 = vpop.trf.xlu0
        %v1927 = vpop.trf.xlu0
        %v1928 = vpop.trf.xlu0
        %v1929 = vpop.trf.xlu0
        %v1930 = vpop.trf.xlu0
        %v1931 = vpop.trf.xlu0
        %v1932 = vpop.trf.xlu0
        %v1933 = vpop.trf.xlu0
        %v1934 = vpop.trf.xlu0
        %v1935 = vpop.trf.xlu0
        %v1936 = vpop.trf.xlu0
        %v1937 = vpop.trf.xlu0
        %v1938 = vpop.trf.xlu0
        %v1939 = vpop.trf.xlu0
        %v1940 = vpop.trf.xlu0
        %1941 = vxpose.xlu0.b32.start [1/16] %v1838, 128
        %1942 = vxpose.xlu0.b32.cont [2/16] %v1840, 128
        %1943 = vxpose.xlu0.b32.cont [3/16] 0.0, 128
        %1944 = vxpose.xlu0.b32.cont [4/16] 0.0, 128
        %1945 = vxpose.xlu0.b32.cont [5/16] 0.0, 128
        %1946 = vxpose.xlu0.b32.cont [6/16] 0.0, 128
        %1947 = vxpose.xlu0.b32.cont [7/16] 0.0, 128
        %1948 = vxpose.xlu0.b32.cont [8/16] 0.0, 128
        %1949 = vxpose.xlu0.b32.cont [9/16] 0.0, 128
        %1950 = vxpose.xlu0.b32.cont [10/16] 0.0, 128
        %1951 = vxpose.xlu0.b32.cont [11/16] 0.0, 128
        %1952 = vxpose.xlu0.b32.cont [12/16] 0.0, 128
        %1953 = vxpose.xlu0.b32.cont [13/16] 0.0, 128
        %1954 = vxpose.xlu0.b32.cont [14/16] 0.0, 128
        %1955 = vxpose.xlu0.b32.cont [15/16] 0.0, 128
        %1956 = vxpose.xlu0.b32.end [16/16] 0.0, 128
        %v1957 = vpop.trf.xlu0
        %v1958 = vpop.trf.xlu0
        %v1959 = vpop.trf.xlu0
        %v1960 = vpop.trf.xlu0
        %v1961 = vpop.trf.xlu0
        %v1962 = vpop.trf.xlu0
        %v1963 = vpop.trf.xlu0
        %v1964 = vpop.trf.xlu0
        %v1965 = vpop.trf.xlu0
        %v1966 = vpop.trf.xlu0
        %v1967 = vpop.trf.xlu0
        %v1968 = vpop.trf.xlu0
        %v1969 = vpop.trf.xlu0
        %v1970 = vpop.trf.xlu0
        %v1971 = vpop.trf.xlu0
        %v1972 = vpop.trf.xlu0
        %1973 = vxpose.xlu0.b32.start [1/16] %v1842, 128
        %1974 = vxpose.xlu0.b32.cont [2/16] %v1844, 128
        %1975 = vxpose.xlu0.b32.cont [3/16] 0.0, 128
        %1976 = vxpose.xlu0.b32.cont [4/16] 0.0, 128
        %1977 = vxpose.xlu0.b32.cont [5/16] 0.0, 128
        %1978 = vxpose.xlu0.b32.cont [6/16] 0.0, 128
        %1979 = vxpose.xlu0.b32.cont [7/16] 0.0, 128
        %1980 = vxpose.xlu0.b32.cont [8/16] 0.0, 128
        %1981 = vxpose.xlu0.b32.cont [9/16] 0.0, 128
        %1982 = vxpose.xlu0.b32.cont [10/16] 0.0, 128
        %1983 = vxpose.xlu0.b32.cont [11/16] 0.0, 128
        %1984 = vxpose.xlu0.b32.cont [12/16] 0.0, 128
        %1985 = vxpose.xlu0.b32.cont [13/16] 0.0, 128
        %1986 = vxpose.xlu0.b32.cont [14/16] 0.0, 128
        %1987 = vxpose.xlu0.b32.cont [15/16] 0.0, 128
        %1988 = vxpose.xlu0.b32.end [16/16] 0.0, 128
        %v1989 = vpop.trf.xlu0
        %v1990 = vpop.trf.xlu0
        %v1991 = vpop.trf.xlu0
        %v1992 = vpop.trf.xlu0
        %v1993 = vpop.trf.xlu0
        %v1994 = vpop.trf.xlu0
        %v1995 = vpop.trf.xlu0
        %v1996 = vpop.trf.xlu0
        %v1997 = vpop.trf.xlu0
        %v1998 = vpop.trf.xlu0
        %v1999 = vpop.trf.xlu0
        %v2000 = vpop.trf.xlu0
        %v2001 = vpop.trf.xlu0
        %v2002 = vpop.trf.xlu0
        %v2003 = vpop.trf.xlu0
        %v2004 = vpop.trf.xlu0
        %2005 = vxpose.xlu0.b32.start [1/16] %v1846, 128
        %2006 = vxpose.xlu0.b32.cont [2/16] %v1848, 128
        %2007 = vxpose.xlu0.b32.cont [3/16] 0.0, 128
        %2008 = vxpose.xlu0.b32.cont [4/16] 0.0, 128
        %2009 = vxpose.xlu0.b32.cont [5/16] 0.0, 128
        %2010 = vxpose.xlu0.b32.cont [6/16] 0.0, 128
        %2011 = vxpose.xlu0.b32.cont [7/16] 0.0, 128
        %2012 = vxpose.xlu0.b32.cont [8/16] 0.0, 128
        %2013 = vxpose.xlu0.b32.cont [9/16] 0.0, 128
        %2014 = vxpose.xlu0.b32.cont [10/16] 0.0, 128
        %2015 = vxpose.xlu0.b32.cont [11/16] 0.0, 128
        %2016 = vxpose.xlu0.b32.cont [12/16] 0.0, 128
        %2017 = vxpose.xlu0.b32.cont [13/16] 0.0, 128
        %2018 = vxpose.xlu0.b32.cont [14/16] 0.0, 128
        %2019 = vxpose.xlu0.b32.cont [15/16] 0.0, 128
        %2020 = vxpose.xlu0.b32.end [16/16] 0.0, 128
        %v2021 = vpop.trf.xlu0
        %v2022 = vpop.trf.xlu0
        %v2023 = vpop.trf.xlu0
        %v2024 = vpop.trf.xlu0
        %v2025 = vpop.trf.xlu0
        %v2026 = vpop.trf.xlu0
        %v2027 = vpop.trf.xlu0
        %v2028 = vpop.trf.xlu0
        %v2029 = vpop.trf.xlu0
        %v2030 = vpop.trf.xlu0
        %v2031 = vpop.trf.xlu0
        %v2032 = vpop.trf.xlu0
        %v2033 = vpop.trf.xlu0
        %v2034 = vpop.trf.xlu0
        %v2035 = vpop.trf.xlu0
        %v2036 = vpop.trf.xlu0
        %2037 = vxpose.xlu0.b32.start [1/16] %v1850, 128
        %2038 = vxpose.xlu0.b32.cont [2/16] %v1852, 128
        %2039 = vxpose.xlu0.b32.cont [3/16] 0.0, 128
        %2040 = vxpose.xlu0.b32.cont [4/16] 0.0, 128
        %2041 = vxpose.xlu0.b32.cont [5/16] 0.0, 128
        %2042 = vxpose.xlu0.b32.cont [6/16] 0.0, 128
        %2043 = vxpose.xlu0.b32.cont [7/16] 0.0, 128
        %2044 = vxpose.xlu0.b32.cont [8/16] 0.0, 128
        %2045 = vxpose.xlu0.b32.cont [9/16] 0.0, 128
        %2046 = vxpose.xlu0.b32.cont [10/16] 0.0, 128
        %2047 = vxpose.xlu0.b32.cont [11/16] 0.0, 128
        %2048 = vxpose.xlu0.b32.cont [12/16] 0.0, 128
        %2049 = vxpose.xlu0.b32.cont [13/16] 0.0, 128
        %2050 = vxpose.xlu0.b32.cont [14/16] 0.0, 128
        %2051 = vxpose.xlu0.b32.cont [15/16] 0.0, 128
        %2052 = vxpose.xlu0.b32.end [16/16] 0.0, 128
        %v2053 = vpop.trf.xlu0
        %v2054 = vpop.trf.xlu0
        %v2055 = vpop.trf.xlu0
        %v2056 = vpop.trf.xlu0
        %v2057 = vpop.trf.xlu0
        %v2058 = vpop.trf.xlu0
        %v2059 = vpop.trf.xlu0
        %v2060 = vpop.trf.xlu0
        %v2061 = vpop.trf.xlu0
        %v2062 = vpop.trf.xlu0
        %v2063 = vpop.trf.xlu0
        %v2064 = vpop.trf.xlu0
        %v2065 = vpop.trf.xlu0
        %v2066 = vpop.trf.xlu0
        %v2067 = vpop.trf.xlu0
        %v2068 = vpop.trf.xlu0
        %2069 = vxpose.xlu0.b32.start [1/16] %v1854, 128
        %2070 = vxpose.xlu0.b32.cont [2/16] %v1856, 128
        %2071 = vxpose.xlu0.b32.cont [3/16] 0.0, 128
        %2072 = vxpose.xlu0.b32.cont [4/16] 0.0, 128
        %2073 = vxpose.xlu0.b32.cont [5/16] 0.0, 128
        %2074 = vxpose.xlu0.b32.cont [6/16] 0.0, 128
        %2075 = vxpose.xlu0.b32.cont [7/16] 0.0, 128
        %2076 = vxpose.xlu0.b32.cont [8/16] 0.0, 128
        %2077 = vxpose.xlu0.b32.cont [9/16] 0.0, 128
        %2078 = vxpose.xlu0.b32.cont [10/16] 0.0, 128
        %2079 = vxpose.xlu0.b32.cont [11/16] 0.0, 128
        %2080 = vxpose.xlu0.b32.cont [12/16] 0.0, 128
        %2081 = vxpose.xlu0.b32.cont [13/16] 0.0, 128
        %2082 = vxpose.xlu0.b32.cont [14/16] 0.0, 128
        %2083 = vxpose.xlu0.b32.cont [15/16] 0.0, 128
        %2084 = vxpose.xlu0.b32.end [16/16] 0.0, 128
        %v2085 = vpop.trf.xlu0
        %v2086 = vpop.trf.xlu0
        %v2087 = vpop.trf.xlu0
        %v2088 = vpop.trf.xlu0
        %v2089 = vpop.trf.xlu0
        %v2090 = vpop.trf.xlu0
        %v2091 = vpop.trf.xlu0
        %v2092 = vpop.trf.xlu0
        %v2093 = vpop.trf.xlu0
        %v2094 = vpop.trf.xlu0
        %v2095 = vpop.trf.xlu0
        %v2096 = vpop.trf.xlu0
        %v2097 = vpop.trf.xlu0
        %v2098 = vpop.trf.xlu0
        %v2099 = vpop.trf.xlu0
        %v2100 = vpop.trf.xlu0
        %2101 = vxpose.xlu0.b32.start [1/16] %v1858, 128
        %2102 = vxpose.xlu0.b32.cont [2/16] %v1860, 128
        %2103 = vxpose.xlu0.b32.cont [3/16] 0.0, 128
        %2104 = vxpose.xlu0.b32.cont [4/16] 0.0, 128
        %2105 = vxpose.xlu0.b32.cont [5/16] 0.0, 128
        %2106 = vxpose.xlu0.b32.cont [6/16] 0.0, 128
        %2107 = vxpose.xlu0.b32.cont [7/16] 0.0, 128
        %2108 = vxpose.xlu0.b32.cont [8/16] 0.0, 128
        %2109 = vxpose.xlu0.b32.cont [9/16] 0.0, 128
        %2110 = vxpose.xlu0.b32.cont [10/16] 0.0, 128
        %2111 = vxpose.xlu0.b32.cont [11/16] 0.0, 128
        %2112 = vxpose.xlu0.b32.cont [12/16] 0.0, 128
        %2113 = vxpose.xlu0.b32.cont [13/16] 0.0, 128
        %2114 = vxpose.xlu0.b32.cont [14/16] 0.0, 128
        %2115 = vxpose.xlu0.b32.cont [15/16] 0.0, 128
        %2116 = vxpose.xlu0.b32.end [16/16] 0.0, 128
        %v2117 = vpop.trf.xlu0
        %v2118 = vpop.trf.xlu0
        %v2119 = vpop.trf.xlu0
        %v2120 = vpop.trf.xlu0
        %v2121 = vpop.trf.xlu0
        %v2122 = vpop.trf.xlu0
        %v2123 = vpop.trf.xlu0
        %v2124 = vpop.trf.xlu0
        %v2125 = vpop.trf.xlu0
        %v2126 = vpop.trf.xlu0
        %v2127 = vpop.trf.xlu0
        %v2128 = vpop.trf.xlu0
        %v2129 = vpop.trf.xlu0
        %v2130 = vpop.trf.xlu0
        %v2131 = vpop.trf.xlu0
        %v2132 = vpop.trf.xlu0
        %s2133 = scalar_lea.vmem [#allocation9], 32
        %v2134 = vld [vmem:[%s2133] sm:$0xff]
        %v2135 = vld [vmem:[%s2133 + $0x8] sm:$0xff]
        %v2137 = vsel %vm564, %v1893, 0
        %v2140 = vsel %vm564, %v1894, 0
        %v2143 = vsel %vm564, %v1925, 0
        %v2146 = vsel %vm564, %v1926, 0
        %v2149 = vsel %vm564, %v1957, 0
        %v2152 = vsel %vm564, %v1958, 0
        %v2155 = vsel %vm564, %v1989, 0
        %v2158 = vsel %vm564, %v1990, 0
        %v2161 = vsel %vm564, %v2021, 0
        %v2164 = vsel %vm564, %v2022, 0
        %v2167 = vsel %vm564, %v2053, 0
        %v2170 = vsel %vm564, %v2054, 0
        %v2173 = vsel %vm564, %v2085, 0
        %v2176 = vsel %vm564, %v2086, 0
        %v2179 = vsel %vm564, %v2117, 0
        %v2182 = vsel %vm564, %v2118, 0
        %2184 = vmatprep.subr.mxu0 0.0
        %2185 = vmatpush1.msra.mxu0 0.0
        %2186 = vmatprep.subr.mxu0 0.0
        %2187 = vmatpush1.msra.mxu0 0.0
        %2188 = vmatprep.subr.mxu0 0.0
        %2189 = vmatpush1.msra.mxu0 0.0
        %2190 = vmatprep.subr.mxu0 0.0
        %2191 = vmatpush1.msra.mxu0 0.0
        %2192 = vmatprep.subr.mxu0 0.0
        %2193 = vmatpush1.msra.mxu0 0.0
        %2194 = vmatprep.subr.mxu0 0.0
        %2195 = vmatpush1.msra.mxu0 0.0
        %2196 = vmatprep.subr.mxu0 0.0
        %2197 = vmatpush1.msra.mxu0 0.0
        %2198 = vmatprep.subr.mxu0 0.0
        %2199 = vmatpush1.msra.mxu0 0.0
        %2200 = vmatprep.subr.mxu0 0.0
        %2201 = vmatpush1.msra.mxu0 0.0
        %2202 = vmatprep.subr.mxu0 0.0
        %2203 = vmatpush1.msra.mxu0 0.0
        %2204 = vmatprep.subr.mxu0 0.0
        %2205 = vmatpush1.msra.mxu0 0.0
        %2206 = vmatprep.subr.mxu0 0.0
        %2207 = vmatpush1.msra.mxu0 0.0
        %2208 = vmatprep.subr.mxu0 0.0
        %2209 = vmatpush1.msra.mxu0 0.0
        %2210 = vmatprep.subr.mxu0 0.0
        %2211 = vmatpush1.msra.mxu0 0.0
        %2212 = vmatprep.subr.mxu0 0.0
        %2213 = vmatpush1.msra.mxu0 %v2135
        %2214 = vmatprep.subr.mxu0 0.0
        %2215 = vmatpush1.msra.mxu0 %v2134
        %2216 = vmatprep.subr.mxu0 0.0
        %2217 = vmatpush2.msra.mxu0 0.0
        %2218 = vmatprep.subr.mxu0 0.0
        %2219 = vmatpush2.msra.mxu0 0.0
        %2220 = vmatprep.subr.mxu0 0.0
        %2221 = vmatpush2.msra.mxu0 0.0
        %2222 = vmatprep.subr.mxu0 0.0
        %2223 = vmatpush2.msra.mxu0 0.0
        %2224 = vmatprep.subr.mxu0 0.0
        %2225 = vmatpush2.msra.mxu0 0.0
        %2226 = vmatprep.subr.mxu0 0.0
        %2227 = vmatpush2.msra.mxu0 0.0
        %2228 = vmatprep.subr.mxu0 0.0
        %2229 = vmatpush2.msra.mxu0 0.0
        %2230 = vmatprep.subr.mxu0 0.0
        %2231 = vmatpush2.msra.mxu0 0.0
        %2232 = vmatprep.subr.mxu0 0.0
        %2233 = vmatpush2.msra.mxu0 0.0
        %2234 = vmatprep.subr.mxu0 0.0
        %2235 = vmatpush2.msra.mxu0 0.0
        %2236 = vmatprep.subr.mxu0 0.0
        %2237 = vmatpush2.msra.mxu0 0.0
        %2238 = vmatprep.subr.mxu0 0.0
        %2239 = vmatpush2.msra.mxu0 0.0
        %2240 = vmatprep.subr.mxu0 0.0
        %2241 = vmatpush2.msra.mxu0 0.0
        %2242 = vmatprep.subr.mxu0 0.0
        %2243 = vmatpush2.msra.mxu0 0.0
        %2244 = vmatprep.subr.mxu0 0.0
        %2245 = vmatpush2.msra.mxu0 0.0
        %2246 = vmatprep.subr.mxu0 0.0
        %2247 = vmatpush2.msra.mxu0 0.0
        %2248 = vmatprep.mubr.f32.mxu0 0.0
        %2249 = vmatmul.mubr.f32.gmra.mxu0 %v2137
        %v2250 = vpop.f32.mrf.mxu0
        %v2251 = vadd.f32 0.0, %v2250
        %v2252 = vpop.f32.mrf.mxu0
        %2253 = vmatprep.mubr.f32.mxu0 0.0
        %2254 = vmatmul.mubr.f32.gmra.mxu0 %v2140
        %v2255 = vpop.f32.mrf.mxu0
        %v2256 = vadd.f32 0.0, %v2255
        %v2257 = vpop.f32.mrf.mxu0
        %2258 = vmatprep.mubr.f32.mxu0 0.0
        %2259 = vmatmul.mubr.f32.gmra.mxu0 %v2143
        %v2260 = vpop.f32.mrf.mxu0
        %v2261 = vadd.f32 0.0, %v2260
        %v2262 = vpop.f32.mrf.mxu0
        %2263 = vmatprep.mubr.f32.mxu0 0.0
        %2264 = vmatmul.mubr.f32.gmra.mxu0 %v2146
        %v2265 = vpop.f32.mrf.mxu0
        %v2266 = vadd.f32 0.0, %v2265
        %v2267 = vpop.f32.mrf.mxu0
        %2268 = vmatprep.mubr.f32.mxu0 0.0
        %2269 = vmatmul.mubr.f32.gmra.mxu0 %v2149
        %v2270 = vpop.f32.mrf.mxu0
        %v2271 = vadd.f32 0.0, %v2270
        %v2272 = vpop.f32.mrf.mxu0
        %2273 = vmatprep.mubr.f32.mxu0 0.0
        %2274 = vmatmul.mubr.f32.gmra.mxu0 %v2152
        %v2275 = vpop.f32.mrf.mxu0
        %v2276 = vadd.f32 0.0, %v2275
        %v2277 = vpop.f32.mrf.mxu0
        %2278 = vmatprep.mubr.f32.mxu0 0.0
        %2279 = vmatmul.mubr.f32.gmra.mxu0 %v2155
        %v2280 = vpop.f32.mrf.mxu0
        %v2281 = vadd.f32 0.0, %v2280
        %v2282 = vpop.f32.mrf.mxu0
        %2283 = vmatprep.mubr.f32.mxu0 0.0
        %2284 = vmatmul.mubr.f32.gmra.mxu0 %v2158
        %v2285 = vpop.f32.mrf.mxu0
        %v2286 = vadd.f32 0.0, %v2285
        %v2287 = vpop.f32.mrf.mxu0
        %2288 = vmatprep.mubr.f32.mxu0 0.0
        %2289 = vmatmul.mubr.f32.gmra.mxu0 %v2161
        %v2290 = vpop.f32.mrf.mxu0
        %v2291 = vadd.f32 0.0, %v2290
        %v2292 = vpop.f32.mrf.mxu0
        %2293 = vmatprep.mubr.f32.mxu0 0.0
        %2294 = vmatmul.mubr.f32.gmra.mxu0 %v2164
        %v2295 = vpop.f32.mrf.mxu0
        %v2296 = vadd.f32 0.0, %v2295
        %v2297 = vpop.f32.mrf.mxu0
        %2298 = vmatprep.mubr.f32.mxu0 0.0
        %2299 = vmatmul.mubr.f32.gmra.mxu0 %v2167
        %v2300 = vpop.f32.mrf.mxu0
        %v2301 = vadd.f32 0.0, %v2300
        %v2302 = vpop.f32.mrf.mxu0
        %2303 = vmatprep.mubr.f32.mxu0 0.0
        %2304 = vmatmul.mubr.f32.gmra.mxu0 %v2170
        %v2305 = vpop.f32.mrf.mxu0
        %v2306 = vadd.f32 0.0, %v2305
        %v2307 = vpop.f32.mrf.mxu0
        %2308 = vmatprep.mubr.f32.mxu0 0.0
        %2309 = vmatmul.mubr.f32.gmra.mxu0 %v2173
        %v2310 = vpop.f32.mrf.mxu0
        %v2311 = vadd.f32 0.0, %v2310
        %v2312 = vpop.f32.mrf.mxu0
        %2313 = vmatprep.mubr.f32.mxu0 0.0
        %2314 = vmatmul.mubr.f32.gmra.mxu0 %v2176
        %v2315 = vpop.f32.mrf.mxu0
        %v2316 = vadd.f32 0.0, %v2315
        %v2317 = vpop.f32.mrf.mxu0
        %2318 = vmatprep.mubr.f32.mxu0 0.0
        %2319 = vmatmul.mubr.f32.gmra.mxu0 %v2179
        %v2320 = vpop.f32.mrf.mxu0
        %v2321 = vadd.f32 0.0, %v2320
        %v2322 = vpop.f32.mrf.mxu0
        %2323 = vmatprep.mubr.f32.mxu0 0.0
        %2324 = vmatmul.mubr.f32.gmra.mxu0 %v2182
        %v2325 = vpop.f32.mrf.mxu0
        %v2326 = vadd.f32 0.0, %v2325
        %v2327 = vpop.f32.mrf.mxu0
        %2328 = vdwg.mxu0
        %v2329 = vmul.f32 %v2251, %v2271
        %v2330 = vmul.f32 %v2256, %v2276
        %v2331 = vmul.f32 %v2261, %v2281
        %v2332 = vmul.f32 %v2266, %v2286
        %v2333 = vsub.f32 %v2291, %v2329
        %v2334 = vsub.f32 %v2296, %v2330
        %v2335 = vsub.f32 %v2301, %v2331
        %v2336 = vsub.f32 %v2306, %v2332
        %v2337 = vmul.f32 %v2271, %v2271
        %v2338 = vmul.f32 %v2276, %v2276
        %v2339 = vmul.f32 %v2281, %v2281
        %v2340 = vmul.f32 %v2286, %v2286
        %v2341 = vsub.f32 %v2311, %v2337
        %v2342 = vsub.f32 %v2316, %v2338
        %v2343 = vsub.f32 %v2321, %v2339
        %v2344 = vsub.f32 %v2326, %v2340
        %s2345 = sld [smem:[#allocation15 + $0x2]]
        %v2346 = vstv %s2345
        %v2347 = vadd.f32 %v2341, %v2346
        %v2348 = vadd.f32 %v2342, %v2346
        %v2349 = vadd.f32 %v2343, %v2346
        %v2350 = vadd.f32 %v2344, %v2346
        %v2351 = vrcp.pop %v2347
        %v2352 = vrcp.pop %v2348
        %v2353 = vrcp.pop %v2349
        %v2354 = vrcp.pop %v2350
        %v2355 = vmul.f32 %v2333, %v2351
        %v2356 = vmul.f32 %v2334, %v2352
        %v2357 = vmul.f32 %v2335, %v2353
        %v2358 = vmul.f32 %v2336, %v2354
        %v2359 = vmul.f32 %v2355, %v2271
        %v2360 = vmul.f32 %v2356, %v2276
        %v2361 = vmul.f32 %v2357, %v2281
        %v2362 = vmul.f32 %v2358, %v2286
        %v2363 = vsub.f32 %v2251, %v2359
        %v2364 = vsub.f32 %v2256, %v2360
        %v2365 = vsub.f32 %v2261, %v2361
        %v2366 = vsub.f32 %v2266, %v2362
        %s2367 = sld [smem:[#allocation16 + $0x2]]
        %v2368 = vstv %s2367
        %v2369 = vmul.f32 %v2368, %v2355
        %v2370 = vmul.f32 %v2368, %v2356
        %v2371 = vmul.f32 %v2368, %v2357
        %v2372 = vmul.f32 %v2368, %v2358
        %v2373 = vadd.f32 %v1817, %v2369
        %v2374 = vadd.f32 %v1818, %v2370
        %v2375 = vadd.f32 %v1819, %v2371
        %v2376 = vadd.f32 %v1820, %v2372
        %v2377 = vmul.f32 %v2368, %v2363
        %v2378 = vmul.f32 %v2368, %v2364
        %v2379 = vmul.f32 %v2368, %v2365
        %v2380 = vmul.f32 %v2368, %v2366
        %v2381 = vadd.f32 %v1825, %v2377
        %v2382 = vadd.f32 %v1826, %v2378
        %v2383 = vadd.f32 %v1827, %v2379
        %v2384 = vadd.f32 %v1828, %v2380
        %v2385 = vld [vmem:[#allocation12] sm:$0xff]
        %v2386 = vld [vmem:[#allocation12 + $0x8] sm:$0xff]
        %v2387 = vld [vmem:[#allocation14] sm:$0xff]
        %v2388 = vld [vmem:[#allocation14 + $0x8] sm:$0xff]
        %v2390 = vsel %vm564, %v2373, 0
        %v2393 = vsel %vm564, %v2374, 0
        %v2396 = vsel %vm564, %v2375, 0
        %v2399 = vsel %vm564, %v2376, 0
        %v2402 = vsel %vm564, %v2381, 0
        %v2405 = vsel %vm564, %v2382, 0
        %v2408 = vsel %vm564, %v2383, 0
        %v2411 = vsel %vm564, %v2384, 0
        %2413 = vmatprep.subr.mxu0 0.0
        %2414 = vmatpush1.msra.mxu0 0.0
        %2415 = vmatprep.subr.mxu0 0.0
        %2416 = vmatpush1.msra.mxu0 0.0
        %2417 = vmatprep.subr.mxu0 0.0
        %2418 = vmatpush1.msra.mxu0 0.0
        %2419 = vmatprep.subr.mxu0 0.0
        %2420 = vmatpush1.msra.mxu0 0.0
        %2421 = vmatprep.subr.mxu0 0.0
        %2422 = vmatpush1.msra.mxu0 0.0
        %2423 = vmatprep.subr.mxu0 0.0
        %2424 = vmatpush1.msra.mxu0 0.0
        %2425 = vmatprep.subr.mxu0 0.0
        %2426 = vmatpush1.msra.mxu0 0.0
        %2427 = vmatprep.subr.mxu0 0.0
        %2428 = vmatpush1.msra.mxu0 0.0
        %2429 = vmatprep.subr.mxu0 0.0
        %2430 = vmatpush1.msra.mxu0 0.0
        %2431 = vmatprep.subr.mxu0 0.0
        %2432 = vmatpush1.msra.mxu0 0.0
        %2433 = vmatprep.subr.mxu0 0.0
        %2434 = vmatpush1.msra.mxu0 0.0
        %2435 = vmatprep.subr.mxu0 0.0
        %2436 = vmatpush1.msra.mxu0 0.0
        %2437 = vmatprep.subr.mxu0 0.0
        %2438 = vmatpush1.msra.mxu0 0.0
        %2439 = vmatprep.subr.mxu0 0.0
        %2440 = vmatpush1.msra.mxu0 0.0
        %2441 = vmatprep.subr.mxu0 0.0
        %2442 = vmatpush1.msra.mxu0 %v2386
        %2443 = vmatprep.subr.mxu0 0.0
        %2444 = vmatpush1.msra.mxu0 %v2385
        %2445 = vmatprep.subr.mxu0 0.0
        %2446 = vmatpush2.msra.mxu0 0.0
        %2447 = vmatprep.subr.mxu0 0.0
        %2448 = vmatpush2.msra.mxu0 0.0
        %2449 = vmatprep.subr.mxu0 0.0
        %2450 = vmatpush2.msra.mxu0 0.0
        %2451 = vmatprep.subr.mxu0 0.0
        %2452 = vmatpush2.msra.mxu0 0.0
        %2453 = vmatprep.subr.mxu0 0.0
        %2454 = vmatpush2.msra.mxu0 0.0
        %2455 = vmatprep.subr.mxu0 0.0
        %2456 = vmatpush2.msra.mxu0 0.0
        %2457 = vmatprep.subr.mxu0 0.0
        %2458 = vmatpush2.msra.mxu0 0.0
        %2459 = vmatprep.subr.mxu0 0.0
        %2460 = vmatpush2.msra.mxu0 0.0
        %2461 = vmatprep.subr.mxu0 0.0
        %2462 = vmatpush2.msra.mxu0 0.0
        %2463 = vmatprep.subr.mxu0 0.0
        %2464 = vmatpush2.msra.mxu0 0.0
        %2465 = vmatprep.subr.mxu0 0.0
        %2466 = vmatpush2.msra.mxu0 0.0
        %2467 = vmatprep.subr.mxu0 0.0
        %2468 = vmatpush2.msra.mxu0 0.0
        %2469 = vmatprep.subr.mxu0 0.0
        %2470 = vmatpush2.msra.mxu0 0.0
        %2471 = vmatprep.subr.mxu0 0.0
        %2472 = vmatpush2.msra.mxu0 0.0
        %2473 = vmatprep.subr.mxu0 0.0
        %2474 = vmatpush2.msra.mxu0 0.0
        %2475 = vmatprep.subr.mxu0 0.0
        %2476 = vmatpush2.msra.mxu0 0.0
        %2477 = vmatprep.mubr.f32.mxu0 0.0
        %2478 = vmatmul.mubr.f32.gmra.mxu0 %v2390
        %v2479 = vpop.f32.mrf.mxu0
        %v2480 = vadd.f32 0.0, %v2479
        %v2481 = vpop.f32.mrf.mxu0
        %2482 = vmatprep.mubr.f32.mxu0 0.0
        %2483 = vmatmul.mubr.f32.gmra.mxu0 %v2393
        %v2484 = vpop.f32.mrf.mxu0
        %v2485 = vadd.f32 0.0, %v2484
        %v2486 = vpop.f32.mrf.mxu0
        %2487 = vmatprep.mubr.f32.mxu0 0.0
        %2488 = vmatmul.mubr.f32.gmra.mxu0 %v2396
        %v2489 = vpop.f32.mrf.mxu0
        %v2490 = vadd.f32 0.0, %v2489
        %v2491 = vpop.f32.mrf.mxu0
        %2492 = vmatprep.mubr.f32.mxu0 0.0
        %2493 = vmatmul.mubr.f32.gmra.mxu0 %v2399
        %v2494 = vpop.f32.mrf.mxu0
        %v2495 = vadd.f32 0.0, %v2494
        %v2496 = vpop.f32.mrf.mxu0
        %2497 = vmatprep.mubr.f32.mxu0 0.0
        %2498 = vmatmul.mubr.f32.gmra.mxu0 %v2402
        %v2499 = vpop.f32.mrf.mxu0
        %v2500 = vadd.f32 0.0, %v2499
        %v2501 = vpop.f32.mrf.mxu0
        %2502 = vmatprep.mubr.f32.mxu0 0.0
        %2503 = vmatmul.mubr.f32.gmra.mxu0 %v2405
        %v2504 = vpop.f32.mrf.mxu0
        %v2505 = vadd.f32 0.0, %v2504
        %v2506 = vpop.f32.mrf.mxu0
        %2507 = vmatprep.mubr.f32.mxu0 0.0
        %2508 = vmatmul.mubr.f32.gmra.mxu0 %v2408
        %v2509 = vpop.f32.mrf.mxu0
        %v2510 = vadd.f32 0.0, %v2509
        %v2511 = vpop.f32.mrf.mxu0
        %2512 = vmatprep.mubr.f32.mxu0 0.0
        %2513 = vmatmul.mubr.f32.gmra.mxu0 %v2411
        %v2514 = vpop.f32.mrf.mxu0
        %v2515 = vadd.f32 0.0, %v2514
        %v2516 = vpop.f32.mrf.mxu0
        %2517 = vdwg.mxu0
        %2518 = vxpose.xlu0.b32.start [1/16] %v2480, 128
        %2519 = vxpose.xlu0.b32.cont [2/16] %v2485, 128
        %2520 = vxpose.xlu0.b32.cont [3/16] 0.0, 128
        %2521 = vxpose.xlu0.b32.cont [4/16] 0.0, 128
        %2522 = vxpose.xlu0.b32.cont [5/16] 0.0, 128
        %2523 = vxpose.xlu0.b32.cont [6/16] 0.0, 128
        %2524 = vxpose.xlu0.b32.cont [7/16] 0.0, 128
        %2525 = vxpose.xlu0.b32.cont [8/16] 0.0, 128
        %2526 = vxpose.xlu0.b32.cont [9/16] 0.0, 128
        %2527 = vxpose.xlu0.b32.cont [10/16] 0.0, 128
        %2528 = vxpose.xlu0.b32.cont [11/16] 0.0, 128
        %2529 = vxpose.xlu0.b32.cont [12/16] 0.0, 128
        %2530 = vxpose.xlu0.b32.cont [13/16] 0.0, 128
        %2531 = vxpose.xlu0.b32.cont [14/16] 0.0, 128
        %2532 = vxpose.xlu0.b32.cont [15/16] 0.0, 128
        %2533 = vxpose.xlu0.b32.end [16/16] 0.0, 128
        %v2534 = vpop.trf.xlu0
        %v2535 = vpop.trf.xlu0
        %v2536 = vpop.trf.xlu0
        %v2537 = vpop.trf.xlu0
        %v2538 = vpop.trf.xlu0
        %v2539 = vpop.trf.xlu0
        %v2540 = vpop.trf.xlu0
        %v2541 = vpop.trf.xlu0
        %v2542 = vpop.trf.xlu0
        %v2543 = vpop.trf.xlu0
        %v2544 = vpop.trf.xlu0
        %v2545 = vpop.trf.xlu0
        %v2546 = vpop.trf.xlu0
        %v2547 = vpop.trf.xlu0
        %v2548 = vpop.trf.xlu0
        %v2549 = vpop.trf.xlu0
        %2550 = vxpose.xlu0.b32.start [1/16] %v2490, 128
        %2551 = vxpose.xlu0.b32.cont [2/16] %v2495, 128
        %2552 = vxpose.xlu0.b32.cont [3/16] 0.0, 128
        %2553 = vxpose.xlu0.b32.cont [4/16] 0.0, 128
        %2554 = vxpose.xlu0.b32.cont [5/16] 0.0, 128
        %2555 = vxpose.xlu0.b32.cont [6/16] 0.0, 128
        %2556 = vxpose.xlu0.b32.cont [7/16] 0.0, 128
        %2557 = vxpose.xlu0.b32.cont [8/16] 0.0, 128
        %2558 = vxpose.xlu0.b32.cont [9/16] 0.0, 128
        %2559 = vxpose.xlu0.b32.cont [10/16] 0.0, 128
        %2560 = vxpose.xlu0.b32.cont [11/16] 0.0, 128
        %2561 = vxpose.xlu0.b32.cont [12/16] 0.0, 128
        %2562 = vxpose.xlu0.b32.cont [13/16] 0.0, 128
        %2563 = vxpose.xlu0.b32.cont [14/16] 0.0, 128
        %2564 = vxpose.xlu0.b32.cont [15/16] 0.0, 128
        %2565 = vxpose.xlu0.b32.end [16/16] 0.0, 128
        %v2566 = vpop.trf.xlu0
        %v2567 = vpop.trf.xlu0
        %v2568 = vpop.trf.xlu0
        %v2569 = vpop.trf.xlu0
        %v2570 = vpop.trf.xlu0
        %v2571 = vpop.trf.xlu0
        %v2572 = vpop.trf.xlu0
        %v2573 = vpop.trf.xlu0
        %v2574 = vpop.trf.xlu0
        %v2575 = vpop.trf.xlu0
        %v2576 = vpop.trf.xlu0
        %v2577 = vpop.trf.xlu0
        %v2578 = vpop.trf.xlu0
        %v2579 = vpop.trf.xlu0
        %v2580 = vpop.trf.xlu0
        %v2581 = vpop.trf.xlu0
        %2582 = vxpose.xlu0.b32.start [1/16] %v2500, 128
        %2583 = vxpose.xlu0.b32.cont [2/16] %v2505, 128
        %2584 = vxpose.xlu0.b32.cont [3/16] 0.0, 128
        %2585 = vxpose.xlu0.b32.cont [4/16] 0.0, 128
        %2586 = vxpose.xlu0.b32.cont [5/16] 0.0, 128
        %2587 = vxpose.xlu0.b32.cont [6/16] 0.0, 128
        %2588 = vxpose.xlu0.b32.cont [7/16] 0.0, 128
        %2589 = vxpose.xlu0.b32.cont [8/16] 0.0, 128
        %2590 = vxpose.xlu0.b32.cont [9/16] 0.0, 128
        %2591 = vxpose.xlu0.b32.cont [10/16] 0.0, 128
        %2592 = vxpose.xlu0.b32.cont [11/16] 0.0, 128
        %2593 = vxpose.xlu0.b32.cont [12/16] 0.0, 128
        %2594 = vxpose.xlu0.b32.cont [13/16] 0.0, 128
        %2595 = vxpose.xlu0.b32.cont [14/16] 0.0, 128
        %2596 = vxpose.xlu0.b32.cont [15/16] 0.0, 128
        %2597 = vxpose.xlu0.b32.end [16/16] 0.0, 128
        %v2598 = vpop.trf.xlu0
        %v2599 = vpop.trf.xlu0
        %v2600 = vpop.trf.xlu0
        %v2601 = vpop.trf.xlu0
        %v2602 = vpop.trf.xlu0
        %v2603 = vpop.trf.xlu0
        %v2604 = vpop.trf.xlu0
        %v2605 = vpop.trf.xlu0
        %v2606 = vpop.trf.xlu0
        %v2607 = vpop.trf.xlu0
        %v2608 = vpop.trf.xlu0
        %v2609 = vpop.trf.xlu0
        %v2610 = vpop.trf.xlu0
        %v2611 = vpop.trf.xlu0
        %v2612 = vpop.trf.xlu0
        %v2613 = vpop.trf.xlu0
        %2614 = vxpose.xlu0.b32.start [1/16] %v2510, 128
        %2615 = vxpose.xlu0.b32.cont [2/16] %v2515, 128
        %2616 = vxpose.xlu0.b32.cont [3/16] 0.0, 128
        %2617 = vxpose.xlu0.b32.cont [4/16] 0.0, 128
        %2618 = vxpose.xlu0.b32.cont [5/16] 0.0, 128
        %2619 = vxpose.xlu0.b32.cont [6/16] 0.0, 128
        %2620 = vxpose.xlu0.b32.cont [7/16] 0.0, 128
        %2621 = vxpose.xlu0.b32.cont [8/16] 0.0, 128
        %2622 = vxpose.xlu0.b32.cont [9/16] 0.0, 128
        %2623 = vxpose.xlu0.b32.cont [10/16] 0.0, 128
        %2624 = vxpose.xlu0.b32.cont [11/16] 0.0, 128
        %2625 = vxpose.xlu0.b32.cont [12/16] 0.0, 128
        %2626 = vxpose.xlu0.b32.cont [13/16] 0.0, 128
        %2627 = vxpose.xlu0.b32.cont [14/16] 0.0, 128
        %2628 = vxpose.xlu0.b32.cont [15/16] 0.0, 128
        %2629 = vxpose.xlu0.b32.end [16/16] 0.0, 128
        %v2630 = vpop.trf.xlu0
        %v2631 = vpop.trf.xlu0
        %v2632 = vpop.trf.xlu0
        %v2633 = vpop.trf.xlu0
        %v2634 = vpop.trf.xlu0
        %v2635 = vpop.trf.xlu0
        %v2636 = vpop.trf.xlu0
        %v2637 = vpop.trf.xlu0
        %v2638 = vpop.trf.xlu0
        %v2639 = vpop.trf.xlu0
        %v2640 = vpop.trf.xlu0
        %v2641 = vpop.trf.xlu0
        %v2642 = vpop.trf.xlu0
        %v2643 = vpop.trf.xlu0
        %v2644 = vpop.trf.xlu0
        %v2645 = vpop.trf.xlu0
        %v2647 = vsel %vm564, %v2534, 0
        %v2650 = vsel %vm564, %v2535, 0
        %v2653 = vsel %vm564, %v2536, 0
        %v2656 = vsel %vm564, %v2537, 0
        %v2659 = vsel %vm564, %v2566, 0
        %v2662 = vsel %vm564, %v2567, 0
        %v2665 = vsel %vm564, %v2568, 0
        %v2668 = vsel %vm564, %v2569, 0
        %v2671 = vsel %vm564, %v2598, 0
        %v2674 = vsel %vm564, %v2599, 0
        %v2677 = vsel %vm564, %v2600, 0
        %v2680 = vsel %vm564, %v2601, 0
        %v2683 = vsel %vm564, %v2630, 0
        %v2686 = vsel %vm564, %v2631, 0
        %v2689 = vsel %vm564, %v2632, 0
        %v2692 = vsel %vm564, %v2633, 0
        %2694 = vmatprep.subr.mxu0 0.0
        %2695 = vmatpush1.msra.mxu0 0.0
        %2696 = vmatprep.subr.mxu0 0.0
        %2697 = vmatpush1.msra.mxu0 0.0
        %2698 = vmatprep.subr.mxu0 0.0
        %2699 = vmatpush1.msra.mxu0 0.0
        %2700 = vmatprep.subr.mxu0 0.0
        %2701 = vmatpush1.msra.mxu0 0.0
        %2702 = vmatprep.subr.mxu0 0.0
        %2703 = vmatpush1.msra.mxu0 0.0
        %2704 = vmatprep.subr.mxu0 0.0
        %2705 = vmatpush1.msra.mxu0 0.0
        %2706 = vmatprep.subr.mxu0 0.0
        %2707 = vmatpush1.msra.mxu0 0.0
        %2708 = vmatprep.subr.mxu0 0.0
        %2709 = vmatpush1.msra.mxu0 0.0
        %2710 = vmatprep.subr.mxu0 0.0
        %2711 = vmatpush1.msra.mxu0 0.0
        %2712 = vmatprep.subr.mxu0 0.0
        %2713 = vmatpush1.msra.mxu0 0.0
        %2714 = vmatprep.subr.mxu0 0.0
        %2715 = vmatpush1.msra.mxu0 0.0
        %2716 = vmatprep.subr.mxu0 0.0
        %2717 = vmatpush1.msra.mxu0 0.0
        %2718 = vmatprep.subr.mxu0 0.0
        %2719 = vmatpush1.msra.mxu0 0.0
        %2720 = vmatprep.subr.mxu0 0.0
        %2721 = vmatpush1.msra.mxu0 0.0
        %2722 = vmatprep.subr.mxu0 0.0
        %2723 = vmatpush1.msra.mxu0 %v2388
        %2724 = vmatprep.subr.mxu0 0.0
        %2725 = vmatpush1.msra.mxu0 %v2387
        %2726 = vmatprep.subr.mxu0 0.0
        %2727 = vmatpush2.msra.mxu0 0.0
        %2728 = vmatprep.subr.mxu0 0.0
        %2729 = vmatpush2.msra.mxu0 0.0
        %2730 = vmatprep.subr.mxu0 0.0
        %2731 = vmatpush2.msra.mxu0 0.0
        %2732 = vmatprep.subr.mxu0 0.0
        %2733 = vmatpush2.msra.mxu0 0.0
        %2734 = vmatprep.subr.mxu0 0.0
        %2735 = vmatpush2.msra.mxu0 0.0
        %2736 = vmatprep.subr.mxu0 0.0
        %2737 = vmatpush2.msra.mxu0 0.0
        %2738 = vmatprep.subr.mxu0 0.0
        %2739 = vmatpush2.msra.mxu0 0.0
        %2740 = vmatprep.subr.mxu0 0.0
        %2741 = vmatpush2.msra.mxu0 0.0
        %2742 = vmatprep.subr.mxu0 0.0
        %2743 = vmatpush2.msra.mxu0 0.0
        %2744 = vmatprep.subr.mxu0 0.0
        %2745 = vmatpush2.msra.mxu0 0.0
        %2746 = vmatprep.subr.mxu0 0.0
        %2747 = vmatpush2.msra.mxu0 0.0
        %2748 = vmatprep.subr.mxu0 0.0
        %2749 = vmatpush2.msra.mxu0 0.0
        %2750 = vmatprep.subr.mxu0 0.0
        %2751 = vmatpush2.msra.mxu0 0.0
        %2752 = vmatprep.subr.mxu0 0.0
        %2753 = vmatpush2.msra.mxu0 0.0
        %2754 = vmatprep.subr.mxu0 0.0
        %2755 = vmatpush2.msra.mxu0 0.0
        %2756 = vmatprep.subr.mxu0 0.0
        %2757 = vmatpush2.msra.mxu0 0.0
        %2758 = vmatprep.mubr.f32.mxu0 0.0
        %2759 = vmatmul.mubr.f32.gmra.mxu0 %v2647
        %v2760 = vpop.f32.mrf.mxu0
        %v2761 = vadd.f32 0.0, %v2760
        %v2762 = vpop.f32.mrf.mxu0
        %2763 = vmatprep.mubr.f32.mxu0 0.0
        %2764 = vmatmul.mubr.f32.gmra.mxu0 %v2650
        %v2765 = vpop.f32.mrf.mxu0
        %v2766 = vadd.f32 0.0, %v2765
        %v2767 = vpop.f32.mrf.mxu0
        %2768 = vmatprep.mubr.f32.mxu0 0.0
        %2769 = vmatmul.mubr.f32.gmra.mxu0 %v2653
        %v2770 = vpop.f32.mrf.mxu0
        %v2771 = vadd.f32 0.0, %v2770
        %v2772 = vpop.f32.mrf.mxu0
        %2773 = vmatprep.mubr.f32.mxu0 0.0
        %2774 = vmatmul.mubr.f32.gmra.mxu0 %v2656
        %v2775 = vpop.f32.mrf.mxu0
        %v2776 = vadd.f32 0.0, %v2775
        %v2777 = vpop.f32.mrf.mxu0
        %2778 = vmatprep.mubr.f32.mxu0 0.0
        %2779 = vmatmul.mubr.f32.gmra.mxu0 %v2659
        %v2780 = vpop.f32.mrf.mxu0
        %v2781 = vadd.f32 0.0, %v2780
        %v2782 = vpop.f32.mrf.mxu0
        %2783 = vmatprep.mubr.f32.mxu0 0.0
        %2784 = vmatmul.mubr.f32.gmra.mxu0 %v2662
        %v2785 = vpop.f32.mrf.mxu0
        %v2786 = vadd.f32 0.0, %v2785
        %v2787 = vpop.f32.mrf.mxu0
        %2788 = vmatprep.mubr.f32.mxu0 0.0
        %2789 = vmatmul.mubr.f32.gmra.mxu0 %v2665
        %v2790 = vpop.f32.mrf.mxu0
        %v2791 = vadd.f32 0.0, %v2790
        %v2792 = vpop.f32.mrf.mxu0
        %2793 = vmatprep.mubr.f32.mxu0 0.0
        %2794 = vmatmul.mubr.f32.gmra.mxu0 %v2668
        %v2795 = vpop.f32.mrf.mxu0
        %v2796 = vadd.f32 0.0, %v2795
        %v2797 = vpop.f32.mrf.mxu0
        %2798 = vmatprep.mubr.f32.mxu0 0.0
        %2799 = vmatmul.mubr.f32.gmra.mxu0 %v2671
        %v2800 = vpop.f32.mrf.mxu0
        %v2801 = vadd.f32 0.0, %v2800
        %v2802 = vpop.f32.mrf.mxu0
        %2803 = vmatprep.mubr.f32.mxu0 0.0
        %2804 = vmatmul.mubr.f32.gmra.mxu0 %v2674
        %v2805 = vpop.f32.mrf.mxu0
        %v2806 = vadd.f32 0.0, %v2805
        %v2807 = vpop.f32.mrf.mxu0
        %2808 = vmatprep.mubr.f32.mxu0 0.0
        %2809 = vmatmul.mubr.f32.gmra.mxu0 %v2677
        %v2810 = vpop.f32.mrf.mxu0
        %v2811 = vadd.f32 0.0, %v2810
        %v2812 = vpop.f32.mrf.mxu0
        %2813 = vmatprep.mubr.f32.mxu0 0.0
        %2814 = vmatmul.mubr.f32.gmra.mxu0 %v2680
        %v2815 = vpop.f32.mrf.mxu0
        %v2816 = vadd.f32 0.0, %v2815
        %v2817 = vpop.f32.mrf.mxu0
        %2818 = vmatprep.mubr.f32.mxu0 0.0
        %2819 = vmatmul.mubr.f32.gmra.mxu0 %v2683
        %v2820 = vpop.f32.mrf.mxu0
        %v2821 = vadd.f32 0.0, %v2820
        %v2822 = vpop.f32.mrf.mxu0
        %2823 = vmatprep.mubr.f32.mxu0 0.0
        %2824 = vmatmul.mubr.f32.gmra.mxu0 %v2686
        %v2825 = vpop.f32.mrf.mxu0
        %v2826 = vadd.f32 0.0, %v2825
        %v2827 = vpop.f32.mrf.mxu0
        %2828 = vmatprep.mubr.f32.mxu0 0.0
        %2829 = vmatmul.mubr.f32.gmra.mxu0 %v2689
        %v2830 = vpop.f32.mrf.mxu0
        %v2831 = vadd.f32 0.0, %v2830
        %v2832 = vpop.f32.mrf.mxu0
        %2833 = vmatprep.mubr.f32.mxu0 0.0
        %2834 = vmatmul.mubr.f32.gmra.mxu0 %v2692
        %v2835 = vpop.f32.mrf.mxu0
        %v2836 = vadd.f32 0.0, %v2835
        %v2837 = vpop.f32.mrf.mxu0
        %2838 = vdwg.mxu0
        %v2839 = vld [vmem:[%s454] sm:$0xff]
        %v2840 = vld [vmem:[%s454 + $0x8] sm:$0xff]
        %v2841 = vld [vmem:[%s454 + $0x10] sm:$0xff]
        %v2842 = vld [vmem:[%s454 + $0x18] sm:$0xff]
        %v2843 = vld [vmem:[%s454 + $0x20] sm:$0xff]
        %v2844 = vld [vmem:[%s454 + $0x28] sm:$0xff]
        %v2845 = vld [vmem:[%s454 + $0x30] sm:$0xff]
        %v2846 = vld [vmem:[%s454 + $0x38] sm:$0xff]
        %v2847 = vmul.f32 %v2761, %v2839
        %v2848 = vmul.f32 %v2766, %v2840
        %v2849 = vmul.f32 %v2771, %v2841
        %v2850 = vmul.f32 %v2776, %v2842
        %v2851 = vmul.f32 %v2781, %v2843
        %v2852 = vmul.f32 %v2786, %v2844
        %v2853 = vmul.f32 %v2791, %v2845
        %v2854 = vmul.f32 %v2796, %v2846
        %v2855 = vadd.f32 %v2847, %v2801
        %v2856 = vadd.f32 %v2848, %v2806
        %v2857 = vadd.f32 %v2849, %v2811
        %v2858 = vadd.f32 %v2850, %v2816
        %v2859 = vadd.f32 %v2851, %v2821
        %v2860 = vadd.f32 %v2852, %v2826
        %v2861 = vadd.f32 %v2853, %v2831
        %v2862 = vadd.f32 %v2854, %v2836
        %vm2863 = vcmask 261120
        %2864 = vst.msk [vmem:[%s541] sm:$0xff] %vm2863, %v2855
        %2865 = vst.msk [vmem:[%s541 + $0x8] sm:$0xff] %vm2863, %v2856
        %2866 = vst.msk [vmem:[%s541 + $0x10] sm:$0xff] %vm2863, %v2857
        %2867 = vst.msk [vmem:[%s541 + $0x18] sm:$0xff] %vm2863, %v2858
        %2868 = vst.msk [vmem:[%s541 + $0x20] sm:$0xff] %vm2863, %v2859
        %2869 = vst.msk [vmem:[%s541 + $0x28] sm:$0xff] %vm2863, %v2860
        %2870 = vst.msk [vmem:[%s541 + $0x30] sm:$0xff] %vm2863, %v2861
        %2871 = vst.msk [vmem:[%s541 + $0x38] sm:$0xff] %vm2863, %v2862
        %s2872 = sand.u32 %s265, 1
        %s2873 = scalar_lea.sflag [#allocation4], %s2872
        %s2874 = sand.u32 %s265, 1
        %s2875 = smul.addr %s2874, 64
        %s2876 = scalar_lea.vmem [#allocation18], %s2875
        // Predicated region
        $region93: #{tpu_custom_call.1} parent=55 // pred_check
          %p2877 = pneg %p275
        $region94: #{tpu_custom_call.1} parent=55 // pred_check_branch
          %2879 = sbr.rel (%p2877) target = $region96
        $region95: #{tpu_custom_call.1} parent=55 // pred_region
          %s2880 = smul.u32 2, %s38
          %s2882 = ssub.s32 1024, 1024
          %2883 = vsyncadd %s2873, %s2882
          %s2884 = smul.addr %s2880, 4
          %s2885 = smul.addr %s37, 16
          %s2886 = sadd.s32 %s2884, %s2885
          %s2887 = smul.addr %s2886, 128
          %s2888 = scalar_lea.hbm %s9, %s2887
          %s2889 = sshll.u32 %s2876, 4
          %s2890 = int_to_ptr.vmem [resolvable:$true] %s2889
          %2895 = dma.vmem_to_hbm [thread:$0]  %s2890, 1024, %s2888, %s2873, 128, 128, 8
        $region96: #{tpu_custom_call.1} parent=55 // pred_fallthru
          _
      $region56: #{tpu_custom_call.1} parent=5 // pred_fallthru
        _
      %p2896 = scmp.le.s32.totalorder 2, %s28
      // Predicated region
      $region97: #{tpu_custom_call.1} parent=5 // pred_check
        %p2897 = pneg %p2896
      $region98: #{tpu_custom_call.1} parent=5 // pred_check_branch
        %2899 = sbr.rel (%p2897) target = $region100
      $region99: #{tpu_custom_call.1} parent=5 // pred_region
        %s2900 = ssub.s32 %s28, 2
        // Predicated region
        $region101: #{tpu_custom_call.1} parent=99 // pred_check
          %p2901 = pneg %p281
        $region102: #{tpu_custom_call.1} parent=99 // pred_check_branch
          %2903 = sbr.rel (%p2901) target = $region104
        $region103: #{tpu_custom_call.1} parent=99 // pred_region
          %s2904 = sand.u32 %s266, 1
          %s2905 = scalar_lea.sflag [#allocation4], %s2904
          %s2906 = sand.u32 %s266, 1
          %s2907 = smul.addr %s2906, 64
          %s2908 = scalar_lea.vmem [#allocation18], %s2907
          %2909 = dma.done %s2905, 1024
        $region104: #{tpu_custom_call.1} parent=99 // pred_fallthru
          _
      $region100: #{tpu_custom_call.1} parent=5 // pred_fallthru
        _
    $region6: #{tpu_custom_call.1} parent=1 // loop_footer
      %s32 = sadd.s32 1, %s28
    $region7: #{tpu_custom_call.1} parent=1 // loop_footer_branch
      %27 = sbr.rel target = $region3
    $region8: #{tpu_custom_call.1} parent=1 // loop_exit
      _
    %2910 = vsyncpa [#allocation3], 1
    %s2911 = scalar_lea.sflag [#allocation3], 1
    %2912 = vsyncpa %s2911, 1
    %2913 = vsyncpa [#allocation7], 1
    %s2914 = scalar_lea.sflag [#allocation7], 1
    %2915 = vsyncpa %s2914, 1
    %2916 = vsyncpa [#allocation10], 1
    %2917 = vsyncpa [#allocation13], 1
    %2918 = vsyncpa [#allocation4], 1
    %s2919 = scalar_lea.sflag [#allocation4], 1
    %2920 = vsyncpa %s2919, 1
    %2921 = vsyncpa [#allocation5], 1
    %s2922 = scalar_lea.sflag [#allocation5], 1
    %2923 = vsyncpa %s2922, 1
    %2924 = vsyncpa [#allocation17], 1

// kernel: tpu_custom_call.1
$region0: #{tpu_custom_call.1}
  #allocation0 [shape = 'u32[]', space=smem, size = 0x4, offset = 0x4, fixed_abs, tag = 'smem constant byte address 0x4 - core index']
  #allocation1 [shape = 'u32[144,128]{1,0:T(1,128)}', space=vmem, size = 0x12000, scoped, tag = 'internal scratch']
  %s0 = inlined_call_operand.hbm [shape: f32[2,4,32,32], index: 0, kind: input, shape index: {}]
  %s1 = inlined_call_operand.hbm [shape: f32[2,4,16,16], index: 1, kind: input, shape index: {}]
  %s2 = inlined_call_operand.hbm [shape: f32[2,4,16,16], index: 2, kind: input, shape index: {}]
  %s3 = inlined_call_operand.hbm [shape: f32[3,16,16], index: 3, kind: input, shape index: {}]
  %s4 = inlined_call_operand.hbm [shape: f32[16,48], index: 4, kind: input, shape index: {}]
  %s5 = inlined_call_operand.hbm [shape: f32[16,32], index: 5, kind: input, shape index: {}]
  %s6 = inlined_call_operand.hbm [shape: f32[16,32], index: 6, kind: input, shape index: {}]
  %s7 = inlined_call_operand.vmem [shape: f32[3], index: 7, kind: input, shape index: {}]
  %s8 = inlined_call_operand.vmem [shape: f32[3], index: 8, kind: input, shape index: {}]
  %s9 = inlined_call_operand.hbm [shape: f32[2,4,32,32], index: 9, kind: output, shape index: {}]
  %s10 = sld [smem:[#allocation0]]
  $region105: #{tpu_custom_call.1} parent=0
    _
  %s12 = ssub.s32 1, %s10
  %s13 = scalar_select 0, %s12, %s10
  $region1: #{tpu_custom_call.1} parent=0
    #allocation2 [shape = 'u8[65536]{0}', space=vmem, size = 0x10000, scoped, tag = 'input window, operand 0']
    #allocation3 [shape = 's32[2]{0}', space=sflag, size = 0x8, scoped, tag = 'scoped memory for tpu_custom_call.1']
    #allocation4 [shape = 's32[2]{0}', space=sflag, size = 0x8, scoped, tag = 'scoped memory for tpu_custom_call.1']
    #allocation5 [shape = 's32[2]{0}', space=sflag, size = 0x8, scoped, tag = 'scoped memory for tpu_custom_call.1']
    #allocation6 [shape = 'u8[32768]{0}', space=vmem, size = 0x8000, scoped, tag = 'input window, operand 1']
    #allocation7 [shape = 's32[2]{0}', space=sflag, size = 0x8, scoped, tag = 'scoped memory for tpu_custom_call.1']
    #allocation8 [shape = 'u8[32768]{0}', space=vmem, size = 0x8000, scoped, tag = 'input window, operand 2']
    #allocation9 [shape = 'u8[24576]{0}', space=vmem, size = 0x6000, scoped, tag = 'input window, operand 3, single buffered']
    #allocation10 [shape = 's32[1]{0}', space=sflag, size = 0x4, scoped, tag = 'scoped memory for tpu_custom_call.1']
    #allocation11 [shape = 'u8[8192]{0}', space=vmem, size = 0x2000, scoped, tag = 'input window, operand 4, single buffered']
    #allocation12 [shape = 'u8[8192]{0}', space=vmem, size = 0x2000, scoped, tag = 'input window, operand 5, single buffered']
    #allocation13 [shape = 's32[1]{0}', space=sflag, size = 0x4, scoped, tag = 'scoped memory for tpu_custom_call.1']
    #allocation14 [shape = 'u8[8192]{0}', space=vmem, size = 0x2000, scoped, tag = 'input window, operand 6, single buffered']
    #allocation15 [shape = 'u8[512]{0}', space=smem, size = 0x200, scoped, tag = 'input window, operand 7, single buffered']
    #allocation16 [shape = 'u8[512]{0}', space=smem, size = 0x200, scoped, tag = 'input window, operand 8, single buffered']
    #allocation17 [shape = 's32[1]{0}', space=sflag, size = 0x4, scoped, tag = 'scoped memory for tpu_custom_call.1']
    #allocation18 [shape = 'u8[65536]{0}', space=vmem, size = 0x10000, scoped, tag = 'output window, operand 0']
    %14 = vsyncpa [#allocation3], 0
    %s15 = scalar_lea.sflag [#allocation3], 1
    %16 = vsyncpa %s15, 0
    %17 = vsyncpa [#allocation7], 0
    %s18 = scalar_lea.sflag [#allocation7], 1
    %19 = vsyncpa %s18, 0
    %20 = vsyncpa [#allocation10], 0
    %21 = vsyncpa [#allocation13], 0
    %22 = vsyncpa [#allocation5], 0
    %23 = vsyncpa [#allocation17], 0
    %24 = vsyncpa [#allocation4], 0
    %s25 = scalar_lea.sflag [#allocation4], 1
    %26 = vsyncpa %s25, 0
    loop: start=0, step=1, limit=6
    $region2: #{tpu_custom_call.1} parent=1 // loop_pre_header
      _
    $region3: #{tpu_custom_call.1} parent=1 // loop_header
      %s28 = sphi 0, %s32
      %p29 = scmp.ge.s32.totalorder %s28, 6
      %s35 = sphi 0, %s47
      %s36 = sphi 0, %s43
      %s37 = sphi 0, %s35
      %s38 = sphi 0, %s36
      %s39 = sphi 0, %s37
      %s40 = sphi 0, %s38
      %s52 = sphi 0, %s54
      %s55 = sphi 0, %s52
      %s56 = sphi 0, %s55
      %s72 = sphi 0, %s56
      %s80 = sphi 0, %s82
      %s83 = sphi 0, %s80
      %s84 = sphi 0, %s83
      %s100 = sphi 0, %s84
      %s108 = sphi 0, %s110
      %s111 = sphi 0, %s108
      %s112 = sphi 0, %s111
      %s128 = sphi 0, %s112
      %s132 = sphi 0, %s132
      %s134 = sphi 0, %s132
      %s135 = sphi 0, %s134
      %s149 = sphi 0, %s135
      %s153 = sphi 0, %s153
      %s155 = sphi 0, %s153
      %s156 = sphi 0, %s155
      %s170 = sphi 0, %s156
      %s174 = sphi 0, %s174
      %s176 = sphi 0, %s174
      %s177 = sphi 0, %s176
      %s191 = sphi 0, %s177
      %s195 = sphi 0, %s195
      %s197 = sphi 0, %s195
      %s198 = sphi 0, %s197
      %s212 = sphi 0, %s198
      %s216 = sphi 0, %s216
      %s218 = sphi 0, %s216
      %s219 = sphi 0, %s218
      %s233 = sphi 0, %s219
      %s237 = sphi 0, %s237
      %s239 = sphi 0, %s237
      %s240 = sphi 0, %s239
      %s254 = sphi 0, %s240
      %s262 = sphi 0, %s264
      %s265 = sphi 0, %s262
      %s266 = sphi 0, %s265
      %s282 = sphi 0, %s266
    $region4: #{tpu_custom_call.1} parent=1 // loop_header_branch
      %31 = sbr.rel (%p29) target = $region8
    $region5: #{tpu_custom_call.1} parent=1 // loop_body
      %s33 = ssub.s32 %s28, 1
      %s34 = ssub.s32 %s28, 2
      %s41 = sadd.s32 1, %s36
      %p42 = scmp.ge.s32.totalorder %s41, 2
      %s43 = scalar_select %p42, 0, %s41
      %s44 = sadd.s32 1, %s35
      %s45 = scalar_select %p42, %s44, %s35
      %p46 = scmp.ge.s32.totalorder %s45, 2
      %s47 = scalar_select %p46, 0, %s45
      %s48 = ssub.s32 %s35, %s47
      %s49 = ssub.s32 %s36, %s43
      %s50 = sor.u32 %s48, %s49
      %p51 = scmp.eq.s32.totalorder %s50, 0
      %s53 = sadd.s32 %s52, 1
      %s54 = scalar_select %p51, %s52, %s53
      %p57 = pneg %p51
      %p58 = scmp.eq.s32.totalorder %s28, 3
      %p59 = por %p57, %p58
      %p60 = scmp.ne.s32.totalorder %s52, %s55
      %p61 = scmp.eq.s32.totalorder %s28, 0
      %p62 = por %p60, %p61
      %p63 = scmp.ne.s32.totalorder %s52, %s55
      %p64 = scmp.eq.s32.totalorder %s33, 3
      %p65 = por %p63, %p64
      %p66 = scmp.ne.s32.totalorder %s55, %s56
      %p67 = scmp.eq.s32.totalorder %s33, 0
      %p68 = por %p66, %p67
      %p69 = scmp.ne.s32.totalorder %s55, %s56
      %p70 = scmp.eq.s32.totalorder %s34, 3
      %p71 = por %p69, %p70
      %p73 = scmp.ne.s32.totalorder %s56, %s72
      %p74 = scmp.eq.s32.totalorder %s34, 0
      %p75 = por %p73, %p74
      %s76 = ssub.s32 %s35, %s47
      %s77 = ssub.s32 %s36, %s43
      %s78 = sor.u32 %s76, %s77
      %p79 = scmp.eq.s32.totalorder %s78, 0
      %s81 = sadd.s32 %s80, 1
      %s82 = scalar_select %p79, %s80, %s81
      %p85 = pneg %p79
      %p86 = scmp.eq.s32.totalorder %s28, 3
      %p87 = por %p85, %p86
      %p88 = scmp.ne.s32.totalorder %s80, %s83
      %p89 = scmp.eq.s32.totalorder %s28, 0
      %p90 = por %p88, %p89
      %p91 = scmp.ne.s32.totalorder %s80, %s83
      %p92 = scmp.eq.s32.totalorder %s33, 3
      %p93 = por %p91, %p92
      %p94 = scmp.ne.s32.totalorder %s83, %s84
      %p95 = scmp.eq.s32.totalorder %s33, 0
      %p96 = por %p94, %p95
      %p97 = scmp.ne.s32.totalorder %s83, %s84
      %p98 = scmp.eq.s32.totalorder %s34, 3
      %p99 = por %p97, %p98
      %p101 = scmp.ne.s32.totalorder %s84, %s100
      %p102 = scmp.eq.s32.totalorder %s34, 0
      %p103 = por %p101, %p102
      %s104 = ssub.s32 %s35, %s47
      %s105 = ssub.s32 %s36, %s43
      %s106 = sor.u32 %s104, %s105
      %p107 = scmp.eq.s32.totalorder %s106, 0
      %s109 = sadd.s32 %s108, 1
      %s110 = scalar_select %p107, %s108, %s109
      %p113 = pneg %p107
      %p114 = scmp.eq.s32.totalorder %s28, 3
      %p115 = por %p113, %p114
      %p116 = scmp.ne.s32.totalorder %s108, %s111
      %p117 = scmp.eq.s32.totalorder %s28, 0
      %p118 = por %p116, %p117
      %p119 = scmp.ne.s32.totalorder %s108, %s111
      %p120 = scmp.eq.s32.totalorder %s33, 3
      %p121 = por %p119, %p120
      %p122 = scmp.ne.s32.totalorder %s111, %s112
      %p123 = scmp.eq.s32.totalorder %s33, 0
      %p124 = por %p122, %p123
      %p125 = scmp.ne.s32.totalorder %s111, %s112
      %p126 = scmp.eq.s32.totalorder %s34, 3
      %p127 = por %p125, %p126
      %p129 = scmp.ne.s32.totalorder %s112, %s128
      %p130 = scmp.eq.s32.totalorder %s34, 0
      %p131 = por %p129, %p130
      %s133 = sadd.s32 %s132, 1
      %p136 = scmp.eq.s32.totalorder %s28, 3
      %p137 = scmp.ne.s32.totalorder %s132, %s134
      %p138 = scmp.eq.s32.totalorder %s28, 0
      %p139 = por %p137, %p138
      %p140 = scmp.ne.s32.totalorder %s132, %s134
      %p141 = scmp.eq.s32.totalorder %s33, 3
      %p142 = por %p140, %p141
      %p143 = scmp.ne.s32.totalorder %s134, %s135
      %p144 = scmp.eq.s32.totalorder %s33, 0
      %p145 = por %p143, %p144
      %p146 = scmp.ne.s32.totalorder %s134, %s135
      %p147 = scmp.eq.s32.totalorder %s34, 3
      %p148 = por %p146, %p147
      %p150 = scmp.ne.s32.totalorder %s135, %s149
      %p151 = scmp.eq.s32.totalorder %s34, 0
      %p152 = por %p150, %p151
      %s154 = sadd.s32 %s153, 1
      %p157 = scmp.eq.s32.totalorder %s28, 3
      %p158 = scmp.ne.s32.totalorder %s153, %s155
      %p159 = scmp.eq.s32.totalorder %s28, 0
      %p160 = por %p158, %p159
      %p161 = scmp.ne.s32.totalorder %s153, %s155
      %p162 = scmp.eq.s32.totalorder %s33, 3
      %p163 = por %p161, %p162
      %p164 = scmp.ne.s32.totalorder %s155, %s156
      %p165 = scmp.eq.s32.totalorder %s33, 0
      %p166 = por %p164, %p165
      %p167 = scmp.ne.s32.totalorder %s155, %s156
      %p168 = scmp.eq.s32.totalorder %s34, 3
      %p169 = por %p167, %p168
      %p171 = scmp.ne.s32.totalorder %s156, %s170
      %p172 = scmp.eq.s32.totalorder %s34, 0
      %p173 = por %p171, %p172
      %s175 = sadd.s32 %s174, 1
      %p178 = scmp.eq.s32.totalorder %s28, 3
      %p179 = scmp.ne.s32.totalorder %s174, %s176
      %p180 = scmp.eq.s32.totalorder %s28, 0
      %p181 = por %p179, %p180
      %p182 = scmp.ne.s32.totalorder %s174, %s176
      %p183 = scmp.eq.s32.totalorder %s33, 3
      %p184 = por %p182, %p183
      %p185 = scmp.ne.s32.totalorder %s176, %s177
      %p186 = scmp.eq.s32.totalorder %s33, 0
      %p187 = por %p185, %p186
      %p188 = scmp.ne.s32.totalorder %s176, %s177
      %p189 = scmp.eq.s32.totalorder %s34, 3
      %p190 = por %p188, %p189
      %p192 = scmp.ne.s32.totalorder %s177, %s191
      %p193 = scmp.eq.s32.totalorder %s34, 0
      %p194 = por %p192, %p193
      %s196 = sadd.s32 %s195, 1
      %p199 = scmp.eq.s32.totalorder %s28, 3
      %p200 = scmp.ne.s32.totalorder %s195, %s197
      %p201 = scmp.eq.s32.totalorder %s28, 0
      %p202 = por %p200, %p201
      %p203 = scmp.ne.s32.totalorder %s195, %s197
      %p204 = scmp.eq.s32.totalorder %s33, 3
      %p205 = por %p203, %p204
      %p206 = scmp.ne.s32.totalorder %s197, %s198
      %p207 = scmp.eq.s32.totalorder %s33, 0
      %p208 = por %p206, %p207
      %p209 = scmp.ne.s32.totalorder %s197, %s198
      %p210 = scmp.eq.s32.totalorder %s34, 3
      %p211 = por %p209, %p210
      %p213 = scmp.ne.s32.totalorder %s198, %s212
      %p214 = scmp.eq.s32.totalorder %s34, 0
      %p215 = por %p213, %p214
      %s217 = sadd.s32 %s216, 1
      %p220 = scmp.eq.s32.totalorder %s28, 3
      %p221 = scmp.ne.s32.totalorder %s216, %s218
      %p222 = scmp.eq.s32.totalorder %s28, 0
      %p223 = por %p221, %p222
      %p224 = scmp.ne.s32.totalorder %s216, %s218
      %p225 = scmp.eq.s32.totalorder %s33, 3
      %p226 = por %p224, %p225
      %p227 = scmp.ne.s32.totalorder %s218, %s219
      %p228 = scmp.eq.s32.totalorder %s33, 0
      %p229 = por %p227, %p228
      %p230 = scmp.ne.s32.totalorder %s218, %s219
      %p231 = scmp.eq.s32.totalorder %s34, 3
      %p232 = por %p230, %p231
      %p234 = scmp.ne.s32.totalorder %s219, %s233
      %p235 = scmp.eq.s32.totalorder %s34, 0
      %p236 = por %p234, %p235
      %s238 = sadd.s32 %s237, 1
      %p241 = scmp.eq.s32.totalorder %s28, 3
      %p242 = scmp.ne.s32.totalorder %s237, %s239
      %p243 = scmp.eq.s32.totalorder %s28, 0
      %p244 = por %p242, %p243
      %p245 = scmp.ne.s32.totalorder %s237, %s239
      %p246 = scmp.eq.s32.totalorder %s33, 3
      %p247 = por %p245, %p246
      %p248 = scmp.ne.s32.totalorder %s239, %s240
      %p249 = scmp.eq.s32.totalorder %s33, 0
      %p250 = por %p248, %p249
      %p251 = scmp.ne.s32.totalorder %s239, %s240
      %p252 = scmp.eq.s32.totalorder %s34, 3
      %p253 = por %p251, %p252
      %p255 = scmp.ne.s32.totalorder %s240, %s254
      %p256 = scmp.eq.s32.totalorder %s34, 0
      %p257 = por %p255, %p256
      %s258 = ssub.s32 %s35, %s47
      %s259 = ssub.s32 %s36, %s43
      %s260 = sor.u32 %s258, %s259
      %p261 = scmp.eq.s32.totalorder %s260, 0
      %s263 = sadd.s32 %s262, 1
      %s264 = scalar_select %p261, %s262, %s263
      %p267 = pneg %p261
      %p268 = scmp.eq.s32.totalorder %s28, 3
      %p269 = por %p267, %p268
      %p270 = scmp.ne.s32.totalorder %s262, %s265
      %p271 = scmp.eq.s32.totalorder %s28, 0
      %p272 = por %p270, %p271
      %p273 = scmp.ne.s32.totalorder %s262, %s265
      %p274 = scmp.eq.s32.totalorder %s33, 3
      %p275 = por %p273, %p274
      %p276 = scmp.ne.s32.totalorder %s265, %s266
      %p277 = scmp.eq.s32.totalorder %s33, 0
      %p278 = por %p276, %p277
      %p279 = scmp.ne.s32.totalorder %s265, %s266
      %p280 = scmp.eq.s32.totalorder %s34, 3
      %p281 = por %p279, %p280
      %p283 = scmp.ne.s32.totalorder %s266, %s282
      %p284 = scmp.eq.s32.totalorder %s34, 0
      %p285 = por %p283, %p284
      %p286 = scmp.le.s32.totalorder 1, %s28
      %p287 = scmp.lt.s32.totalorder %s28, 5
      %p288 = pnand %p286, %p287
      %p289 = pneg %p288
      // Predicated region
      $region9: #{tpu_custom_call.1} parent=5 // pred_check
        _
      $region10: #{tpu_custom_call.1} parent=5 // pred_check_branch
        %291 = sbr.rel (%p288) target = $region12
      $region11: #{tpu_custom_call.1} parent=5 // pred_region
        %s292 = ssub.s32 %s28, 1
        // Predicated region
        $region13: #{tpu_custom_call.1} parent=11 // pred_check
          %p293 = pneg %p145
        $region14: #{tpu_custom_call.1} parent=11 // pred_check_branch
          %295 = sbr.rel (%p293) target = $region16
        $region15: #{tpu_custom_call.1} parent=11 // pred_region
          %s297 = ssub.s32 768, 768
          %298 = vsyncadd [#allocation10], %s297
          %s299 = sshll.u32 [#allocation9], 4
          %s300 = int_to_ptr.vmem [resolvable:$true] %s299
          %305 = dma.hbm_to_vmem [thread:$0]  %s3, 768, %s300, [#allocation10], 128, 128, 8
        $region16: #{tpu_custom_call.1} parent=11 // pred_fallthru
          _
        // Predicated region
        $region17: #{tpu_custom_call.1} parent=11 // pred_check
          %p306 = pneg %p166
        $region18: #{tpu_custom_call.1} parent=11 // pred_check_branch
          %308 = sbr.rel (%p306) target = $region20
        $region19: #{tpu_custom_call.1} parent=11 // pred_region
          %s310 = ssub.s32 256, 256
          %311 = vsyncadd [#allocation10], %s310
          %s312 = sshll.u32 [#allocation11], 4
          %s313 = int_to_ptr.vmem [resolvable:$true] %s312
          %318 = dma.hbm_to_vmem [thread:$0]  %s4, 256, %s313, [#allocation10], 128, 128, 8
        $region20: #{tpu_custom_call.1} parent=11 // pred_fallthru
          _
        // Predicated region
        $region21: #{tpu_custom_call.1} parent=11 // pred_check
          %p319 = pneg %p187
        $region22: #{tpu_custom_call.1} parent=11 // pred_check_branch
          %321 = sbr.rel (%p319) target = $region24
        $region23: #{tpu_custom_call.1} parent=11 // pred_region
          %s323 = ssub.s32 256, 256
          %324 = vsyncadd [#allocation13], %s323
          %s325 = sshll.u32 [#allocation12], 4
          %s326 = int_to_ptr.vmem [resolvable:$true] %s325
          %331 = dma.hbm_to_vmem [thread:$0]  %s5, 256, %s326, [#allocation13], 128, 128, 8
        $region24: #{tpu_custom_call.1} parent=11 // pred_fallthru
          _
        // Predicated region
        $region25: #{tpu_custom_call.1} parent=11 // pred_check
          %p332 = pneg %p208
        $region26: #{tpu_custom_call.1} parent=11 // pred_check_branch
          %334 = sbr.rel (%p332) target = $region28
        $region27: #{tpu_custom_call.1} parent=11 // pred_region
          %s336 = ssub.s32 256, 256
          %337 = vsyncadd [#allocation13], %s336
          %s338 = sshll.u32 [#allocation14], 4
          %s339 = int_to_ptr.vmem [resolvable:$true] %s338
          %344 = dma.hbm_to_vmem [thread:$0]  %s6, 256, %s339, [#allocation13], 128, 128, 8
        $region28: #{tpu_custom_call.1} parent=11 // pred_fallthru
          _
        // Predicated region
        $region29: #{tpu_custom_call.1} parent=11 // pred_check
          %p345 = pneg %p229
        $region30: #{tpu_custom_call.1} parent=11 // pred_check_branch
          %347 = sbr.rel (%p345) target = $region32
        $region31: #{tpu_custom_call.1} parent=11 // pred_region
          %s349 = ssub.s32 16, 16
          %350 = vsyncadd [#allocation5], %s349
          %s352 = sshll.u32 %s7, 4
          %s353 = int_to_ptr.vmem [resolvable:$true] %s352
          %355 = dma.vmem_to_smem %s353, 16, [#allocation15], [#allocation5]
        $region32: #{tpu_custom_call.1} parent=11 // pred_fallthru
          _
        // Predicated region
        $region33: #{tpu_custom_call.1} parent=11 // pred_check
          %p356 = pneg %p250
        $region34: #{tpu_custom_call.1} parent=11 // pred_check_branch
          %358 = sbr.rel (%p356) target = $region36
        $region35: #{tpu_custom_call.1} parent=11 // pred_region
          %s360 = ssub.s32 16, 16
          %361 = vsyncadd [#allocation17], %s360
          %s363 = sshll.u32 %s8, 4
          %s364 = int_to_ptr.vmem [resolvable:$true] %s363
          %366 = dma.vmem_to_smem %s364, 16, [#allocation16], [#allocation17]
        $region36: #{tpu_custom_call.1} parent=11 // pred_fallthru
          _
      $region12: #{tpu_custom_call.1} parent=5 // pred_fallthru
        _
      %p367 = scmp.lt.s32.totalorder %s28, 4
      // Predicated region
      $region37: #{tpu_custom_call.1} parent=5 // pred_check
        %p368 = pneg %p367
      $region38: #{tpu_custom_call.1} parent=5 // pred_check_branch
        %370 = sbr.rel (%p368) target = $region40
      $region39: #{tpu_custom_call.1} parent=5 // pred_region
        // Predicated region
        $region41: #{tpu_custom_call.1} parent=39 // pred_check
          %p371 = pneg %p62
        $region42: #{tpu_custom_call.1} parent=39 // pred_check_branch
          %373 = sbr.rel (%p371) target = $region44
        $region43: #{tpu_custom_call.1} parent=39 // pred_region
          %s374 = sand.u32 %s52, 1
          %s375 = scalar_lea.sflag [#allocation3], %s374
          %s376 = sand.u32 %s52, 1
          %s377 = smul.addr %s376, 64
          %s378 = scalar_lea.vmem [#allocation2], %s377
          %s379 = smul.u32 2, %s36
          %s381 = ssub.s32 1024, 1024
          %382 = vsyncadd %s375, %s381
          %s383 = smul.addr %s379, 4
          %s384 = smul.addr %s35, 16
          %s385 = sadd.s32 %s383, %s384
          %s386 = smul.addr %s385, 128
          %s387 = scalar_lea.hbm %s0, %s386
          %s388 = sshll.u32 %s378, 4
          %s389 = int_to_ptr.vmem [resolvable:$true] %s388
          %394 = dma.hbm_to_vmem [thread:$0]  %s387, 1024, %s389, %s375, 128, 128, 8
        $region44: #{tpu_custom_call.1} parent=39 // pred_fallthru
          _
        // Predicated region
        $region45: #{tpu_custom_call.1} parent=39 // pred_check
          %p395 = pneg %p90
        $region46: #{tpu_custom_call.1} parent=39 // pred_check_branch
          %397 = sbr.rel (%p395) target = $region48
        $region47: #{tpu_custom_call.1} parent=39 // pred_region
          %s398 = sand.u32 %s28, 1
          %s399 = scalar_lea.sflag [#allocation7], %s398
          %s400 = sand.u32 %s80, 1
          %s401 = smul.addr %s400, 32
          %s402 = scalar_lea.vmem [#allocation6], %s401
          %s403 = smul.u32 2, %s36
          %s405 = ssub.s32 512, 512
          %406 = vsyncadd %s399, %s405
          %s407 = smul.addr %s403, 2
          %s408 = smul.addr %s35, 8
          %s409 = sadd.s32 %s407, %s408
          %s410 = smul.addr %s409, 128
          %s411 = scalar_lea.hbm %s1, %s410
          %s412 = sshll.u32 %s402, 4
          %s413 = int_to_ptr.vmem [resolvable:$true] %s412
          %418 = dma.hbm_to_vmem [thread:$0]  %s411, 512, %s413, %s399, 128, 128, 8
        $region48: #{tpu_custom_call.1} parent=39 // pred_fallthru
          _
        // Predicated region
        $region49: #{tpu_custom_call.1} parent=39 // pred_check
          %p419 = pneg %p118
        $region50: #{tpu_custom_call.1} parent=39 // pred_check_branch
          %421 = sbr.rel (%p419) target = $region52
        $region51: #{tpu_custom_call.1} parent=39 // pred_region
          %s422 = sand.u32 %s28, 1
          %s423 = scalar_lea.sflag [#allocation7], %s422
          %s424 = sand.u32 %s108, 1
          %s425 = smul.addr %s424, 32
          %s426 = scalar_lea.vmem [#allocation8], %s425
          %s427 = smul.u32 2, %s36
          %s429 = ssub.s32 512, 512
          %430 = vsyncadd %s423, %s429
          %s431 = smul.addr %s427, 2
          %s432 = smul.addr %s35, 8
          %s433 = sadd.s32 %s431, %s432
          %s434 = smul.addr %s433, 128
          %s435 = scalar_lea.hbm %s2, %s434
          %s436 = sshll.u32 %s426, 4
          %s437 = int_to_ptr.vmem [resolvable:$true] %s436
          %442 = dma.hbm_to_vmem [thread:$0]  %s435, 512, %s437, %s423, 128, 128, 8
        $region52: #{tpu_custom_call.1} parent=39 // pred_fallthru
          _
      $region40: #{tpu_custom_call.1} parent=5 // pred_fallthru
        _
      %p443 = scmp.le.s32.totalorder 1, %s28
      %p444 = scmp.lt.s32.totalorder %s28, 5
      %p445 = pnand %p443, %p444
      %p446 = pneg %p445
      // Predicated region
      $region53: #{tpu_custom_call.1} parent=5 // pred_check
        _
      $region54: #{tpu_custom_call.1} parent=5 // pred_check_branch
        %448 = sbr.rel (%p445) target = $region56
      $region55: #{tpu_custom_call.1} parent=5 // pred_region
        %s449 = ssub.s32 %s28, 1
        %s450 = sand.u32 %s55, 1
        %s451 = scalar_lea.sflag [#allocation3], %s450
        %s452 = sand.u32 %s55, 1
        %s453 = smul.addr %s452, 64
        %s454 = scalar_lea.vmem [#allocation2], %s453
        // Predicated region
        $region57: #{tpu_custom_call.1} parent=55 // pred_check
          %p455 = pneg %p68
        $region58: #{tpu_custom_call.1} parent=55 // pred_check_branch
          %457 = sbr.rel (%p455) target = $region60
        $region59: #{tpu_custom_call.1} parent=55 // pred_region
          %458 = dma.done %s451, 1024
        $region60: #{tpu_custom_call.1} parent=55 // pred_fallthru
          _
        %s459 = sand.u32 %s33, 1
        %s460 = scalar_lea.sflag [#allocation7], %s459
        %s461 = sand.u32 %s83, 1
        %s462 = smul.addr %s461, 32
        %s463 = scalar_lea.vmem [#allocation6], %s462
        // Predicated region
        $region61: #{tpu_custom_call.1} parent=55 // pred_check
          %p464 = pneg %p96
        $region62: #{tpu_custom_call.1} parent=55 // pred_check_branch
          %466 = sbr.rel (%p464) target = $region64
        $region63: #{tpu_custom_call.1} parent=55 // pred_region
          %467 = dma.done %s460, 512
        $region64: #{tpu_custom_call.1} parent=55 // pred_fallthru
          _
        %s468 = sand.u32 %s33, 1
        %s469 = scalar_lea.sflag [#allocation7], %s468
        %s470 = sand.u32 %s111, 1
        %s471 = smul.addr %s470, 32
        %s472 = scalar_lea.vmem [#allocation8], %s471
        // Predicated region
        $region65: #{tpu_custom_call.1} parent=55 // pred_check
          %p473 = pneg %p124
        $region66: #{tpu_custom_call.1} parent=55 // pred_check_branch
          %475 = sbr.rel (%p473) target = $region68
        $region67: #{tpu_custom_call.1} parent=55 // pred_region
          %476 = dma.done %s469, 512
        $region68: #{tpu_custom_call.1} parent=55 // pred_fallthru
          _
        // Predicated region
        $region69: #{tpu_custom_call.1} parent=55 // pred_check
          %p477 = pneg %p145
        $region70: #{tpu_custom_call.1} parent=55 // pred_check_branch
          %479 = sbr.rel (%p477) target = $region72
        $region71: #{tpu_custom_call.1} parent=55 // pred_region
          %480 = dma.done [#allocation10], 768
        $region72: #{tpu_custom_call.1} parent=55 // pred_fallthru
          _
        // Predicated region
        $region73: #{tpu_custom_call.1} parent=55 // pred_check
          %p481 = pneg %p166
        $region74: #{tpu_custom_call.1} parent=55 // pred_check_branch
          %483 = sbr.rel (%p481) target = $region76
        $region75: #{tpu_custom_call.1} parent=55 // pred_region
          %484 = dma.done [#allocation10], 256
        $region76: #{tpu_custom_call.1} parent=55 // pred_fallthru
          _
        // Predicated region
        $region77: #{tpu_custom_call.1} parent=55 // pred_check
          %p485 = pneg %p187
        $region78: #{tpu_custom_call.1} parent=55 // pred_check_branch
          %487 = sbr.rel (%p485) target = $region80
        $region79: #{tpu_custom_call.1} parent=55 // pred_region
          %488 = dma.done [#allocation13], 256
        $region80: #{tpu_custom_call.1} parent=55 // pred_fallthru
          _
        // Predicated region
        $region81: #{tpu_custom_call.1} parent=55 // pred_check
          %p489 = pneg %p208
        $region82: #{tpu_custom_call.1} parent=55 // pred_check_branch
          %491 = sbr.rel (%p489) target = $region84
        $region83: #{tpu_custom_call.1} parent=55 // pred_region
          %492 = dma.done [#allocation13], 256
        $region84: #{tpu_custom_call.1} parent=55 // pred_fallthru
          _
        // Predicated region
        $region85: #{tpu_custom_call.1} parent=55 // pred_check
          %p493 = pneg %p229
        $region86: #{tpu_custom_call.1} parent=55 // pred_check_branch
          %495 = sbr.rel (%p493) target = $region88
        $region87: #{tpu_custom_call.1} parent=55 // pred_region
          %496 = dma.done [#allocation5], 16
        $region88: #{tpu_custom_call.1} parent=55 // pred_fallthru
          _
        // Predicated region
        $region89: #{tpu_custom_call.1} parent=55 // pred_check
          %p497 = pneg %p250
        $region90: #{tpu_custom_call.1} parent=55 // pred_check_branch
          %499 = sbr.rel (%p497) target = $region92
        $region91: #{tpu_custom_call.1} parent=55 // pred_region
          %500 = dma.done [#allocation17], 16
        $region92: #{tpu_custom_call.1} parent=55 // pred_fallthru
          _
        %501 = sfence
        %s502 = sand.u32 %s55, 1
        %s503 = scalar_lea.sflag [#allocation3], %s502
        %s504 = sand.u32 %s55, 1
        %s505 = smul.addr %s504, 64
        %s506 = scalar_lea.vmem [#allocation2], %s505
        %p507 = pneg %p68
        %p508 = pneg %p65
        %s509 = sand.u32 %s33, 1
        %s510 = scalar_lea.sflag [#allocation7], %s509
        %s511 = sand.u32 %s83, 1
        %s512 = smul.addr %s511, 32
        %s513 = scalar_lea.vmem [#allocation6], %s512
        %p514 = pneg %p96
        %p515 = pneg %p93
        %s516 = sand.u32 %s33, 1
        %s517 = scalar_lea.sflag [#allocation7], %s516
        %s518 = sand.u32 %s111, 1
        %s519 = smul.addr %s518, 32
        %s520 = scalar_lea.vmem [#allocation8], %s519
        %p521 = pneg %p124
        %p522 = pneg %p121
        %p523 = pneg %p145
        %p524 = pneg %p142
        %p525 = pneg %p166
        %p526 = pneg %p163
        %p527 = pneg %p187
        %p528 = pneg %p184
        %p529 = pneg %p208
        %p530 = pneg %p205
        %p531 = pneg %p229
        %p532 = pneg %p226
        %p533 = pneg %p250
        %p534 = pneg %p247
        %p535 = pneg %p278
        %p536 = pneg %p275
        %s537 = sand.u32 %s265, 1
        %s538 = scalar_lea.sflag [#allocation4], %s537
        %s539 = sand.u32 %s265, 1
        %s540 = smul.addr %s539, 64
        %s541 = scalar_lea.vmem [#allocation18], %s540
        %s542 = smul.u32 2, %s38
        %s543 = smul.u32 2, %s38
        %s544 = smul.u32 2, %s38
        %s545 = smul.u32 2, %s38
        %v546 = vld [vmem:[%s472] sm:$0xff]
        %v547 = vld [vmem:[%s472 + $0x8] sm:$0xff]
        %v548 = vld [vmem:[%s472 + $0x10] sm:$0xff]
        %v549 = vld [vmem:[%s472 + $0x18] sm:$0xff]
        %v550 = vld [vmem:[%s463] sm:$0xff]
        %v551 = vld [vmem:[%s463 + $0x8] sm:$0xff]
        %v552 = vld [vmem:[%s463 + $0x10] sm:$0xff]
        %v553 = vld [vmem:[%s463 + $0x18] sm:$0xff]
        %v554 = vmul.f32 %v546, %v550
        %v555 = vmul.f32 %v547, %v551
        %v556 = vmul.f32 %v548, %v552
        %v557 = vmul.f32 %v549, %v553
        %v558 = vmul.f32 %v550, %v550
        %v559 = vmul.f32 %v551, %v551
        %v560 = vmul.f32 %v552, %v552
        %v561 = vmul.f32 %v553, %v553
        %v562 = vld [vmem:[#allocation11] sm:$0xff]
        %v563 = vld [vmem:[#allocation11 + $0x8] sm:$0xff]
        %vm564 = vcmask 130048
        %v566 = vsel %vm564, %v546, 0
        %v569 = vsel %vm564, %v547, 0
        %v572 = vsel %vm564, %v548, 0
        %v575 = vsel %vm564, %v549, 0
        %v578 = vsel %vm564, %v550, 0
        %v581 = vsel %vm564, %v551, 0
        %v584 = vsel %vm564, %v552, 0
        %v587 = vsel %vm564, %v553, 0
        %v590 = vsel %vm564, %v554, 0
        %v593 = vsel %vm564, %v555, 0
        %v596 = vsel %vm564, %v556, 0
        %v599 = vsel %vm564, %v557, 0
        %v602 = vsel %vm564, %v558, 0
        %v605 = vsel %vm564, %v559, 0
        %v608 = vsel %vm564, %v560, 0
        %v611 = vsel %vm564, %v561, 0
        %613 = vmatprep.subr.mxu0 0.0
        %614 = vmatpush1.msra.mxu0 0.0
        %615 = vmatprep.subr.mxu0 0.0
        %616 = vmatpush1.msra.mxu0 0.0
        %617 = vmatprep.subr.mxu0 0.0
        %618 = vmatpush1.msra.mxu0 0.0
        %619 = vmatprep.subr.mxu0 0.0
        %620 = vmatpush1.msra.mxu0 0.0
        %621 = vmatprep.subr.mxu0 0.0
        %622 = vmatpush1.msra.mxu0 0.0
        %623 = vmatprep.subr.mxu0 0.0
        %624 = vmatpush1.msra.mxu0 0.0
        %625 = vmatprep.subr.mxu0 0.0
        %626 = vmatpush1.msra.mxu0 0.0
        %627 = vmatprep.subr.mxu0 0.0
        %628 = vmatpush1.msra.mxu0 0.0
        %629 = vmatprep.subr.mxu0 0.0
        %630 = vmatpush1.msra.mxu0 0.0
        %631 = vmatprep.subr.mxu0 0.0
        %632 = vmatpush1.msra.mxu0 0.0
        %633 = vmatprep.subr.mxu0 0.0
        %634 = vmatpush1.msra.mxu0 0.0
        %635 = vmatprep.subr.mxu0 0.0
        %636 = vmatpush1.msra.mxu0 0.0
        %637 = vmatprep.subr.mxu0 0.0
        %638 = vmatpush1.msra.mxu0 0.0
        %639 = vmatprep.subr.mxu0 0.0
        %640 = vmatpush1.msra.mxu0 0.0
        %641 = vmatprep.subr.mxu0 0.0
        %642 = vmatpush1.msra.mxu0 %v563
        %643 = vmatprep.subr.mxu0 0.0
        %644 = vmatpush1.msra.mxu0 %v562
        %645 = vmatprep.subr.mxu0 0.0
        %646 = vmatpush2.msra.mxu0 0.0
        %647 = vmatprep.subr.mxu0 0.0
        %648 = vmatpush2.msra.mxu0 0.0
        %649 = vmatprep.subr.mxu0 0.0
        %650 = vmatpush2.msra.mxu0 0.0
        %651 = vmatprep.subr.mxu0 0.0
        %652 = vmatpush2.msra.mxu0 0.0
        %653 = vmatprep.subr.mxu0 0.0
        %654 = vmatpush2.msra.mxu0 0.0
        %655 = vmatprep.subr.mxu0 0.0
        %656 = vmatpush2.msra.mxu0 0.0
        %657 = vmatprep.subr.mxu0 0.0
        %658 = vmatpush2.msra.mxu0 0.0
        %659 = vmatprep.subr.mxu0 0.0
        %660 = vmatpush2.msra.mxu0 0.0
        %661 = vmatprep.subr.mxu0 0.0
        %662 = vmatpush2.msra.mxu0 0.0
        %663 = vmatprep.subr.mxu0 0.0
        %664 = vmatpush2.msra.mxu0 0.0
        %665 = vmatprep.subr.mxu0 0.0
        %666 = vmatpush2.msra.mxu0 0.0
        %667 = vmatprep.subr.mxu0 0.0
        %668 = vmatpush2.msra.mxu0 0.0
        %669 = vmatprep.subr.mxu0 0.0
        %670 = vmatpush2.msra.mxu0 0.0
        %671 = vmatprep.subr.mxu0 0.0
        %672 = vmatpush2.msra.mxu0 0.0
        %673 = vmatprep.subr.mxu0 0.0
        %674 = vmatpush2.msra.mxu0 0.0
        %675 = vmatprep.subr.mxu0 0.0
        %676 = vmatpush2.msra.mxu0 0.0
        %677 = vmatprep.mubr.f32.mxu0 0.0
        %678 = vmatmul.mubr.f32.gmra.mxu0 %v566
        %v679 = vpop.f32.mrf.mxu0
        %v680 = vadd.f32 0.0, %v679
        %v681 = vpop.f32.mrf.mxu0
        %682 = vmatprep.mubr.f32.mxu0 0.0
        %683 = vmatmul.mubr.f32.gmra.mxu0 %v569
        %v684 = vpop.f32.mrf.mxu0
        %v685 = vadd.f32 0.0, %v684
        %v686 = vpop.f32.mrf.mxu0
        %687 = vmatprep.mubr.f32.mxu0 0.0
        %688 = vmatmul.mubr.f32.gmra.mxu0 %v572
        %v689 = vpop.f32.mrf.mxu0
        %v690 = vadd.f32 0.0, %v689
        %v691 = vpop.f32.mrf.mxu0
        %692 = vmatprep.mubr.f32.mxu0 0.0
        %693 = vmatmul.mubr.f32.gmra.mxu0 %v575
        %v694 = vpop.f32.mrf.mxu0
        %v695 = vadd.f32 0.0, %v694
        %v696 = vpop.f32.mrf.mxu0
        %697 = vmatprep.mubr.f32.mxu0 0.0
        %698 = vmatmul.mubr.f32.gmra.mxu0 %v578
        %v699 = vpop.f32.mrf.mxu0
        %v700 = vadd.f32 0.0, %v699
        %v701 = vpop.f32.mrf.mxu0
        %702 = vmatprep.mubr.f32.mxu0 0.0
        %703 = vmatmul.mubr.f32.gmra.mxu0 %v581
        %v704 = vpop.f32.mrf.mxu0
        %v705 = vadd.f32 0.0, %v704
        %v706 = vpop.f32.mrf.mxu0
        %707 = vmatprep.mubr.f32.mxu0 0.0
        %708 = vmatmul.mubr.f32.gmra.mxu0 %v584
        %v709 = vpop.f32.mrf.mxu0
        %v710 = vadd.f32 0.0, %v709
        %v711 = vpop.f32.mrf.mxu0
        %712 = vmatprep.mubr.f32.mxu0 0.0
        %713 = vmatmul.mubr.f32.gmra.mxu0 %v587
        %v714 = vpop.f32.mrf.mxu0
        %v715 = vadd.f32 0.0, %v714
        %v716 = vpop.f32.mrf.mxu0
        %717 = vmatprep.mubr.f32.mxu0 0.0
        %718 = vmatmul.mubr.f32.gmra.mxu0 %v590
        %v719 = vpop.f32.mrf.mxu0
        %v720 = vadd.f32 0.0, %v719
        %v721 = vpop.f32.mrf.mxu0
        %722 = vmatprep.mubr.f32.mxu0 0.0
        %723 = vmatmul.mubr.f32.gmra.mxu0 %v593
        %v724 = vpop.f32.mrf.mxu0
        %v725 = vadd.f32 0.0, %v724
        %v726 = vpop.f32.mrf.mxu0
        %727 = vmatprep.mubr.f32.mxu0 0.0
        %728 = vmatmul.mubr.f32.gmra.mxu0 %v596
        %v729 = vpop.f32.mrf.mxu0
        %v730 = vadd.f32 0.0, %v729
        %v731 = vpop.f32.mrf.mxu0
        %732 = vmatprep.mubr.f32.mxu0 0.0
        %733 = vmatmul.mubr.f32.gmra.mxu0 %v599
        %v734 = vpop.f32.mrf.mxu0
        %v735 = vadd.f32 0.0, %v734
        %v736 = vpop.f32.mrf.mxu0
        %737 = vmatprep.mubr.f32.mxu0 0.0
        %738 = vmatmul.mubr.f32.gmra.mxu0 %v602
        %v739 = vpop.f32.mrf.mxu0
        %v740 = vadd.f32 0.0, %v739
        %v741 = vpop.f32.mrf.mxu0
        %742 = vmatprep.mubr.f32.mxu0 0.0
        %743 = vmatmul.mubr.f32.gmra.mxu0 %v605
        %v744 = vpop.f32.mrf.mxu0
        %v745 = vadd.f32 0.0, %v744
        %v746 = vpop.f32.mrf.mxu0
        %747 = vmatprep.mubr.f32.mxu0 0.0
        %748 = vmatmul.mubr.f32.gmra.mxu0 %v608
        %v749 = vpop.f32.mrf.mxu0
        %v750 = vadd.f32 0.0, %v749
        %v751 = vpop.f32.mrf.mxu0
        %752 = vmatprep.mubr.f32.mxu0 0.0
        %753 = vmatmul.mubr.f32.gmra.mxu0 %v611
        %v754 = vpop.f32.mrf.mxu0
        %v755 = vadd.f32 0.0, %v754
        %v756 = vpop.f32.mrf.mxu0
        %757 = vdwg.mxu0
        %758 = vxpose.xlu0.b32.start [1/16] %v680, 128
        %759 = vxpose.xlu0.b32.cont [2/16] %v685, 128
        %760 = vxpose.xlu0.b32.cont [3/16] 0.0, 128
        %761 = vxpose.xlu0.b32.cont [4/16] 0.0, 128
        %762 = vxpose.xlu0.b32.cont [5/16] 0.0, 128
        %763 = vxpose.xlu0.b32.cont [6/16] 0.0, 128
        %764 = vxpose.xlu0.b32.cont [7/16] 0.0, 128
        %765 = vxpose.xlu0.b32.cont [8/16] 0.0, 128
        %766 = vxpose.xlu0.b32.cont [9/16] 0.0, 128
        %767 = vxpose.xlu0.b32.cont [10/16] 0.0, 128
        %768 = vxpose.xlu0.b32.cont [11/16] 0.0, 128
        %769 = vxpose.xlu0.b32.cont [12/16] 0.0, 128
        %770 = vxpose.xlu0.b32.cont [13/16] 0.0, 128
        %771 = vxpose.xlu0.b32.cont [14/16] 0.0, 128
        %772 = vxpose.xlu0.b32.cont [15/16] 0.0, 128
        %773 = vxpose.xlu0.b32.end [16/16] 0.0, 128
        %v774 = vpop.trf.xlu0
        %v775 = vpop.trf.xlu0
        %v776 = vpop.trf.xlu0
        %v777 = vpop.trf.xlu0
        %v778 = vpop.trf.xlu0
        %v779 = vpop.trf.xlu0
        %v780 = vpop.trf.xlu0
        %v781 = vpop.trf.xlu0
        %v782 = vpop.trf.xlu0
        %v783 = vpop.trf.xlu0
        %v784 = vpop.trf.xlu0
        %v785 = vpop.trf.xlu0
        %v786 = vpop.trf.xlu0
        %v787 = vpop.trf.xlu0
        %v788 = vpop.trf.xlu0
        %v789 = vpop.trf.xlu0
        %790 = vxpose.xlu0.b32.start [1/16] %v690, 128
        %791 = vxpose.xlu0.b32.cont [2/16] %v695, 128
        %792 = vxpose.xlu0.b32.cont [3/16] 0.0, 128
        %793 = vxpose.xlu0.b32.cont [4/16] 0.0, 128
        %794 = vxpose.xlu0.b32.cont [5/16] 0.0, 128
        %795 = vxpose.xlu0.b32.cont [6/16] 0.0, 128
        %796 = vxpose.xlu0.b32.cont [7/16] 0.0, 128
        %797 = vxpose.xlu0.b32.cont [8/16] 0.0, 128
        %798 = vxpose.xlu0.b32.cont [9/16] 0.0, 128
        %799 = vxpose.xlu0.b32.cont [10/16] 0.0, 128
        %800 = vxpose.xlu0.b32.cont [11/16] 0.0, 128
        %801 = vxpose.xlu0.b32.cont [12/16] 0.0, 128
        %802 = vxpose.xlu0.b32.cont [13/16] 0.0, 128
        %803 = vxpose.xlu0.b32.cont [14/16] 0.0, 128
        %804 = vxpose.xlu0.b32.cont [15/16] 0.0, 128
        %805 = vxpose.xlu0.b32.end [16/16] 0.0, 128
        %v806 = vpop.trf.xlu0
        %v807 = vpop.trf.xlu0
        %v808 = vpop.trf.xlu0
        %v809 = vpop.trf.xlu0
        %v810 = vpop.trf.xlu0
        %v811 = vpop.trf.xlu0
        %v812 = vpop.trf.xlu0
        %v813 = vpop.trf.xlu0
        %v814 = vpop.trf.xlu0
        %v815 = vpop.trf.xlu0
        %v816 = vpop.trf.xlu0
        %v817 = vpop.trf.xlu0
        %v818 = vpop.trf.xlu0
        %v819 = vpop.trf.xlu0
        %v820 = vpop.trf.xlu0
        %v821 = vpop.trf.xlu0
        %822 = vxpose.xlu0.b32.start [1/16] %v700, 128
        %823 = vxpose.xlu0.b32.cont [2/16] %v705, 128
        %824 = vxpose.xlu0.b32.cont [3/16] 0.0, 128
        %825 = vxpose.xlu0.b32.cont [4/16] 0.0, 128
        %826 = vxpose.xlu0.b32.cont [5/16] 0.0, 128
        %827 = vxpose.xlu0.b32.cont [6/16] 0.0, 128
        %828 = vxpose.xlu0.b32.cont [7/16] 0.0, 128
        %829 = vxpose.xlu0.b32.cont [8/16] 0.0, 128
        %830 = vxpose.xlu0.b32.cont [9/16] 0.0, 128
        %831 = vxpose.xlu0.b32.cont [10/16] 0.0, 128
        %832 = vxpose.xlu0.b32.cont [11/16] 0.0, 128
        %833 = vxpose.xlu0.b32.cont [12/16] 0.0, 128
        %834 = vxpose.xlu0.b32.cont [13/16] 0.0, 128
        %835 = vxpose.xlu0.b32.cont [14/16] 0.0, 128
        %836 = vxpose.xlu0.b32.cont [15/16] 0.0, 128
        %837 = vxpose.xlu0.b32.end [16/16] 0.0, 128
        %v838 = vpop.trf.xlu0
        %v839 = vpop.trf.xlu0
        %v840 = vpop.trf.xlu0
        %v841 = vpop.trf.xlu0
        %v842 = vpop.trf.xlu0
        %v843 = vpop.trf.xlu0
        %v844 = vpop.trf.xlu0
        %v845 = vpop.trf.xlu0
        %v846 = vpop.trf.xlu0
        %v847 = vpop.trf.xlu0
        %v848 = vpop.trf.xlu0
        %v849 = vpop.trf.xlu0
        %v850 = vpop.trf.xlu0
        %v851 = vpop.trf.xlu0
        %v852 = vpop.trf.xlu0
        %v853 = vpop.trf.xlu0
        %854 = vxpose.xlu0.b32.start [1/16] %v710, 128
        %855 = vxpose.xlu0.b32.cont [2/16] %v715, 128
        %856 = vxpose.xlu0.b32.cont [3/16] 0.0, 128
        %857 = vxpose.xlu0.b32.cont [4/16] 0.0, 128
        %858 = vxpose.xlu0.b32.cont [5/16] 0.0, 128
        %859 = vxpose.xlu0.b32.cont [6/16] 0.0, 128
        %860 = vxpose.xlu0.b32.cont [7/16] 0.0, 128
        %861 = vxpose.xlu0.b32.cont [8/16] 0.0, 128
        %862 = vxpose.xlu0.b32.cont [9/16] 0.0, 128
        %863 = vxpose.xlu0.b32.cont [10/16] 0.0, 128
        %864 = vxpose.xlu0.b32.cont [11/16] 0.0, 128
        %865 = vxpose.xlu0.b32.cont [12/16] 0.0, 128
        %866 = vxpose.xlu0.b32.cont [13/16] 0.0, 128
        %867 = vxpose.xlu0.b32.cont [14/16] 0.0, 128
        %868 = vxpose.xlu0.b32.cont [15/16] 0.0, 128
        %869 = vxpose.xlu0.b32.end [16/16] 0.0, 128
        %v870 = vpop.trf.xlu0
        %v871 = vpop.trf.xlu0
        %v872 = vpop.trf.xlu0
        %v873 = vpop.trf.xlu0
        %v874 = vpop.trf.xlu0
        %v875 = vpop.trf.xlu0
        %v876 = vpop.trf.xlu0
        %v877 = vpop.trf.xlu0
        %v878 = vpop.trf.xlu0
        %v879 = vpop.trf.xlu0
        %v880 = vpop.trf.xlu0
        %v881 = vpop.trf.xlu0
        %v882 = vpop.trf.xlu0
        %v883 = vpop.trf.xlu0
        %v884 = vpop.trf.xlu0
        %v885 = vpop.trf.xlu0
        %886 = vxpose.xlu0.b32.start [1/16] %v720, 128
        %887 = vxpose.xlu0.b32.cont [2/16] %v725, 128
        %888 = vxpose.xlu0.b32.cont [3/16] 0.0, 128
        %889 = vxpose.xlu0.b32.cont [4/16] 0.0, 128
        %890 = vxpose.xlu0.b32.cont [5/16] 0.0, 128
        %891 = vxpose.xlu0.b32.cont [6/16] 0.0, 128
        %892 = vxpose.xlu0.b32.cont [7/16] 0.0, 128
        %893 = vxpose.xlu0.b32.cont [8/16] 0.0, 128
        %894 = vxpose.xlu0.b32.cont [9/16] 0.0, 128
        %895 = vxpose.xlu0.b32.cont [10/16] 0.0, 128
        %896 = vxpose.xlu0.b32.cont [11/16] 0.0, 128
        %897 = vxpose.xlu0.b32.cont [12/16] 0.0, 128
        %898 = vxpose.xlu0.b32.cont [13/16] 0.0, 128
        %899 = vxpose.xlu0.b32.cont [14/16] 0.0, 128
        %900 = vxpose.xlu0.b32.cont [15/16] 0.0, 128
        %901 = vxpose.xlu0.b32.end [16/16] 0.0, 128
        %v902 = vpop.trf.xlu0
        %v903 = vpop.trf.xlu0
        %v904 = vpop.trf.xlu0
        %v905 = vpop.trf.xlu0
        %v906 = vpop.trf.xlu0
        %v907 = vpop.trf.xlu0
        %v908 = vpop.trf.xlu0
        %v909 = vpop.trf.xlu0
        %v910 = vpop.trf.xlu0
        %v911 = vpop.trf.xlu0
        %v912 = vpop.trf.xlu0
        %v913 = vpop.trf.xlu0
        %v914 = vpop.trf.xlu0
        %v915 = vpop.trf.xlu0
        %v916 = vpop.trf.xlu0
        %v917 = vpop.trf.xlu0
        %918 = vxpose.xlu0.b32.start [1/16] %v730, 128
        %919 = vxpose.xlu0.b32.cont [2/16] %v735, 128
        %920 = vxpose.xlu0.b32.cont [3/16] 0.0, 128
        %921 = vxpose.xlu0.b32.cont [4/16] 0.0, 128
        %922 = vxpose.xlu0.b32.cont [5/16] 0.0, 128
        %923 = vxpose.xlu0.b32.cont [6/16] 0.0, 128
        %924 = vxpose.xlu0.b32.cont [7/16] 0.0, 128
        %925 = vxpose.xlu0.b32.cont [8/16] 0.0, 128
        %926 = vxpose.xlu0.b32.cont [9/16] 0.0, 128
        %927 = vxpose.xlu0.b32.cont [10/16] 0.0, 128
        %928 = vxpose.xlu0.b32.cont [11/16] 0.0, 128
        %929 = vxpose.xlu0.b32.cont [12/16] 0.0, 128
        %930 = vxpose.xlu0.b32.cont [13/16] 0.0, 128
        %931 = vxpose.xlu0.b32.cont [14/16] 0.0, 128
        %932 = vxpose.xlu0.b32.cont [15/16] 0.0, 128
        %933 = vxpose.xlu0.b32.end [16/16] 0.0, 128
        %v934 = vpop.trf.xlu0
        %v935 = vpop.trf.xlu0
        %v936 = vpop.trf.xlu0
        %v937 = vpop.trf.xlu0
        %v938 = vpop.trf.xlu0
        %v939 = vpop.trf.xlu0
        %v940 = vpop.trf.xlu0
        %v941 = vpop.trf.xlu0
        %v942 = vpop.trf.xlu0
        %v943 = vpop.trf.xlu0
        %v944 = vpop.trf.xlu0
        %v945 = vpop.trf.xlu0
        %v946 = vpop.trf.xlu0
        %v947 = vpop.trf.xlu0
        %v948 = vpop.trf.xlu0
        %v949 = vpop.trf.xlu0
        %950 = vxpose.xlu0.b32.start [1/16] %v740, 128
        %951 = vxpose.xlu0.b32.cont [2/16] %v745, 128
        %952 = vxpose.xlu0.b32.cont [3/16] 0.0, 128
        %953 = vxpose.xlu0.b32.cont [4/16] 0.0, 128
        %954 = vxpose.xlu0.b32.cont [5/16] 0.0, 128
        %955 = vxpose.xlu0.b32.cont [6/16] 0.0, 128
        %956 = vxpose.xlu0.b32.cont [7/16] 0.0, 128
        %957 = vxpose.xlu0.b32.cont [8/16] 0.0, 128
        %958 = vxpose.xlu0.b32.cont [9/16] 0.0, 128
        %959 = vxpose.xlu0.b32.cont [10/16] 0.0, 128
        %960 = vxpose.xlu0.b32.cont [11/16] 0.0, 128
        %961 = vxpose.xlu0.b32.cont [12/16] 0.0, 128
        %962 = vxpose.xlu0.b32.cont [13/16] 0.0, 128
        %963 = vxpose.xlu0.b32.cont [14/16] 0.0, 128
        %964 = vxpose.xlu0.b32.cont [15/16] 0.0, 128
        %965 = vxpose.xlu0.b32.end [16/16] 0.0, 128
        %v966 = vpop.trf.xlu0
        %v967 = vpop.trf.xlu0
        %v968 = vpop.trf.xlu0
        %v969 = vpop.trf.xlu0
        %v970 = vpop.trf.xlu0
        %v971 = vpop.trf.xlu0
        %v972 = vpop.trf.xlu0
        %v973 = vpop.trf.xlu0
        %v974 = vpop.trf.xlu0
        %v975 = vpop.trf.xlu0
        %v976 = vpop.trf.xlu0
        %v977 = vpop.trf.xlu0
        %v978 = vpop.trf.xlu0
        %v979 = vpop.trf.xlu0
        %v980 = vpop.trf.xlu0
        %v981 = vpop.trf.xlu0
        %982 = vxpose.xlu0.b32.start [1/16] %v750, 128
        %983 = vxpose.xlu0.b32.cont [2/16] %v755, 128
        %984 = vxpose.xlu0.b32.cont [3/16] 0.0, 128
        %985 = vxpose.xlu0.b32.cont [4/16] 0.0, 128
        %986 = vxpose.xlu0.b32.cont [5/16] 0.0, 128
        %987 = vxpose.xlu0.b32.cont [6/16] 0.0, 128
        %988 = vxpose.xlu0.b32.cont [7/16] 0.0, 128
        %989 = vxpose.xlu0.b32.cont [8/16] 0.0, 128
        %990 = vxpose.xlu0.b32.cont [9/16] 0.0, 128
        %991 = vxpose.xlu0.b32.cont [10/16] 0.0, 128
        %992 = vxpose.xlu0.b32.cont [11/16] 0.0, 128
        %993 = vxpose.xlu0.b32.cont [12/16] 0.0, 128
        %994 = vxpose.xlu0.b32.cont [13/16] 0.0, 128
        %995 = vxpose.xlu0.b32.cont [14/16] 0.0, 128
        %996 = vxpose.xlu0.b32.cont [15/16] 0.0, 128
        %997 = vxpose.xlu0.b32.end [16/16] 0.0, 128
        %v998 = vpop.trf.xlu0
        %v999 = vpop.trf.xlu0
        %v1000 = vpop.trf.xlu0
        %v1001 = vpop.trf.xlu0
        %v1002 = vpop.trf.xlu0
        %v1003 = vpop.trf.xlu0
        %v1004 = vpop.trf.xlu0
        %v1005 = vpop.trf.xlu0
        %v1006 = vpop.trf.xlu0
        %v1007 = vpop.trf.xlu0
        %v1008 = vpop.trf.xlu0
        %v1009 = vpop.trf.xlu0
        %v1010 = vpop.trf.xlu0
        %v1011 = vpop.trf.xlu0
        %v1012 = vpop.trf.xlu0
        %v1013 = vpop.trf.xlu0
        %v1014 = vld [vmem:[#allocation9] sm:$0xff]
        %v1015 = vld [vmem:[#allocation9 + $0x8] sm:$0xff]
        %v1017 = vsel %vm564, %v774, 0
        %v1020 = vsel %vm564, %v775, 0
        %v1023 = vsel %vm564, %v806, 0
        %v1026 = vsel %vm564, %v807, 0
        %v1029 = vsel %vm564, %v838, 0
        %v1032 = vsel %vm564, %v839, 0
        %v1035 = vsel %vm564, %v870, 0
        %v1038 = vsel %vm564, %v871, 0
        %v1041 = vsel %vm564, %v902, 0
        %v1044 = vsel %vm564, %v903, 0
        %v1047 = vsel %vm564, %v934, 0
        %v1050 = vsel %vm564, %v935, 0
        %v1053 = vsel %vm564, %v966, 0
        %v1056 = vsel %vm564, %v967, 0
        %v1059 = vsel %vm564, %v998, 0
        %v1062 = vsel %vm564, %v999, 0
        %1064 = vmatprep.subr.mxu0 0.0
        %1065 = vmatpush1.msra.mxu0 0.0
        %1066 = vmatprep.subr.mxu0 0.0
        %1067 = vmatpush1.msra.mxu0 0.0
        %1068 = vmatprep.subr.mxu0 0.0
        %1069 = vmatpush1.msra.mxu0 0.0
        %1070 = vmatprep.subr.mxu0 0.0
        %1071 = vmatpush1.msra.mxu0 0.0
        %1072 = vmatprep.subr.mxu0 0.0
        %1073 = vmatpush1.msra.mxu0 0.0
        %1074 = vmatprep.subr.mxu0 0.0
        %1075 = vmatpush1.msra.mxu0 0.0
        %1076 = vmatprep.subr.mxu0 0.0
        %1077 = vmatpush1.msra.mxu0 0.0
        %1078 = vmatprep.subr.mxu0 0.0
        %1079 = vmatpush1.msra.mxu0 0.0
        %1080 = vmatprep.subr.mxu0 0.0
        %1081 = vmatpush1.msra.mxu0 0.0
        %1082 = vmatprep.subr.mxu0 0.0
        %1083 = vmatpush1.msra.mxu0 0.0
        %1084 = vmatprep.subr.mxu0 0.0
        %1085 = vmatpush1.msra.mxu0 0.0
        %1086 = vmatprep.subr.mxu0 0.0
        %1087 = vmatpush1.msra.mxu0 0.0
        %1088 = vmatprep.subr.mxu0 0.0
        %1089 = vmatpush1.msra.mxu0 0.0
        %1090 = vmatprep.subr.mxu0 0.0
        %1091 = vmatpush1.msra.mxu0 0.0
        %1092 = vmatprep.subr.mxu0 0.0
        %1093 = vmatpush1.msra.mxu0 %v1015
        %1094 = vmatprep.subr.mxu0 0.0
        %1095 = vmatpush1.msra.mxu0 %v1014
        %1096 = vmatprep.subr.mxu0 0.0
        %1097 = vmatpush2.msra.mxu0 0.0
        %1098 = vmatprep.subr.mxu0 0.0
        %1099 = vmatpush2.msra.mxu0 0.0
        %1100 = vmatprep.subr.mxu0 0.0
        %1101 = vmatpush2.msra.mxu0 0.0
        %1102 = vmatprep.subr.mxu0 0.0
        %1103 = vmatpush2.msra.mxu0 0.0
        %1104 = vmatprep.subr.mxu0 0.0
        %1105 = vmatpush2.msra.mxu0 0.0
        %1106 = vmatprep.subr.mxu0 0.0
        %1107 = vmatpush2.msra.mxu0 0.0
        %1108 = vmatprep.subr.mxu0 0.0
        %1109 = vmatpush2.msra.mxu0 0.0
        %1110 = vmatprep.subr.mxu0 0.0
        %1111 = vmatpush2.msra.mxu0 0.0
        %1112 = vmatprep.subr.mxu0 0.0
        %1113 = vmatpush2.msra.mxu0 0.0
        %1114 = vmatprep.subr.mxu0 0.0
        %1115 = vmatpush2.msra.mxu0 0.0
        %1116 = vmatprep.subr.mxu0 0.0
        %1117 = vmatpush2.msra.mxu0 0.0
        %1118 = vmatprep.subr.mxu0 0.0
        %1119 = vmatpush2.msra.mxu0 0.0
        %1120 = vmatprep.subr.mxu0 0.0
        %1121 = vmatpush2.msra.mxu0 0.0
        %1122 = vmatprep.subr.mxu0 0.0
        %1123 = vmatpush2.msra.mxu0 0.0
        %1124 = vmatprep.subr.mxu0 0.0
        %1125 = vmatpush2.msra.mxu0 0.0
        %1126 = vmatprep.subr.mxu0 0.0
        %1127 = vmatpush2.msra.mxu0 0.0
        %1128 = vmatprep.mubr.f32.mxu0 0.0
        %1129 = vmatmul.mubr.f32.gmra.mxu0 %v1017
        %v1130 = vpop.f32.mrf.mxu0
        %v1131 = vadd.f32 0.0, %v1130
        %v1132 = vpop.f32.mrf.mxu0
        %1133 = vmatprep.mubr.f32.mxu0 0.0
        %1134 = vmatmul.mubr.f32.gmra.mxu0 %v1020
        %v1135 = vpop.f32.mrf.mxu0
        %v1136 = vadd.f32 0.0, %v1135
        %v1137 = vpop.f32.mrf.mxu0
        %1138 = vmatprep.mubr.f32.mxu0 0.0
        %1139 = vmatmul.mubr.f32.gmra.mxu0 %v1023
        %v1140 = vpop.f32.mrf.mxu0
        %v1141 = vadd.f32 0.0, %v1140
        %v1142 = vpop.f32.mrf.mxu0
        %1143 = vmatprep.mubr.f32.mxu0 0.0
        %1144 = vmatmul.mubr.f32.gmra.mxu0 %v1026
        %v1145 = vpop.f32.mrf.mxu0
        %v1146 = vadd.f32 0.0, %v1145
        %v1147 = vpop.f32.mrf.mxu0
        %1148 = vmatprep.mubr.f32.mxu0 0.0
        %1149 = vmatmul.mubr.f32.gmra.mxu0 %v1029
        %v1150 = vpop.f32.mrf.mxu0
        %v1151 = vadd.f32 0.0, %v1150
        %v1152 = vpop.f32.mrf.mxu0
        %1153 = vmatprep.mubr.f32.mxu0 0.0
        %1154 = vmatmul.mubr.f32.gmra.mxu0 %v1032
        %v1155 = vpop.f32.mrf.mxu0
        %v1156 = vadd.f32 0.0, %v1155
        %v1157 = vpop.f32.mrf.mxu0
        %1158 = vmatprep.mubr.f32.mxu0 0.0
        %1159 = vmatmul.mubr.f32.gmra.mxu0 %v1035
        %v1160 = vpop.f32.mrf.mxu0
        %v1161 = vadd.f32 0.0, %v1160
        %v1162 = vpop.f32.mrf.mxu0
        %1163 = vmatprep.mubr.f32.mxu0 0.0
        %1164 = vmatmul.mubr.f32.gmra.mxu0 %v1038
        %v1165 = vpop.f32.mrf.mxu0
        %v1166 = vadd.f32 0.0, %v1165
        %v1167 = vpop.f32.mrf.mxu0
        %1168 = vmatprep.mubr.f32.mxu0 0.0
        %1169 = vmatmul.mubr.f32.gmra.mxu0 %v1041
        %v1170 = vpop.f32.mrf.mxu0
        %v1171 = vadd.f32 0.0, %v1170
        %v1172 = vpop.f32.mrf.mxu0
        %1173 = vmatprep.mubr.f32.mxu0 0.0
        %1174 = vmatmul.mubr.f32.gmra.mxu0 %v1044
        %v1175 = vpop.f32.mrf.mxu0
        %v1176 = vadd.f32 0.0, %v1175
        %v1177 = vpop.f32.mrf.mxu0
        %1178 = vmatprep.mubr.f32.mxu0 0.0
        %1179 = vmatmul.mubr.f32.gmra.mxu0 %v1047
        %v1180 = vpop.f32.mrf.mxu0
        %v1181 = vadd.f32 0.0, %v1180
        %v1182 = vpop.f32.mrf.mxu0
        %1183 = vmatprep.mubr.f32.mxu0 0.0
        %1184 = vmatmul.mubr.f32.gmra.mxu0 %v1050
        %v1185 = vpop.f32.mrf.mxu0
        %v1186 = vadd.f32 0.0, %v1185
        %v1187 = vpop.f32.mrf.mxu0
        %1188 = vmatprep.mubr.f32.mxu0 0.0
        %1189 = vmatmul.mubr.f32.gmra.mxu0 %v1053
        %v1190 = vpop.f32.mrf.mxu0
        %v1191 = vadd.f32 0.0, %v1190
        %v1192 = vpop.f32.mrf.mxu0
        %1193 = vmatprep.mubr.f32.mxu0 0.0
        %1194 = vmatmul.mubr.f32.gmra.mxu0 %v1056
        %v1195 = vpop.f32.mrf.mxu0
        %v1196 = vadd.f32 0.0, %v1195
        %v1197 = vpop.f32.mrf.mxu0
        %1198 = vmatprep.mubr.f32.mxu0 0.0
        %1199 = vmatmul.mubr.f32.gmra.mxu0 %v1059
        %v1200 = vpop.f32.mrf.mxu0
        %v1201 = vadd.f32 0.0, %v1200
        %v1202 = vpop.f32.mrf.mxu0
        %1203 = vmatprep.mubr.f32.mxu0 0.0
        %1204 = vmatmul.mubr.f32.gmra.mxu0 %v1062
        %v1205 = vpop.f32.mrf.mxu0
        %v1206 = vadd.f32 0.0, %v1205
        %v1207 = vpop.f32.mrf.mxu0
        %1208 = vdwg.mxu0
        %v1209 = vmul.f32 %v1131, %v1151
        %v1210 = vmul.f32 %v1136, %v1156
        %v1211 = vmul.f32 %v1141, %v1161
        %v1212 = vmul.f32 %v1146, %v1166
        %v1213 = vsub.f32 %v1171, %v1209
        %v1214 = vsub.f32 %v1176, %v1210
        %v1215 = vsub.f32 %v1181, %v1211
        %v1216 = vsub.f32 %v1186, %v1212
        %v1217 = vmul.f32 %v1151, %v1151
        %v1218 = vmul.f32 %v1156, %v1156
        %v1219 = vmul.f32 %v1161, %v1161
        %v1220 = vmul.f32 %v1166, %v1166
        %v1221 = vsub.f32 %v1191, %v1217
        %v1222 = vsub.f32 %v1196, %v1218
        %v1223 = vsub.f32 %v1201, %v1219
        %v1224 = vsub.f32 %v1206, %v1220
        %s1225 = sld [smem:[#allocation15]]
        %v1226 = vstv %s1225
        %v1227 = vadd.f32 %v1221, %v1226
        %v1228 = vadd.f32 %v1222, %v1226
        %v1229 = vadd.f32 %v1223, %v1226
        %v1230 = vadd.f32 %v1224, %v1226
        %v1231 = vrcp.pop %v1227
        %v1232 = vrcp.pop %v1228
        %v1233 = vrcp.pop %v1229
        %v1234 = vrcp.pop %v1230
        %v1235 = vmul.f32 %v1213, %v1231
        %v1236 = vmul.f32 %v1214, %v1232
        %v1237 = vmul.f32 %v1215, %v1233
        %v1238 = vmul.f32 %v1216, %v1234
        %v1239 = vmul.f32 %v1235, %v1151
        %v1240 = vmul.f32 %v1236, %v1156
        %v1241 = vmul.f32 %v1237, %v1161
        %v1242 = vmul.f32 %v1238, %v1166
        %v1243 = vsub.f32 %v1131, %v1239
        %v1244 = vsub.f32 %v1136, %v1240
        %v1245 = vsub.f32 %v1141, %v1241
        %v1246 = vsub.f32 %v1146, %v1242
        %s1247 = sld [smem:[#allocation16]]
        %v1248 = vstv %s1247
        %v1249 = vmul.f32 %v1248, %v1235
        %v1250 = vmul.f32 %v1248, %v1236
        %v1251 = vmul.f32 %v1248, %v1237
        %v1252 = vmul.f32 %v1248, %v1238
        %v1253 = vmul.f32 %v1248, %v1243
        %v1254 = vmul.f32 %v1248, %v1244
        %v1255 = vmul.f32 %v1248, %v1245
        %v1256 = vmul.f32 %v1248, %v1246
        %1273 = vrot.lane.b32.xlu0 %v680, 112
        %v1274 = vpop.permute.xlu0 %1273
        %1275 = vrot.lane.b32.xlu0 %v685, 112
        %v1276 = vpop.permute.xlu0 %1275
        %1277 = vrot.lane.b32.xlu0 %v690, 112
        %v1278 = vpop.permute.xlu0 %1277
        %1279 = vrot.lane.b32.xlu0 %v695, 112
        %v1280 = vpop.permute.xlu0 %1279
        %1281 = vrot.lane.b32.xlu0 %v700, 112
        %v1282 = vpop.permute.xlu0 %1281
        %1283 = vrot.lane.b32.xlu0 %v705, 112
        %v1284 = vpop.permute.xlu0 %1283
        %1285 = vrot.lane.b32.xlu0 %v710, 112
        %v1286 = vpop.permute.xlu0 %1285
        %1287 = vrot.lane.b32.xlu0 %v715, 112
        %v1288 = vpop.permute.xlu0 %1287
        %1289 = vrot.lane.b32.xlu0 %v720, 112
        %v1290 = vpop.permute.xlu0 %1289
        %1291 = vrot.lane.b32.xlu0 %v725, 112
        %v1292 = vpop.permute.xlu0 %1291
        %1293 = vrot.lane.b32.xlu0 %v730, 112
        %v1294 = vpop.permute.xlu0 %1293
        %1295 = vrot.lane.b32.xlu0 %v735, 112
        %v1296 = vpop.permute.xlu0 %1295
        %1297 = vrot.lane.b32.xlu0 %v740, 112
        %v1298 = vpop.permute.xlu0 %1297
        %1299 = vrot.lane.b32.xlu0 %v745, 112
        %v1300 = vpop.permute.xlu0 %1299
        %1301 = vrot.lane.b32.xlu0 %v750, 112
        %v1302 = vpop.permute.xlu0 %1301
        %1303 = vrot.lane.b32.xlu0 %v755, 112
        %v1304 = vpop.permute.xlu0 %1303
        %1321 = vxpose.xlu0.b32.start [1/16] %v1274, 128
        %1322 = vxpose.xlu0.b32.cont [2/16] %v1276, 128
        %1323 = vxpose.xlu0.b32.cont [3/16] 0.0, 128
        %1324 = vxpose.xlu0.b32.cont [4/16] 0.0, 128
        %1325 = vxpose.xlu0.b32.cont [5/16] 0.0, 128
        %1326 = vxpose.xlu0.b32.cont [6/16] 0.0, 128
        %1327 = vxpose.xlu0.b32.cont [7/16] 0.0, 128
        %1328 = vxpose.xlu0.b32.cont [8/16] 0.0, 128
        %1329 = vxpose.xlu0.b32.cont [9/16] 0.0, 128
        %1330 = vxpose.xlu0.b32.cont [10/16] 0.0, 128
        %1331 = vxpose.xlu0.b32.cont [11/16] 0.0, 128
        %1332 = vxpose.xlu0.b32.cont [12/16] 0.0, 128
        %1333 = vxpose.xlu0.b32.cont [13/16] 0.0, 128
        %1334 = vxpose.xlu0.b32.cont [14/16] 0.0, 128
        %1335 = vxpose.xlu0.b32.cont [15/16] 0.0, 128
        %1336 = vxpose.xlu0.b32.end [16/16] 0.0, 128
        %v1337 = vpop.trf.xlu0
        %v1338 = vpop.trf.xlu0
        %v1339 = vpop.trf.xlu0
        %v1340 = vpop.trf.xlu0
        %v1341 = vpop.trf.xlu0
        %v1342 = vpop.trf.xlu0
        %v1343 = vpop.trf.xlu0
        %v1344 = vpop.trf.xlu0
        %v1345 = vpop.trf.xlu0
        %v1346 = vpop.trf.xlu0
        %v1347 = vpop.trf.xlu0
        %v1348 = vpop.trf.xlu0
        %v1349 = vpop.trf.xlu0
        %v1350 = vpop.trf.xlu0
        %v1351 = vpop.trf.xlu0
        %v1352 = vpop.trf.xlu0
        %1353 = vxpose.xlu0.b32.start [1/16] %v1278, 128
        %1354 = vxpose.xlu0.b32.cont [2/16] %v1280, 128
        %1355 = vxpose.xlu0.b32.cont [3/16] 0.0, 128
        %1356 = vxpose.xlu0.b32.cont [4/16] 0.0, 128
        %1357 = vxpose.xlu0.b32.cont [5/16] 0.0, 128
        %1358 = vxpose.xlu0.b32.cont [6/16] 0.0, 128
        %1359 = vxpose.xlu0.b32.cont [7/16] 0.0, 128
        %1360 = vxpose.xlu0.b32.cont [8/16] 0.0, 128
        %1361 = vxpose.xlu0.b32.cont [9/16] 0.0, 128
        %1362 = vxpose.xlu0.b32.cont [10/16] 0.0, 128
        %1363 = vxpose.xlu0.b32.cont [11/16] 0.0, 128
        %1364 = vxpose.xlu0.b32.cont [12/16] 0.0, 128
        %1365 = vxpose.xlu0.b32.cont [13/16] 0.0, 128
        %1366 = vxpose.xlu0.b32.cont [14/16] 0.0, 128
        %1367 = vxpose.xlu0.b32.cont [15/16] 0.0, 128
        %1368 = vxpose.xlu0.b32.end [16/16] 0.0, 128
        %v1369 = vpop.trf.xlu0
        %v1370 = vpop.trf.xlu0
        %v1371 = vpop.trf.xlu0
        %v1372 = vpop.trf.xlu0
        %v1373 = vpop.trf.xlu0
        %v1374 = vpop.trf.xlu0
        %v1375 = vpop.trf.xlu0
        %v1376 = vpop.trf.xlu0
        %v1377 = vpop.trf.xlu0
        %v1378 = vpop.trf.xlu0
        %v1379 = vpop.trf.xlu0
        %v1380 = vpop.trf.xlu0
        %v1381 = vpop.trf.xlu0
        %v1382 = vpop.trf.xlu0
        %v1383 = vpop.trf.xlu0
        %v1384 = vpop.trf.xlu0
        %1385 = vxpose.xlu0.b32.start [1/16] %v1282, 128
        %1386 = vxpose.xlu0.b32.cont [2/16] %v1284, 128
        %1387 = vxpose.xlu0.b32.cont [3/16] 0.0, 128
        %1388 = vxpose.xlu0.b32.cont [4/16] 0.0, 128
        %1389 = vxpose.xlu0.b32.cont [5/16] 0.0, 128
        %1390 = vxpose.xlu0.b32.cont [6/16] 0.0, 128
        %1391 = vxpose.xlu0.b32.cont [7/16] 0.0, 128
        %1392 = vxpose.xlu0.b32.cont [8/16] 0.0, 128
        %1393 = vxpose.xlu0.b32.cont [9/16] 0.0, 128
        %1394 = vxpose.xlu0.b32.cont [10/16] 0.0, 128
        %1395 = vxpose.xlu0.b32.cont [11/16] 0.0, 128
        %1396 = vxpose.xlu0.b32.cont [12/16] 0.0, 128
        %1397 = vxpose.xlu0.b32.cont [13/16] 0.0, 128
        %1398 = vxpose.xlu0.b32.cont [14/16] 0.0, 128
        %1399 = vxpose.xlu0.b32.cont [15/16] 0.0, 128
        %1400 = vxpose.xlu0.b32.end [16/16] 0.0, 128
        %v1401 = vpop.trf.xlu0
        %v1402 = vpop.trf.xlu0
        %v1403 = vpop.trf.xlu0
        %v1404 = vpop.trf.xlu0
        %v1405 = vpop.trf.xlu0
        %v1406 = vpop.trf.xlu0
        %v1407 = vpop.trf.xlu0
        %v1408 = vpop.trf.xlu0
        %v1409 = vpop.trf.xlu0
        %v1410 = vpop.trf.xlu0
        %v1411 = vpop.trf.xlu0
        %v1412 = vpop.trf.xlu0
        %v1413 = vpop.trf.xlu0
        %v1414 = vpop.trf.xlu0
        %v1415 = vpop.trf.xlu0
        %v1416 = vpop.trf.xlu0
        %1417 = vxpose.xlu0.b32.start [1/16] %v1286, 128
        %1418 = vxpose.xlu0.b32.cont [2/16] %v1288, 128
        %1419 = vxpose.xlu0.b32.cont [3/16] 0.0, 128
        %1420 = vxpose.xlu0.b32.cont [4/16] 0.0, 128
        %1421 = vxpose.xlu0.b32.cont [5/16] 0.0, 128
        %1422 = vxpose.xlu0.b32.cont [6/16] 0.0, 128
        %1423 = vxpose.xlu0.b32.cont [7/16] 0.0, 128
        %1424 = vxpose.xlu0.b32.cont [8/16] 0.0, 128
        %1425 = vxpose.xlu0.b32.cont [9/16] 0.0, 128
        %1426 = vxpose.xlu0.b32.cont [10/16] 0.0, 128
        %1427 = vxpose.xlu0.b32.cont [11/16] 0.0, 128
        %1428 = vxpose.xlu0.b32.cont [12/16] 0.0, 128
        %1429 = vxpose.xlu0.b32.cont [13/16] 0.0, 128
        %1430 = vxpose.xlu0.b32.cont [14/16] 0.0, 128
        %1431 = vxpose.xlu0.b32.cont [15/16] 0.0, 128
        %1432 = vxpose.xlu0.b32.end [16/16] 0.0, 128
        %v1433 = vpop.trf.xlu0
        %v1434 = vpop.trf.xlu0
        %v1435 = vpop.trf.xlu0
        %v1436 = vpop.trf.xlu0
        %v1437 = vpop.trf.xlu0
        %v1438 = vpop.trf.xlu0
        %v1439 = vpop.trf.xlu0
        %v1440 = vpop.trf.xlu0
        %v1441 = vpop.trf.xlu0
        %v1442 = vpop.trf.xlu0
        %v1443 = vpop.trf.xlu0
        %v1444 = vpop.trf.xlu0
        %v1445 = vpop.trf.xlu0
        %v1446 = vpop.trf.xlu0
        %v1447 = vpop.trf.xlu0
        %v1448 = vpop.trf.xlu0
        %1449 = vxpose.xlu0.b32.start [1/16] %v1290, 128
        %1450 = vxpose.xlu0.b32.cont [2/16] %v1292, 128
        %1451 = vxpose.xlu0.b32.cont [3/16] 0.0, 128
        %1452 = vxpose.xlu0.b32.cont [4/16] 0.0, 128
        %1453 = vxpose.xlu0.b32.cont [5/16] 0.0, 128
        %1454 = vxpose.xlu0.b32.cont [6/16] 0.0, 128
        %1455 = vxpose.xlu0.b32.cont [7/16] 0.0, 128
        %1456 = vxpose.xlu0.b32.cont [8/16] 0.0, 128
        %1457 = vxpose.xlu0.b32.cont [9/16] 0.0, 128
        %1458 = vxpose.xlu0.b32.cont [10/16] 0.0, 128
        %1459 = vxpose.xlu0.b32.cont [11/16] 0.0, 128
        %1460 = vxpose.xlu0.b32.cont [12/16] 0.0, 128
        %1461 = vxpose.xlu0.b32.cont [13/16] 0.0, 128
        %1462 = vxpose.xlu0.b32.cont [14/16] 0.0, 128
        %1463 = vxpose.xlu0.b32.cont [15/16] 0.0, 128
        %1464 = vxpose.xlu0.b32.end [16/16] 0.0, 128
        %v1465 = vpop.trf.xlu0
        %v1466 = vpop.trf.xlu0
        %v1467 = vpop.trf.xlu0
        %v1468 = vpop.trf.xlu0
        %v1469 = vpop.trf.xlu0
        %v1470 = vpop.trf.xlu0
        %v1471 = vpop.trf.xlu0
        %v1472 = vpop.trf.xlu0
        %v1473 = vpop.trf.xlu0
        %v1474 = vpop.trf.xlu0
        %v1475 = vpop.trf.xlu0
        %v1476 = vpop.trf.xlu0
        %v1477 = vpop.trf.xlu0
        %v1478 = vpop.trf.xlu0
        %v1479 = vpop.trf.xlu0
        %v1480 = vpop.trf.xlu0
        %1481 = vxpose.xlu0.b32.start [1/16] %v1294, 128
        %1482 = vxpose.xlu0.b32.cont [2/16] %v1296, 128
        %1483 = vxpose.xlu0.b32.cont [3/16] 0.0, 128
        %1484 = vxpose.xlu0.b32.cont [4/16] 0.0, 128
        %1485 = vxpose.xlu0.b32.cont [5/16] 0.0, 128
        %1486 = vxpose.xlu0.b32.cont [6/16] 0.0, 128
        %1487 = vxpose.xlu0.b32.cont [7/16] 0.0, 128
        %1488 = vxpose.xlu0.b32.cont [8/16] 0.0, 128
        %1489 = vxpose.xlu0.b32.cont [9/16] 0.0, 128
        %1490 = vxpose.xlu0.b32.cont [10/16] 0.0, 128
        %1491 = vxpose.xlu0.b32.cont [11/16] 0.0, 128
        %1492 = vxpose.xlu0.b32.cont [12/16] 0.0, 128
        %1493 = vxpose.xlu0.b32.cont [13/16] 0.0, 128
        %1494 = vxpose.xlu0.b32.cont [14/16] 0.0, 128
        %1495 = vxpose.xlu0.b32.cont [15/16] 0.0, 128
        %1496 = vxpose.xlu0.b32.end [16/16] 0.0, 128
        %v1497 = vpop.trf.xlu0
        %v1498 = vpop.trf.xlu0
        %v1499 = vpop.trf.xlu0
        %v1500 = vpop.trf.xlu0
        %v1501 = vpop.trf.xlu0
        %v1502 = vpop.trf.xlu0
        %v1503 = vpop.trf.xlu0
        %v1504 = vpop.trf.xlu0
        %v1505 = vpop.trf.xlu0
        %v1506 = vpop.trf.xlu0
        %v1507 = vpop.trf.xlu0
        %v1508 = vpop.trf.xlu0
        %v1509 = vpop.trf.xlu0
        %v1510 = vpop.trf.xlu0
        %v1511 = vpop.trf.xlu0
        %v1512 = vpop.trf.xlu0
        %1513 = vxpose.xlu0.b32.start [1/16] %v1298, 128
        %1514 = vxpose.xlu0.b32.cont [2/16] %v1300, 128
        %1515 = vxpose.xlu0.b32.cont [3/16] 0.0, 128
        %1516 = vxpose.xlu0.b32.cont [4/16] 0.0, 128
        %1517 = vxpose.xlu0.b32.cont [5/16] 0.0, 128
        %1518 = vxpose.xlu0.b32.cont [6/16] 0.0, 128
        %1519 = vxpose.xlu0.b32.cont [7/16] 0.0, 128
        %1520 = vxpose.xlu0.b32.cont [8/16] 0.0, 128
        %1521 = vxpose.xlu0.b32.cont [9/16] 0.0, 128
        %1522 = vxpose.xlu0.b32.cont [10/16] 0.0, 128
        %1523 = vxpose.xlu0.b32.cont [11/16] 0.0, 128
        %1524 = vxpose.xlu0.b32.cont [12/16] 0.0, 128
        %1525 = vxpose.xlu0.b32.cont [13/16] 0.0, 128
        %1526 = vxpose.xlu0.b32.cont [14/16] 0.0, 128
        %1527 = vxpose.xlu0.b32.cont [15/16] 0.0, 128
        %1528 = vxpose.xlu0.b32.end [16/16] 0.0, 128
        %v1529 = vpop.trf.xlu0
        %v1530 = vpop.trf.xlu0
        %v1531 = vpop.trf.xlu0
        %v1532 = vpop.trf.xlu0
        %v1533 = vpop.trf.xlu0
        %v1534 = vpop.trf.xlu0
        %v1535 = vpop.trf.xlu0
        %v1536 = vpop.trf.xlu0
        %v1537 = vpop.trf.xlu0
        %v1538 = vpop.trf.xlu0
        %v1539 = vpop.trf.xlu0
        %v1540 = vpop.trf.xlu0
        %v1541 = vpop.trf.xlu0
        %v1542 = vpop.trf.xlu0
        %v1543 = vpop.trf.xlu0
        %v1544 = vpop.trf.xlu0
        %1545 = vxpose.xlu0.b32.start [1/16] %v1302, 128
        %1546 = vxpose.xlu0.b32.cont [2/16] %v1304, 128
        %1547 = vxpose.xlu0.b32.cont [3/16] 0.0, 128
        %1548 = vxpose.xlu0.b32.cont [4/16] 0.0, 128
        %1549 = vxpose.xlu0.b32.cont [5/16] 0.0, 128
        %1550 = vxpose.xlu0.b32.cont [6/16] 0.0, 128
        %1551 = vxpose.xlu0.b32.cont [7/16] 0.0, 128
        %1552 = vxpose.xlu0.b32.cont [8/16] 0.0, 128
        %1553 = vxpose.xlu0.b32.cont [9/16] 0.0, 128
        %1554 = vxpose.xlu0.b32.cont [10/16] 0.0, 128
        %1555 = vxpose.xlu0.b32.cont [11/16] 0.0, 128
        %1556 = vxpose.xlu0.b32.cont [12/16] 0.0, 128
        %1557 = vxpose.xlu0.b32.cont [13/16] 0.0, 128
        %1558 = vxpose.xlu0.b32.cont [14/16] 0.0, 128
        %1559 = vxpose.xlu0.b32.cont [15/16] 0.0, 128
        %1560 = vxpose.xlu0.b32.end [16/16] 0.0, 128
        %v1561 = vpop.trf.xlu0
        %v1562 = vpop.trf.xlu0
        %v1563 = vpop.trf.xlu0
        %v1564 = vpop.trf.xlu0
        %v1565 = vpop.trf.xlu0
        %v1566 = vpop.trf.xlu0
        %v1567 = vpop.trf.xlu0
        %v1568 = vpop.trf.xlu0
        %v1569 = vpop.trf.xlu0
        %v1570 = vpop.trf.xlu0
        %v1571 = vpop.trf.xlu0
        %v1572 = vpop.trf.xlu0
        %v1573 = vpop.trf.xlu0
        %v1574 = vpop.trf.xlu0
        %v1575 = vpop.trf.xlu0
        %v1576 = vpop.trf.xlu0
        %s1577 = scalar_lea.vmem [#allocation9], 16
        %v1578 = vld [vmem:[%s1577] sm:$0xff]
        %v1579 = vld [vmem:[%s1577 + $0x8] sm:$0xff]
        %v1581 = vsel %vm564, %v1337, 0
        %v1584 = vsel %vm564, %v1338, 0
        %v1587 = vsel %vm564, %v1369, 0
        %v1590 = vsel %vm564, %v1370, 0
        %v1593 = vsel %vm564, %v1401, 0
        %v1596 = vsel %vm564, %v1402, 0
        %v1599 = vsel %vm564, %v1433, 0
        %v1602 = vsel %vm564, %v1434, 0
        %v1605 = vsel %vm564, %v1465, 0
        %v1608 = vsel %vm564, %v1466, 0
        %v1611 = vsel %vm564, %v1497, 0
        %v1614 = vsel %vm564, %v1498, 0
        %v1617 = vsel %vm564, %v1529, 0
        %v1620 = vsel %vm564, %v1530, 0
        %v1623 = vsel %vm564, %v1561, 0
        %v1626 = vsel %vm564, %v1562, 0
        %1628 = vmatprep.subr.mxu0 0.0
        %1629 = vmatpush1.msra.mxu0 0.0
        %1630 = vmatprep.subr.mxu0 0.0
        %1631 = vmatpush1.msra.mxu0 0.0
        %1632 = vmatprep.subr.mxu0 0.0
        %1633 = vmatpush1.msra.mxu0 0.0
        %1634 = vmatprep.subr.mxu0 0.0
        %1635 = vmatpush1.msra.mxu0 0.0
        %1636 = vmatprep.subr.mxu0 0.0
        %1637 = vmatpush1.msra.mxu0 0.0
        %1638 = vmatprep.subr.mxu0 0.0
        %1639 = vmatpush1.msra.mxu0 0.0
        %1640 = vmatprep.subr.mxu0 0.0
        %1641 = vmatpush1.msra.mxu0 0.0
        %1642 = vmatprep.subr.mxu0 0.0
        %1643 = vmatpush1.msra.mxu0 0.0
        %1644 = vmatprep.subr.mxu0 0.0
        %1645 = vmatpush1.msra.mxu0 0.0
        %1646 = vmatprep.subr.mxu0 0.0
        %1647 = vmatpush1.msra.mxu0 0.0
        %1648 = vmatprep.subr.mxu0 0.0
        %1649 = vmatpush1.msra.mxu0 0.0
        %1650 = vmatprep.subr.mxu0 0.0
        %1651 = vmatpush1.msra.mxu0 0.0
        %1652 = vmatprep.subr.mxu0 0.0
        %1653 = vmatpush1.msra.mxu0 0.0
        %1654 = vmatprep.subr.mxu0 0.0
        %1655 = vmatpush1.msra.mxu0 0.0
        %1656 = vmatprep.subr.mxu0 0.0
        %1657 = vmatpush1.msra.mxu0 %v1579
        %1658 = vmatprep.subr.mxu0 0.0
        %1659 = vmatpush1.msra.mxu0 %v1578
        %1660 = vmatprep.subr.mxu0 0.0
        %1661 = vmatpush2.msra.mxu0 0.0
        %1662 = vmatprep.subr.mxu0 0.0
        %1663 = vmatpush2.msra.mxu0 0.0
        %1664 = vmatprep.subr.mxu0 0.0
        %1665 = vmatpush2.msra.mxu0 0.0
        %1666 = vmatprep.subr.mxu0 0.0
        %1667 = vmatpush2.msra.mxu0 0.0
        %1668 = vmatprep.subr.mxu0 0.0
        %1669 = vmatpush2.msra.mxu0 0.0
        %1670 = vmatprep.subr.mxu0 0.0
        %1671 = vmatpush2.msra.mxu0 0.0
        %1672 = vmatprep.subr.mxu0 0.0
        %1673 = vmatpush2.msra.mxu0 0.0
        %1674 = vmatprep.subr.mxu0 0.0
        %1675 = vmatpush2.msra.mxu0 0.0
        %1676 = vmatprep.subr.mxu0 0.0
        %1677 = vmatpush2.msra.mxu0 0.0
        %1678 = vmatprep.subr.mxu0 0.0
        %1679 = vmatpush2.msra.mxu0 0.0
        %1680 = vmatprep.subr.mxu0 0.0
        %1681 = vmatpush2.msra.mxu0 0.0
        %1682 = vmatprep.subr.mxu0 0.0
        %1683 = vmatpush2.msra.mxu0 0.0
        %1684 = vmatprep.subr.mxu0 0.0
        %1685 = vmatpush2.msra.mxu0 0.0
        %1686 = vmatprep.subr.mxu0 0.0
        %1687 = vmatpush2.msra.mxu0 0.0
        %1688 = vmatprep.subr.mxu0 0.0
        %1689 = vmatpush2.msra.mxu0 0.0
        %1690 = vmatprep.subr.mxu0 0.0
        %1691 = vmatpush2.msra.mxu0 0.0
        %1692 = vmatprep.mubr.f32.mxu0 0.0
        %1693 = vmatmul.mubr.f32.gmra.mxu0 %v1581
        %v1694 = vpop.f32.mrf.mxu0
        %v1695 = vadd.f32 0.0, %v1694
        %v1696 = vpop.f32.mrf.mxu0
        %1697 = vmatprep.mubr.f32.mxu0 0.0
        %1698 = vmatmul.mubr.f32.gmra.mxu0 %v1584
        %v1699 = vpop.f32.mrf.mxu0
        %v1700 = vadd.f32 0.0, %v1699
        %v1701 = vpop.f32.mrf.mxu0
        %1702 = vmatprep.mubr.f32.mxu0 0.0
        %1703 = vmatmul.mubr.f32.gmra.mxu0 %v1587
        %v1704 = vpop.f32.mrf.mxu0
        %v1705 = vadd.f32 0.0, %v1704
        %v1706 = vpop.f32.mrf.mxu0
        %1707 = vmatprep.mubr.f32.mxu0 0.0
        %1708 = vmatmul.mubr.f32.gmra.mxu0 %v1590
        %v1709 = vpop.f32.mrf.mxu0
        %v1710 = vadd.f32 0.0, %v1709
        %v1711 = vpop.f32.mrf.mxu0
        %1712 = vmatprep.mubr.f32.mxu0 0.0
        %1713 = vmatmul.mubr.f32.gmra.mxu0 %v1593
        %v1714 = vpop.f32.mrf.mxu0
        %v1715 = vadd.f32 0.0, %v1714
        %v1716 = vpop.f32.mrf.mxu0
        %1717 = vmatprep.mubr.f32.mxu0 0.0
        %1718 = vmatmul.mubr.f32.gmra.mxu0 %v1596
        %v1719 = vpop.f32.mrf.mxu0
        %v1720 = vadd.f32 0.0, %v1719
        %v1721 = vpop.f32.mrf.mxu0
        %1722 = vmatprep.mubr.f32.mxu0 0.0
        %1723 = vmatmul.mubr.f32.gmra.mxu0 %v1599
        %v1724 = vpop.f32.mrf.mxu0
        %v1725 = vadd.f32 0.0, %v1724
        %v1726 = vpop.f32.mrf.mxu0
        %1727 = vmatprep.mubr.f32.mxu0 0.0
        %1728 = vmatmul.mubr.f32.gmra.mxu0 %v1602
        %v1729 = vpop.f32.mrf.mxu0
        %v1730 = vadd.f32 0.0, %v1729
        %v1731 = vpop.f32.mrf.mxu0
        %1732 = vmatprep.mubr.f32.mxu0 0.0
        %1733 = vmatmul.mubr.f32.gmra.mxu0 %v1605
        %v1734 = vpop.f32.mrf.mxu0
        %v1735 = vadd.f32 0.0, %v1734
        %v1736 = vpop.f32.mrf.mxu0
        %1737 = vmatprep.mubr.f32.mxu0 0.0
        %1738 = vmatmul.mubr.f32.gmra.mxu0 %v1608
        %v1739 = vpop.f32.mrf.mxu0
        %v1740 = vadd.f32 0.0, %v1739
        %v1741 = vpop.f32.mrf.mxu0
        %1742 = vmatprep.mubr.f32.mxu0 0.0
        %1743 = vmatmul.mubr.f32.gmra.mxu0 %v1611
        %v1744 = vpop.f32.mrf.mxu0
        %v1745 = vadd.f32 0.0, %v1744
        %v1746 = vpop.f32.mrf.mxu0
        %1747 = vmatprep.mubr.f32.mxu0 0.0
        %1748 = vmatmul.mubr.f32.gmra.mxu0 %v1614
        %v1749 = vpop.f32.mrf.mxu0
        %v1750 = vadd.f32 0.0, %v1749
        %v1751 = vpop.f32.mrf.mxu0
        %1752 = vmatprep.mubr.f32.mxu0 0.0
        %1753 = vmatmul.mubr.f32.gmra.mxu0 %v1617
        %v1754 = vpop.f32.mrf.mxu0
        %v1755 = vadd.f32 0.0, %v1754
        %v1756 = vpop.f32.mrf.mxu0
        %1757 = vmatprep.mubr.f32.mxu0 0.0
        %1758 = vmatmul.mubr.f32.gmra.mxu0 %v1620
        %v1759 = vpop.f32.mrf.mxu0
        %v1760 = vadd.f32 0.0, %v1759
        %v1761 = vpop.f32.mrf.mxu0
        %1762 = vmatprep.mubr.f32.mxu0 0.0
        %1763 = vmatmul.mubr.f32.gmra.mxu0 %v1623
        %v1764 = vpop.f32.mrf.mxu0
        %v1765 = vadd.f32 0.0, %v1764
        %v1766 = vpop.f32.mrf.mxu0
        %1767 = vmatprep.mubr.f32.mxu0 0.0
        %1768 = vmatmul.mubr.f32.gmra.mxu0 %v1626
        %v1769 = vpop.f32.mrf.mxu0
        %v1770 = vadd.f32 0.0, %v1769
        %v1771 = vpop.f32.mrf.mxu0
        %1772 = vdwg.mxu0
        %v1773 = vmul.f32 %v1695, %v1715
        %v1774 = vmul.f32 %v1700, %v1720
        %v1775 = vmul.f32 %v1705, %v1725
        %v1776 = vmul.f32 %v1710, %v1730
        %v1777 = vsub.f32 %v1735, %v1773
        %v1778 = vsub.f32 %v1740, %v1774
        %v1779 = vsub.f32 %v1745, %v1775
        %v1780 = vsub.f32 %v1750, %v1776
        %v1781 = vmul.f32 %v1715, %v1715
        %v1782 = vmul.f32 %v1720, %v1720
        %v1783 = vmul.f32 %v1725, %v1725
        %v1784 = vmul.f32 %v1730, %v1730
        %v1785 = vsub.f32 %v1755, %v1781
        %v1786 = vsub.f32 %v1760, %v1782
        %v1787 = vsub.f32 %v1765, %v1783
        %v1788 = vsub.f32 %v1770, %v1784
        %s1789 = sld [smem:[#allocation15 + $0x1]]
        %v1790 = vstv %s1789
        %v1791 = vadd.f32 %v1785, %v1790
        %v1792 = vadd.f32 %v1786, %v1790
        %v1793 = vadd.f32 %v1787, %v1790
        %v1794 = vadd.f32 %v1788, %v1790
        %v1795 = vrcp.pop %v1791
        %v1796 = vrcp.pop %v1792
        %v1797 = vrcp.pop %v1793
        %v1798 = vrcp.pop %v1794
        %v1799 = vmul.f32 %v1777, %v1795
        %v1800 = vmul.f32 %v1778, %v1796
        %v1801 = vmul.f32 %v1779, %v1797
        %v1802 = vmul.f32 %v1780, %v1798
        %v1803 = vmul.f32 %v1799, %v1715
        %v1804 = vmul.f32 %v1800, %v1720
        %v1805 = vmul.f32 %v1801, %v1725
        %v1806 = vmul.f32 %v1802, %v1730
        %v1807 = vsub.f32 %v1695, %v1803
        %v1808 = vsub.f32 %v1700, %v1804
        %v1809 = vsub.f32 %v1705, %v1805
        %v1810 = vsub.f32 %v1710, %v1806
        %s1811 = sld [smem:[#allocation16 + $0x1]]
        %v1812 = vstv %s1811
        %v1813 = vmul.f32 %v1812, %v1799
        %v1814 = vmul.f32 %v1812, %v1800
        %v1815 = vmul.f32 %v1812, %v1801
        %v1816 = vmul.f32 %v1812, %v1802
        %v1817 = vadd.f32 %v1249, %v1813
        %v1818 = vadd.f32 %v1250, %v1814
        %v1819 = vadd.f32 %v1251, %v1815
        %v1820 = vadd.f32 %v1252, %v1816
        %v1821 = vmul.f32 %v1812, %v1807
        %v1822 = vmul.f32 %v1812, %v1808
        %v1823 = vmul.f32 %v1812, %v1809
        %v1824 = vmul.f32 %v1812, %v1810
        %v1825 = vadd.f32 %v1253, %v1821
        %v1826 = vadd.f32 %v1254, %v1822
        %v1827 = vadd.f32 %v1255, %v1823
        %v1828 = vadd.f32 %v1256, %v1824
        %1829 = vrot.lane.b32.xlu0 %v680, 96
        %v1830 = vpop.permute.xlu0 %1829
        %1831 = vrot.lane.b32.xlu0 %v685, 96
        %v1832 = vpop.permute.xlu0 %1831
        %1833 = vrot.lane.b32.xlu0 %v690, 96
        %v1834 = vpop.permute.xlu0 %1833
        %1835 = vrot.lane.b32.xlu0 %v695, 96
        %v1836 = vpop.permute.xlu0 %1835
        %1837 = vrot.lane.b32.xlu0 %v700, 96
        %v1838 = vpop.permute.xlu0 %1837
        %1839 = vrot.lane.b32.xlu0 %v705, 96
        %v1840 = vpop.permute.xlu0 %1839
        %1841 = vrot.lane.b32.xlu0 %v710, 96
        %v1842 = vpop.permute.xlu0 %1841
        %1843 = vrot.lane.b32.xlu0 %v715, 96
        %v1844 = vpop.permute.xlu0 %1843
        %1845 = vrot.lane.b32.xlu0 %v720, 96
        %v1846 = vpop.permute.xlu0 %1845
        %1847 = vrot.lane.b32.xlu0 %v725, 96
        %v1848 = vpop.permute.xlu0 %1847
        %1849 = vrot.lane.b32.xlu0 %v730, 96
        %v1850 = vpop.permute.xlu0 %1849
        %1851 = vrot.lane.b32.xlu0 %v735, 96
        %v1852 = vpop.permute.xlu0 %1851
        %1853 = vrot.lane.b32.xlu0 %v740, 96
        %v1854 = vpop.permute.xlu0 %1853
        %1855 = vrot.lane.b32.xlu0 %v745, 96
        %v1856 = vpop.permute.xlu0 %1855
        %1857 = vrot.lane.b32.xlu0 %v750, 96
        %v1858 = vpop.permute.xlu0 %1857
        %1859 = vrot.lane.b32.xlu0 %v755, 96
        %v1860 = vpop.permute.xlu0 %1859
        %1877 = vxpose.xlu0.b32.start [1/16] %v1830, 128
        %1878 = vxpose.xlu0.b32.cont [2/16] %v1832, 128
        %1879 = vxpose.xlu0.b32.cont [3/16] 0.0, 128
        %1880 = vxpose.xlu0.b32.cont [4/16] 0.0, 128
        %1881 = vxpose.xlu0.b32.cont [5/16] 0.0, 128
        %1882 = vxpose.xlu0.b32.cont [6/16] 0.0, 128
        %1883 = vxpose.xlu0.b32.cont [7/16] 0.0, 128
        %1884 = vxpose.xlu0.b32.cont [8/16] 0.0, 128
        %1885 = vxpose.xlu0.b32.cont [9/16] 0.0, 128
        %1886 = vxpose.xlu0.b32.cont [10/16] 0.0, 128
        %1887 = vxpose.xlu0.b32.cont [11/16] 0.0, 128
        %1888 = vxpose.xlu0.b32.cont [12/16] 0.0, 128
        %1889 = vxpose.xlu0.b32.cont [13/16] 0.0, 128
        %1890 = vxpose.xlu0.b32.cont [14/16] 0.0, 128
        %1891 = vxpose.xlu0.b32.cont [15/16] 0.0, 128
        %1892 = vxpose.xlu0.b32.end [16/16] 0.0, 128
        %v1893 = vpop.trf.xlu0
        %v1894 = vpop.trf.xlu0
        %v1895 = vpop.trf.xlu0
        %v1896 = vpop.trf.xlu0
        %v1897 = vpop.trf.xlu0
        %v1898 = vpop.trf.xlu0
        %v1899 = vpop.trf.xlu0
        %v1900 = vpop.trf.xlu0
        %v1901 = vpop.trf.xlu0
        %v1902 = vpop.trf.xlu0
        %v1903 = vpop.trf.xlu0
        %v1904 = vpop.trf.xlu0
        %v1905 = vpop.trf.xlu0
        %v1906 = vpop.trf.xlu0
        %v1907 = vpop.trf.xlu0
        %v1908 = vpop.trf.xlu0
        %1909 = vxpose.xlu0.b32.start [1/16] %v1834, 128
        %1910 = vxpose.xlu0.b32.cont [2/16] %v1836, 128
        %1911 = vxpose.xlu0.b32.cont [3/16] 0.0, 128
        %1912 = vxpose.xlu0.b32.cont [4/16] 0.0, 128
        %1913 = vxpose.xlu0.b32.cont [5/16] 0.0, 128
        %1914 = vxpose.xlu0.b32.cont [6/16] 0.0, 128
        %1915 = vxpose.xlu0.b32.cont [7/16] 0.0, 128
        %1916 = vxpose.xlu0.b32.cont [8/16] 0.0, 128
        %1917 = vxpose.xlu0.b32.cont [9/16] 0.0, 128
        %1918 = vxpose.xlu0.b32.cont [10/16] 0.0, 128
        %1919 = vxpose.xlu0.b32.cont [11/16] 0.0, 128
        %1920 = vxpose.xlu0.b32.cont [12/16] 0.0, 128
        %1921 = vxpose.xlu0.b32.cont [13/16] 0.0, 128
        %1922 = vxpose.xlu0.b32.cont [14/16] 0.0, 128
        %1923 = vxpose.xlu0.b32.cont [15/16] 0.0, 128
        %1924 = vxpose.xlu0.b32.end [16/16] 0.0, 128
        %v1925 = vpop.trf.xlu0
        %v1926 = vpop.trf.xlu0
        %v1927 = vpop.trf.xlu0
        %v1928 = vpop.trf.xlu0
        %v1929 = vpop.trf.xlu0
        %v1930 = vpop.trf.xlu0
        %v1931 = vpop.trf.xlu0
        %v1932 = vpop.trf.xlu0
        %v1933 = vpop.trf.xlu0
        %v1934 = vpop.trf.xlu0
        %v1935 = vpop.trf.xlu0
        %v1936 = vpop.trf.xlu0
        %v1937 = vpop.trf.xlu0
        %v1938 = vpop.trf.xlu0
        %v1939 = vpop.trf.xlu0
        %v1940 = vpop.trf.xlu0
        %1941 = vxpose.xlu0.b32.start [1/16] %v1838, 128
        %1942 = vxpose.xlu0.b32.cont [2/16] %v1840, 128
        %1943 = vxpose.xlu0.b32.cont [3/16] 0.0, 128
        %1944 = vxpose.xlu0.b32.cont [4/16] 0.0, 128
        %1945 = vxpose.xlu0.b32.cont [5/16] 0.0, 128
        %1946 = vxpose.xlu0.b32.cont [6/16] 0.0, 128
        %1947 = vxpose.xlu0.b32.cont [7/16] 0.0, 128
        %1948 = vxpose.xlu0.b32.cont [8/16] 0.0, 128
        %1949 = vxpose.xlu0.b32.cont [9/16] 0.0, 128
        %1950 = vxpose.xlu0.b32.cont [10/16] 0.0, 128
        %1951 = vxpose.xlu0.b32.cont [11/16] 0.0, 128
        %1952 = vxpose.xlu0.b32.cont [12/16] 0.0, 128
        %1953 = vxpose.xlu0.b32.cont [13/16] 0.0, 128
        %1954 = vxpose.xlu0.b32.cont [14/16] 0.0, 128
        %1955 = vxpose.xlu0.b32.cont [15/16] 0.0, 128
        %1956 = vxpose.xlu0.b32.end [16/16] 0.0, 128
        %v1957 = vpop.trf.xlu0
        %v1958 = vpop.trf.xlu0
        %v1959 = vpop.trf.xlu0
        %v1960 = vpop.trf.xlu0
        %v1961 = vpop.trf.xlu0
        %v1962 = vpop.trf.xlu0
        %v1963 = vpop.trf.xlu0
        %v1964 = vpop.trf.xlu0
        %v1965 = vpop.trf.xlu0
        %v1966 = vpop.trf.xlu0
        %v1967 = vpop.trf.xlu0
        %v1968 = vpop.trf.xlu0
        %v1969 = vpop.trf.xlu0
        %v1970 = vpop.trf.xlu0
        %v1971 = vpop.trf.xlu0
        %v1972 = vpop.trf.xlu0
        %1973 = vxpose.xlu0.b32.start [1/16] %v1842, 128
        %1974 = vxpose.xlu0.b32.cont [2/16] %v1844, 128
        %1975 = vxpose.xlu0.b32.cont [3/16] 0.0, 128
        %1976 = vxpose.xlu0.b32.cont [4/16] 0.0, 128
        %1977 = vxpose.xlu0.b32.cont [5/16] 0.0, 128
        %1978 = vxpose.xlu0.b32.cont [6/16] 0.0, 128
        %1979 = vxpose.xlu0.b32.cont [7/16] 0.0, 128
        %1980 = vxpose.xlu0.b32.cont [8/16] 0.0, 128
        %1981 = vxpose.xlu0.b32.cont [9/16] 0.0, 128
        %1982 = vxpose.xlu0.b32.cont [10/16] 0.0, 128
        %1983 = vxpose.xlu0.b32.cont [11/16] 0.0, 128
        %1984 = vxpose.xlu0.b32.cont [12/16] 0.0, 128
        %1985 = vxpose.xlu0.b32.cont [13/16] 0.0, 128
        %1986 = vxpose.xlu0.b32.cont [14/16] 0.0, 128
        %1987 = vxpose.xlu0.b32.cont [15/16] 0.0, 128
        %1988 = vxpose.xlu0.b32.end [16/16] 0.0, 128
        %v1989 = vpop.trf.xlu0
        %v1990 = vpop.trf.xlu0
        %v1991 = vpop.trf.xlu0
        %v1992 = vpop.trf.xlu0
        %v1993 = vpop.trf.xlu0
        %v1994 = vpop.trf.xlu0
        %v1995 = vpop.trf.xlu0
        %v1996 = vpop.trf.xlu0
        %v1997 = vpop.trf.xlu0
        %v1998 = vpop.trf.xlu0
        %v1999 = vpop.trf.xlu0
        %v2000 = vpop.trf.xlu0
        %v2001 = vpop.trf.xlu0
        %v2002 = vpop.trf.xlu0
        %v2003 = vpop.trf.xlu0
        %v2004 = vpop.trf.xlu0
        %2005 = vxpose.xlu0.b32.start [1/16] %v1846, 128
        %2006 = vxpose.xlu0.b32.cont [2/16] %v1848, 128
        %2007 = vxpose.xlu0.b32.cont [3/16] 0.0, 128
        %2008 = vxpose.xlu0.b32.cont [4/16] 0.0, 128
        %2009 = vxpose.xlu0.b32.cont [5/16] 0.0, 128
        %2010 = vxpose.xlu0.b32.cont [6/16] 0.0, 128
        %2011 = vxpose.xlu0.b32.cont [7/16] 0.0, 128
        %2012 = vxpose.xlu0.b32.cont [8/16] 0.0, 128
        %2013 = vxpose.xlu0.b32.cont [9/16] 0.0, 128
        %2014 = vxpose.xlu0.b32.cont [10/16] 0.0, 128
        %2015 = vxpose.xlu0.b32.cont [11/16] 0.0, 128
        %2016 = vxpose.xlu0.b32.cont [12/16] 0.0, 128
        %2017 = vxpose.xlu0.b32.cont [13/16] 0.0, 128
        %2018 = vxpose.xlu0.b32.cont [14/16] 0.0, 128
        %2019 = vxpose.xlu0.b32.cont [15/16] 0.0, 128
        %2020 = vxpose.xlu0.b32.end [16/16] 0.0, 128
        %v2021 = vpop.trf.xlu0
        %v2022 = vpop.trf.xlu0
        %v2023 = vpop.trf.xlu0
        %v2024 = vpop.trf.xlu0
        %v2025 = vpop.trf.xlu0
        %v2026 = vpop.trf.xlu0
        %v2027 = vpop.trf.xlu0
        %v2028 = vpop.trf.xlu0
        %v2029 = vpop.trf.xlu0
        %v2030 = vpop.trf.xlu0
        %v2031 = vpop.trf.xlu0
        %v2032 = vpop.trf.xlu0
        %v2033 = vpop.trf.xlu0
        %v2034 = vpop.trf.xlu0
        %v2035 = vpop.trf.xlu0
        %v2036 = vpop.trf.xlu0
        %2037 = vxpose.xlu0.b32.start [1/16] %v1850, 128
        %2038 = vxpose.xlu0.b32.cont [2/16] %v1852, 128
        %2039 = vxpose.xlu0.b32.cont [3/16] 0.0, 128
        %2040 = vxpose.xlu0.b32.cont [4/16] 0.0, 128
        %2041 = vxpose.xlu0.b32.cont [5/16] 0.0, 128
        %2042 = vxpose.xlu0.b32.cont [6/16] 0.0, 128
        %2043 = vxpose.xlu0.b32.cont [7/16] 0.0, 128
        %2044 = vxpose.xlu0.b32.cont [8/16] 0.0, 128
        %2045 = vxpose.xlu0.b32.cont [9/16] 0.0, 128
        %2046 = vxpose.xlu0.b32.cont [10/16] 0.0, 128
        %2047 = vxpose.xlu0.b32.cont [11/16] 0.0, 128
        %2048 = vxpose.xlu0.b32.cont [12/16] 0.0, 128
        %2049 = vxpose.xlu0.b32.cont [13/16] 0.0, 128
        %2050 = vxpose.xlu0.b32.cont [14/16] 0.0, 128
        %2051 = vxpose.xlu0.b32.cont [15/16] 0.0, 128
        %2052 = vxpose.xlu0.b32.end [16/16] 0.0, 128
        %v2053 = vpop.trf.xlu0
        %v2054 = vpop.trf.xlu0
        %v2055 = vpop.trf.xlu0
        %v2056 = vpop.trf.xlu0
        %v2057 = vpop.trf.xlu0
        %v2058 = vpop.trf.xlu0
        %v2059 = vpop.trf.xlu0
        %v2060 = vpop.trf.xlu0
        %v2061 = vpop.trf.xlu0
        %v2062 = vpop.trf.xlu0
        %v2063 = vpop.trf.xlu0
        %v2064 = vpop.trf.xlu0
        %v2065 = vpop.trf.xlu0
        %v2066 = vpop.trf.xlu0
        %v2067 = vpop.trf.xlu0
        %v2068 = vpop.trf.xlu0
        %2069 = vxpose.xlu0.b32.start [1/16] %v1854, 128
        %2070 = vxpose.xlu0.b32.cont [2/16] %v1856, 128
        %2071 = vxpose.xlu0.b32.cont [3/16] 0.0, 128
        %2072 = vxpose.xlu0.b32.cont [4/16] 0.0, 128
        %2073 = vxpose.xlu0.b32.cont [5/16] 0.0, 128
        %2074 = vxpose.xlu0.b32.cont [6/16] 0.0, 128
        %2075 = vxpose.xlu0.b32.cont [7/16] 0.0, 128
        %2076 = vxpose.xlu0.b32.cont [8/16] 0.0, 128
        %2077 = vxpose.xlu0.b32.cont [9/16] 0.0, 128
        %2078 = vxpose.xlu0.b32.cont [10/16] 0.0, 128
        %2079 = vxpose.xlu0.b32.cont [11/16] 0.0, 128
        %2080 = vxpose.xlu0.b32.cont [12/16] 0.0, 128
        %2081 = vxpose.xlu0.b32.cont [13/16] 0.0, 128
        %2082 = vxpose.xlu0.b32.cont [14/16] 0.0, 128
        %2083 = vxpose.xlu0.b32.cont [15/16] 0.0, 128
        %2084 = vxpose.xlu0.b32.end [16/16] 0.0, 128
        %v2085 = vpop.trf.xlu0
        %v2086 = vpop.trf.xlu0
        %v2087 = vpop.trf.xlu0
        %v2088 = vpop.trf.xlu0
        %v2089 = vpop.trf.xlu0
        %v2090 = vpop.trf.xlu0
        %v2091 = vpop.trf.xlu0
        %v2092 = vpop.trf.xlu0
        %v2093 = vpop.trf.xlu0
        %v2094 = vpop.trf.xlu0
        %v2095 = vpop.trf.xlu0
        %v2096 = vpop.trf.xlu0
        %v2097 = vpop.trf.xlu0
        %v2098 = vpop.trf.xlu0
        %v2099 = vpop.trf.xlu0
        %v2100 = vpop.trf.xlu0
        %2101 = vxpose.xlu0.b32.start [1/16] %v1858, 128
        %2102 = vxpose.xlu0.b32.cont [2/16] %v1860, 128
        %2103 = vxpose.xlu0.b32.cont [3/16] 0.0, 128
        %2104 = vxpose.xlu0.b32.cont [4/16] 0.0, 128
        %2105 = vxpose.xlu0.b32.cont [5/16] 0.0, 128
        %2106 = vxpose.xlu0.b32.cont [6/16] 0.0, 128
        %2107 = vxpose.xlu0.b32.cont [7/16] 0.0, 128
        %2108 = vxpose.xlu0.b32.cont [8/16] 0.0, 128
        %2109 = vxpose.xlu0.b32.cont [9/16] 0.0, 128
        %2110 = vxpose.xlu0.b32.cont [10/16] 0.0, 128
        %2111 = vxpose.xlu0.b32.cont [11/16] 0.0, 128
        %2112 = vxpose.xlu0.b32.cont [12/16] 0.0, 128
        %2113 = vxpose.xlu0.b32.cont [13/16] 0.0, 128
        %2114 = vxpose.xlu0.b32.cont [14/16] 0.0, 128
        %2115 = vxpose.xlu0.b32.cont [15/16] 0.0, 128
        %2116 = vxpose.xlu0.b32.end [16/16] 0.0, 128
        %v2117 = vpop.trf.xlu0
        %v2118 = vpop.trf.xlu0
        %v2119 = vpop.trf.xlu0
        %v2120 = vpop.trf.xlu0
        %v2121 = vpop.trf.xlu0
        %v2122 = vpop.trf.xlu0
        %v2123 = vpop.trf.xlu0
        %v2124 = vpop.trf.xlu0
        %v2125 = vpop.trf.xlu0
        %v2126 = vpop.trf.xlu0
        %v2127 = vpop.trf.xlu0
        %v2128 = vpop.trf.xlu0
        %v2129 = vpop.trf.xlu0
        %v2130 = vpop.trf.xlu0
        %v2131 = vpop.trf.xlu0
        %v2132 = vpop.trf.xlu0
        %s2133 = scalar_lea.vmem [#allocation9], 32
        %v2134 = vld [vmem:[%s2133] sm:$0xff]
        %v2135 = vld [vmem:[%s2133 + $0x8] sm:$0xff]
        %v2137 = vsel %vm564, %v1893, 0
        %v2140 = vsel %vm564, %v1894, 0
        %v2143 = vsel %vm564, %v1925, 0
        %v2146 = vsel %vm564, %v1926, 0
        %v2149 = vsel %vm564, %v1957, 0
        %v2152 = vsel %vm564, %v1958, 0
        %v2155 = vsel %vm564, %v1989, 0
        %v2158 = vsel %vm564, %v1990, 0
        %v2161 = vsel %vm564, %v2021, 0
        %v2164 = vsel %vm564, %v2022, 0
        %v2167 = vsel %vm564, %v2053, 0
        %v2170 = vsel %vm564, %v2054, 0
        %v2173 = vsel %vm564, %v2085, 0
        %v2176 = vsel %vm564, %v2086, 0
        %v2179 = vsel %vm564, %v2117, 0
        %v2182 = vsel %vm564, %v2118, 0
        %2184 = vmatprep.subr.mxu0 0.0
        %2185 = vmatpush1.msra.mxu0 0.0
        %2186 = vmatprep.subr.mxu0 0.0
        %2187 = vmatpush1.msra.mxu0 0.0
        %2188 = vmatprep.subr.mxu0 0.0
        %2189 = vmatpush1.msra.mxu0 0.0
        %2190 = vmatprep.subr.mxu0 0.0
        %2191 = vmatpush1.msra.mxu0 0.0
        %2192 = vmatprep.subr.mxu0 0.0
        %2193 = vmatpush1.msra.mxu0 0.0
        %2194 = vmatprep.subr.mxu0 0.0
        %2195 = vmatpush1.msra.mxu0 0.0
        %2196 = vmatprep.subr.mxu0 0.0
        %2197 = vmatpush1.msra.mxu0 0.0
        %2198 = vmatprep.subr.mxu0 0.0
        %2199 = vmatpush1.msra.mxu0 0.0
        %2200 = vmatprep.subr.mxu0 0.0
        %2201 = vmatpush1.msra.mxu0 0.0
        %2202 = vmatprep.subr.mxu0 0.0
        %2203 = vmatpush1.msra.mxu0 0.0
        %2204 = vmatprep.subr.mxu0 0.0
        %2205 = vmatpush1.msra.mxu0 0.0
        %2206 = vmatprep.subr.mxu0 0.0
        %2207 = vmatpush1.msra.mxu0 0.0
        %2208 = vmatprep.subr.mxu0 0.0
        %2209 = vmatpush1.msra.mxu0 0.0
        %2210 = vmatprep.subr.mxu0 0.0
        %2211 = vmatpush1.msra.mxu0 0.0
        %2212 = vmatprep.subr.mxu0 0.0
        %2213 = vmatpush1.msra.mxu0 %v2135
        %2214 = vmatprep.subr.mxu0 0.0
        %2215 = vmatpush1.msra.mxu0 %v2134
        %2216 = vmatprep.subr.mxu0 0.0
        %2217 = vmatpush2.msra.mxu0 0.0
        %2218 = vmatprep.subr.mxu0 0.0
        %2219 = vmatpush2.msra.mxu0 0.0
        %2220 = vmatprep.subr.mxu0 0.0
        %2221 = vmatpush2.msra.mxu0 0.0
        %2222 = vmatprep.subr.mxu0 0.0
        %2223 = vmatpush2.msra.mxu0 0.0
        %2224 = vmatprep.subr.mxu0 0.0
        %2225 = vmatpush2.msra.mxu0 0.0
        %2226 = vmatprep.subr.mxu0 0.0
        %2227 = vmatpush2.msra.mxu0 0.0
        %2228 = vmatprep.subr.mxu0 0.0
        %2229 = vmatpush2.msra.mxu0 0.0
        %2230 = vmatprep.subr.mxu0 0.0
        %2231 = vmatpush2.msra.mxu0 0.0
        %2232 = vmatprep.subr.mxu0 0.0
        %2233 = vmatpush2.msra.mxu0 0.0
        %2234 = vmatprep.subr.mxu0 0.0
        %2235 = vmatpush2.msra.mxu0 0.0
        %2236 = vmatprep.subr.mxu0 0.0
        %2237 = vmatpush2.msra.mxu0 0.0
        %2238 = vmatprep.subr.mxu0 0.0
        %2239 = vmatpush2.msra.mxu0 0.0
        %2240 = vmatprep.subr.mxu0 0.0
        %2241 = vmatpush2.msra.mxu0 0.0
        %2242 = vmatprep.subr.mxu0 0.0
        %2243 = vmatpush2.msra.mxu0 0.0
        %2244 = vmatprep.subr.mxu0 0.0
        %2245 = vmatpush2.msra.mxu0 0.0
        %2246 = vmatprep.subr.mxu0 0.0
        %2247 = vmatpush2.msra.mxu0 0.0
        %2248 = vmatprep.mubr.f32.mxu0 0.0
        %2249 = vmatmul.mubr.f32.gmra.mxu0 %v2137
        %v2250 = vpop.f32.mrf.mxu0
        %v2251 = vadd.f32 0.0, %v2250
        %v2252 = vpop.f32.mrf.mxu0
        %2253 = vmatprep.mubr.f32.mxu0 0.0
        %2254 = vmatmul.mubr.f32.gmra.mxu0 %v2140
        %v2255 = vpop.f32.mrf.mxu0
        %v2256 = vadd.f32 0.0, %v2255
        %v2257 = vpop.f32.mrf.mxu0
        %2258 = vmatprep.mubr.f32.mxu0 0.0
        %2259 = vmatmul.mubr.f32.gmra.mxu0 %v2143
        %v2260 = vpop.f32.mrf.mxu0
        %v2261 = vadd.f32 0.0, %v2260
        %v2262 = vpop.f32.mrf.mxu0
        %2263 = vmatprep.mubr.f32.mxu0 0.0
        %2264 = vmatmul.mubr.f32.gmra.mxu0 %v2146
        %v2265 = vpop.f32.mrf.mxu0
        %v2266 = vadd.f32 0.0, %v2265
        %v2267 = vpop.f32.mrf.mxu0
        %2268 = vmatprep.mubr.f32.mxu0 0.0
        %2269 = vmatmul.mubr.f32.gmra.mxu0 %v2149
        %v2270 = vpop.f32.mrf.mxu0
        %v2271 = vadd.f32 0.0, %v2270
        %v2272 = vpop.f32.mrf.mxu0
        %2273 = vmatprep.mubr.f32.mxu0 0.0
        %2274 = vmatmul.mubr.f32.gmra.mxu0 %v2152
        %v2275 = vpop.f32.mrf.mxu0
        %v2276 = vadd.f32 0.0, %v2275
        %v2277 = vpop.f32.mrf.mxu0
        %2278 = vmatprep.mubr.f32.mxu0 0.0
        %2279 = vmatmul.mubr.f32.gmra.mxu0 %v2155
        %v2280 = vpop.f32.mrf.mxu0
        %v2281 = vadd.f32 0.0, %v2280
        %v2282 = vpop.f32.mrf.mxu0
        %2283 = vmatprep.mubr.f32.mxu0 0.0
        %2284 = vmatmul.mubr.f32.gmra.mxu0 %v2158
        %v2285 = vpop.f32.mrf.mxu0
        %v2286 = vadd.f32 0.0, %v2285
        %v2287 = vpop.f32.mrf.mxu0
        %2288 = vmatprep.mubr.f32.mxu0 0.0
        %2289 = vmatmul.mubr.f32.gmra.mxu0 %v2161
        %v2290 = vpop.f32.mrf.mxu0
        %v2291 = vadd.f32 0.0, %v2290
        %v2292 = vpop.f32.mrf.mxu0
        %2293 = vmatprep.mubr.f32.mxu0 0.0
        %2294 = vmatmul.mubr.f32.gmra.mxu0 %v2164
        %v2295 = vpop.f32.mrf.mxu0
        %v2296 = vadd.f32 0.0, %v2295
        %v2297 = vpop.f32.mrf.mxu0
        %2298 = vmatprep.mubr.f32.mxu0 0.0
        %2299 = vmatmul.mubr.f32.gmra.mxu0 %v2167
        %v2300 = vpop.f32.mrf.mxu0
        %v2301 = vadd.f32 0.0, %v2300
        %v2302 = vpop.f32.mrf.mxu0
        %2303 = vmatprep.mubr.f32.mxu0 0.0
        %2304 = vmatmul.mubr.f32.gmra.mxu0 %v2170
        %v2305 = vpop.f32.mrf.mxu0
        %v2306 = vadd.f32 0.0, %v2305
        %v2307 = vpop.f32.mrf.mxu0
        %2308 = vmatprep.mubr.f32.mxu0 0.0
        %2309 = vmatmul.mubr.f32.gmra.mxu0 %v2173
        %v2310 = vpop.f32.mrf.mxu0
        %v2311 = vadd.f32 0.0, %v2310
        %v2312 = vpop.f32.mrf.mxu0
        %2313 = vmatprep.mubr.f32.mxu0 0.0
        %2314 = vmatmul.mubr.f32.gmra.mxu0 %v2176
        %v2315 = vpop.f32.mrf.mxu0
        %v2316 = vadd.f32 0.0, %v2315
        %v2317 = vpop.f32.mrf.mxu0
        %2318 = vmatprep.mubr.f32.mxu0 0.0
        %2319 = vmatmul.mubr.f32.gmra.mxu0 %v2179
        %v2320 = vpop.f32.mrf.mxu0
        %v2321 = vadd.f32 0.0, %v2320
        %v2322 = vpop.f32.mrf.mxu0
        %2323 = vmatprep.mubr.f32.mxu0 0.0
        %2324 = vmatmul.mubr.f32.gmra.mxu0 %v2182
        %v2325 = vpop.f32.mrf.mxu0
        %v2326 = vadd.f32 0.0, %v2325
        %v2327 = vpop.f32.mrf.mxu0
        %2328 = vdwg.mxu0
        %v2329 = vmul.f32 %v2251, %v2271
        %v2330 = vmul.f32 %v2256, %v2276
        %v2331 = vmul.f32 %v2261, %v2281
        %v2332 = vmul.f32 %v2266, %v2286
        %v2333 = vsub.f32 %v2291, %v2329
        %v2334 = vsub.f32 %v2296, %v2330
        %v2335 = vsub.f32 %v2301, %v2331
        %v2336 = vsub.f32 %v2306, %v2332
        %v2337 = vmul.f32 %v2271, %v2271
        %v2338 = vmul.f32 %v2276, %v2276
        %v2339 = vmul.f32 %v2281, %v2281
        %v2340 = vmul.f32 %v2286, %v2286
        %v2341 = vsub.f32 %v2311, %v2337
        %v2342 = vsub.f32 %v2316, %v2338
        %v2343 = vsub.f32 %v2321, %v2339
        %v2344 = vsub.f32 %v2326, %v2340
        %s2345 = sld [smem:[#allocation15 + $0x2]]
        %v2346 = vstv %s2345
        %v2347 = vadd.f32 %v2341, %v2346
        %v2348 = vadd.f32 %v2342, %v2346
        %v2349 = vadd.f32 %v2343, %v2346
        %v2350 = vadd.f32 %v2344, %v2346
        %v2351 = vrcp.pop %v2347
        %v2352 = vrcp.pop %v2348
        %v2353 = vrcp.pop %v2349
        %v2354 = vrcp.pop %v2350
        %v2355 = vmul.f32 %v2333, %v2351
        %v2356 = vmul.f32 %v2334, %v2352
        %v2357 = vmul.f32 %v2335, %v2353
        %v2358 = vmul.f32 %v2336, %v2354
        %v2359 = vmul.f32 %v2355, %v2271
        %v2360 = vmul.f32 %v2356, %v2276
        %v2361 = vmul.f32 %v2357, %v2281
        %v2362 = vmul.f32 %v2358, %v2286
        %v2363 = vsub.f32 %v2251, %v2359
        %v2364 = vsub.f32 %v2256, %v2360
        %v2365 = vsub.f32 %v2261, %v2361
        %v2366 = vsub.f32 %v2266, %v2362
        %s2367 = sld [smem:[#allocation16 + $0x2]]
        %v2368 = vstv %s2367
        %v2369 = vmul.f32 %v2368, %v2355
        %v2370 = vmul.f32 %v2368, %v2356
        %v2371 = vmul.f32 %v2368, %v2357
        %v2372 = vmul.f32 %v2368, %v2358
        %v2373 = vadd.f32 %v1817, %v2369
        %v2374 = vadd.f32 %v1818, %v2370
        %v2375 = vadd.f32 %v1819, %v2371
        %v2376 = vadd.f32 %v1820, %v2372
        %v2377 = vmul.f32 %v2368, %v2363
        %v2378 = vmul.f32 %v2368, %v2364
        %v2379 = vmul.f32 %v2368, %v2365
        %v2380 = vmul.f32 %v2368, %v2366
        %v2381 = vadd.f32 %v1825, %v2377
        %v2382 = vadd.f32 %v1826, %v2378
        %v2383 = vadd.f32 %v1827, %v2379
        %v2384 = vadd.f32 %v1828, %v2380
        %v2385 = vld [vmem:[#allocation12] sm:$0xff]
        %v2386 = vld [vmem:[#allocation12 + $0x8] sm:$0xff]
        %v2387 = vld [vmem:[#allocation14] sm:$0xff]
        %v2388 = vld [vmem:[#allocation14 + $0x8] sm:$0xff]
        %v2390 = vsel %vm564, %v2373, 0
        %v2393 = vsel %vm564, %v2374, 0
        %v2396 = vsel %vm564, %v2375, 0
        %v2399 = vsel %vm564, %v2376, 0
        %v2402 = vsel %vm564, %v2381, 0
        %v2405 = vsel %vm564, %v2382, 0
        %v2408 = vsel %vm564, %v2383, 0
        %v2411 = vsel %vm564, %v2384, 0
        %2413 = vmatprep.subr.mxu0 0.0
        %2414 = vmatpush1.msra.mxu0 0.0
        %2415 = vmatprep.subr.mxu0 0.0
        %2416 = vmatpush1.msra.mxu0 0.0
        %2417 = vmatprep.subr.mxu0 0.0
        %2418 = vmatpush1.msra.mxu0 0.0
        %2419 = vmatprep.subr.mxu0 0.0
        %2420 = vmatpush1.msra.mxu0 0.0
        %2421 = vmatprep.subr.mxu0 0.0
        %2422 = vmatpush1.msra.mxu0 0.0
        %2423 = vmatprep.subr.mxu0 0.0
        %2424 = vmatpush1.msra.mxu0 0.0
        %2425 = vmatprep.subr.mxu0 0.0
        %2426 = vmatpush1.msra.mxu0 0.0
        %2427 = vmatprep.subr.mxu0 0.0
        %2428 = vmatpush1.msra.mxu0 0.0
        %2429 = vmatprep.subr.mxu0 0.0
        %2430 = vmatpush1.msra.mxu0 0.0
        %2431 = vmatprep.subr.mxu0 0.0
        %2432 = vmatpush1.msra.mxu0 0.0
        %2433 = vmatprep.subr.mxu0 0.0
        %2434 = vmatpush1.msra.mxu0 0.0
        %2435 = vmatprep.subr.mxu0 0.0
        %2436 = vmatpush1.msra.mxu0 0.0
        %2437 = vmatprep.subr.mxu0 0.0
        %2438 = vmatpush1.msra.mxu0 0.0
        %2439 = vmatprep.subr.mxu0 0.0
        %2440 = vmatpush1.msra.mxu0 0.0
        %2441 = vmatprep.subr.mxu0 0.0
        %2442 = vmatpush1.msra.mxu0 %v2386
        %2443 = vmatprep.subr.mxu0 0.0
        %2444 = vmatpush1.msra.mxu0 %v2385
        %2445 = vmatprep.subr.mxu0 0.0
        %2446 = vmatpush2.msra.mxu0 0.0
        %2447 = vmatprep.subr.mxu0 0.0
        %2448 = vmatpush2.msra.mxu0 0.0
        %2449 = vmatprep.subr.mxu0 0.0
        %2450 = vmatpush2.msra.mxu0 0.0
        %2451 = vmatprep.subr.mxu0 0.0
        %2452 = vmatpush2.msra.mxu0 0.0
        %2453 = vmatprep.subr.mxu0 0.0
        %2454 = vmatpush2.msra.mxu0 0.0
        %2455 = vmatprep.subr.mxu0 0.0
        %2456 = vmatpush2.msra.mxu0 0.0
        %2457 = vmatprep.subr.mxu0 0.0
        %2458 = vmatpush2.msra.mxu0 0.0
        %2459 = vmatprep.subr.mxu0 0.0
        %2460 = vmatpush2.msra.mxu0 0.0
        %2461 = vmatprep.subr.mxu0 0.0
        %2462 = vmatpush2.msra.mxu0 0.0
        %2463 = vmatprep.subr.mxu0 0.0
        %2464 = vmatpush2.msra.mxu0 0.0
        %2465 = vmatprep.subr.mxu0 0.0
        %2466 = vmatpush2.msra.mxu0 0.0
        %2467 = vmatprep.subr.mxu0 0.0
        %2468 = vmatpush2.msra.mxu0 0.0
        %2469 = vmatprep.subr.mxu0 0.0
        %2470 = vmatpush2.msra.mxu0 0.0
        %2471 = vmatprep.subr.mxu0 0.0
        %2472 = vmatpush2.msra.mxu0 0.0
        %2473 = vmatprep.subr.mxu0 0.0
        %2474 = vmatpush2.msra.mxu0 0.0
        %2475 = vmatprep.subr.mxu0 0.0
        %2476 = vmatpush2.msra.mxu0 0.0
        %2477 = vmatprep.mubr.f32.mxu0 0.0
        %2478 = vmatmul.mubr.f32.gmra.mxu0 %v2390
        %v2479 = vpop.f32.mrf.mxu0
        %v2480 = vadd.f32 0.0, %v2479
        %v2481 = vpop.f32.mrf.mxu0
        %2482 = vmatprep.mubr.f32.mxu0 0.0
        %2483 = vmatmul.mubr.f32.gmra.mxu0 %v2393
        %v2484 = vpop.f32.mrf.mxu0
        %v2485 = vadd.f32 0.0, %v2484
        %v2486 = vpop.f32.mrf.mxu0
        %2487 = vmatprep.mubr.f32.mxu0 0.0
        %2488 = vmatmul.mubr.f32.gmra.mxu0 %v2396
        %v2489 = vpop.f32.mrf.mxu0
        %v2490 = vadd.f32 0.0, %v2489
        %v2491 = vpop.f32.mrf.mxu0
        %2492 = vmatprep.mubr.f32.mxu0 0.0
        %2493 = vmatmul.mubr.f32.gmra.mxu0 %v2399
        %v2494 = vpop.f32.mrf.mxu0
        %v2495 = vadd.f32 0.0, %v2494
        %v2496 = vpop.f32.mrf.mxu0
        %2497 = vmatprep.mubr.f32.mxu0 0.0
        %2498 = vmatmul.mubr.f32.gmra.mxu0 %v2402
        %v2499 = vpop.f32.mrf.mxu0
        %v2500 = vadd.f32 0.0, %v2499
        %v2501 = vpop.f32.mrf.mxu0
        %2502 = vmatprep.mubr.f32.mxu0 0.0
        %2503 = vmatmul.mubr.f32.gmra.mxu0 %v2405
        %v2504 = vpop.f32.mrf.mxu0
        %v2505 = vadd.f32 0.0, %v2504
        %v2506 = vpop.f32.mrf.mxu0
        %2507 = vmatprep.mubr.f32.mxu0 0.0
        %2508 = vmatmul.mubr.f32.gmra.mxu0 %v2408
        %v2509 = vpop.f32.mrf.mxu0
        %v2510 = vadd.f32 0.0, %v2509
        %v2511 = vpop.f32.mrf.mxu0
        %2512 = vmatprep.mubr.f32.mxu0 0.0
        %2513 = vmatmul.mubr.f32.gmra.mxu0 %v2411
        %v2514 = vpop.f32.mrf.mxu0
        %v2515 = vadd.f32 0.0, %v2514
        %v2516 = vpop.f32.mrf.mxu0
        %2517 = vdwg.mxu0
        %2518 = vxpose.xlu0.b32.start [1/16] %v2480, 128
        %2519 = vxpose.xlu0.b32.cont [2/16] %v2485, 128
        %2520 = vxpose.xlu0.b32.cont [3/16] 0.0, 128
        %2521 = vxpose.xlu0.b32.cont [4/16] 0.0, 128
        %2522 = vxpose.xlu0.b32.cont [5/16] 0.0, 128
        %2523 = vxpose.xlu0.b32.cont [6/16] 0.0, 128
        %2524 = vxpose.xlu0.b32.cont [7/16] 0.0, 128
        %2525 = vxpose.xlu0.b32.cont [8/16] 0.0, 128
        %2526 = vxpose.xlu0.b32.cont [9/16] 0.0, 128
        %2527 = vxpose.xlu0.b32.cont [10/16] 0.0, 128
        %2528 = vxpose.xlu0.b32.cont [11/16] 0.0, 128
        %2529 = vxpose.xlu0.b32.cont [12/16] 0.0, 128
        %2530 = vxpose.xlu0.b32.cont [13/16] 0.0, 128
        %2531 = vxpose.xlu0.b32.cont [14/16] 0.0, 128
        %2532 = vxpose.xlu0.b32.cont [15/16] 0.0, 128
        %2533 = vxpose.xlu0.b32.end [16/16] 0.0, 128
        %v2534 = vpop.trf.xlu0
        %v2535 = vpop.trf.xlu0
        %v2536 = vpop.trf.xlu0
        %v2537 = vpop.trf.xlu0
        %v2538 = vpop.trf.xlu0
        %v2539 = vpop.trf.xlu0
        %v2540 = vpop.trf.xlu0
        %v2541 = vpop.trf.xlu0
        %v2542 = vpop.trf.xlu0
        %v2543 = vpop.trf.xlu0
        %v2544 = vpop.trf.xlu0
        %v2545 = vpop.trf.xlu0
        %v2546 = vpop.trf.xlu0
        %v2547 = vpop.trf.xlu0
        %v2548 = vpop.trf.xlu0
        %v2549 = vpop.trf.xlu0
        %2550 = vxpose.xlu0.b32.start [1/16] %v2490, 128
        %2551 = vxpose.xlu0.b32.cont [2/16] %v2495, 128
        %2552 = vxpose.xlu0.b32.cont [3/16] 0.0, 128
        %2553 = vxpose.xlu0.b32.cont [4/16] 0.0, 128
        %2554 = vxpose.xlu0.b32.cont [5/16] 0.0, 128
        %2555 = vxpose.xlu0.b32.cont [6/16] 0.0, 128
        %2556 = vxpose.xlu0.b32.cont [7/16] 0.0, 128
        %2557 = vxpose.xlu0.b32.cont [8/16] 0.0, 128
        %2558 = vxpose.xlu0.b32.cont [9/16] 0.0, 128
        %2559 = vxpose.xlu0.b32.cont [10/16] 0.0, 128
        %2560 = vxpose.xlu0.b32.cont [11/16] 0.0, 128
        %2561 = vxpose.xlu0.b32.cont [12/16] 0.0, 128
        %2562 = vxpose.xlu0.b32.cont [13/16] 0.0, 128
        %2563 = vxpose.xlu0.b32.cont [14/16] 0.0, 128
        %2564 = vxpose.xlu0.b32.cont [15/16] 0.0, 128
        %2565 = vxpose.xlu0.b32.end [16/16] 0.0, 128
        %v2566 = vpop.trf.xlu0
        %v2567 = vpop.trf.xlu0
        %v2568 = vpop.trf.xlu0
        %v2569 = vpop.trf.xlu0
        %v2570 = vpop.trf.xlu0
        %v2571 = vpop.trf.xlu0
        %v2572 = vpop.trf.xlu0
        %v2573 = vpop.trf.xlu0
        %v2574 = vpop.trf.xlu0
        %v2575 = vpop.trf.xlu0
        %v2576 = vpop.trf.xlu0
        %v2577 = vpop.trf.xlu0
        %v2578 = vpop.trf.xlu0
        %v2579 = vpop.trf.xlu0
        %v2580 = vpop.trf.xlu0
        %v2581 = vpop.trf.xlu0
        %2582 = vxpose.xlu0.b32.start [1/16] %v2500, 128
        %2583 = vxpose.xlu0.b32.cont [2/16] %v2505, 128
        %2584 = vxpose.xlu0.b32.cont [3/16] 0.0, 128
        %2585 = vxpose.xlu0.b32.cont [4/16] 0.0, 128
        %2586 = vxpose.xlu0.b32.cont [5/16] 0.0, 128
        %2587 = vxpose.xlu0.b32.cont [6/16] 0.0, 128
        %2588 = vxpose.xlu0.b32.cont [7/16] 0.0, 128
        %2589 = vxpose.xlu0.b32.cont [8/16] 0.0, 128
        %2590 = vxpose.xlu0.b32.cont [9/16] 0.0, 128
        %2591 = vxpose.xlu0.b32.cont [10/16] 0.0, 128
        %2592 = vxpose.xlu0.b32.cont [11/16] 0.0, 128
        %2593 = vxpose.xlu0.b32.cont [12/16] 0.0, 128
        %2594 = vxpose.xlu0.b32.cont [13/16] 0.0, 128
        %2595 = vxpose.xlu0.b32.cont [14/16] 0.0, 128
        %2596 = vxpose.xlu0.b32.cont [15/16] 0.0, 128
        %2597 = vxpose.xlu0.b32.end [16/16] 0.0, 128
        %v2598 = vpop.trf.xlu0
        %v2599 = vpop.trf.xlu0
        %v2600 = vpop.trf.xlu0
        %v2601 = vpop.trf.xlu0
        %v2602 = vpop.trf.xlu0
        %v2603 = vpop.trf.xlu0
        %v2604 = vpop.trf.xlu0
        %v2605 = vpop.trf.xlu0
        %v2606 = vpop.trf.xlu0
        %v2607 = vpop.trf.xlu0
        %v2608 = vpop.trf.xlu0
        %v2609 = vpop.trf.xlu0
        %v2610 = vpop.trf.xlu0
        %v2611 = vpop.trf.xlu0
        %v2612 = vpop.trf.xlu0
        %v2613 = vpop.trf.xlu0
        %2614 = vxpose.xlu0.b32.start [1/16] %v2510, 128
        %2615 = vxpose.xlu0.b32.cont [2/16] %v2515, 128
        %2616 = vxpose.xlu0.b32.cont [3/16] 0.0, 128
        %2617 = vxpose.xlu0.b32.cont [4/16] 0.0, 128
        %2618 = vxpose.xlu0.b32.cont [5/16] 0.0, 128
        %2619 = vxpose.xlu0.b32.cont [6/16] 0.0, 128
        %2620 = vxpose.xlu0.b32.cont [7/16] 0.0, 128
        %2621 = vxpose.xlu0.b32.cont [8/16] 0.0, 128
        %2622 = vxpose.xlu0.b32.cont [9/16] 0.0, 128
        %2623 = vxpose.xlu0.b32.cont [10/16] 0.0, 128
        %2624 = vxpose.xlu0.b32.cont [11/16] 0.0, 128
        %2625 = vxpose.xlu0.b32.cont [12/16] 0.0, 128
        %2626 = vxpose.xlu0.b32.cont [13/16] 0.0, 128
        %2627 = vxpose.xlu0.b32.cont [14/16] 0.0, 128
        %2628 = vxpose.xlu0.b32.cont [15/16] 0.0, 128
        %2629 = vxpose.xlu0.b32.end [16/16] 0.0, 128
        %v2630 = vpop.trf.xlu0
        %v2631 = vpop.trf.xlu0
        %v2632 = vpop.trf.xlu0
        %v2633 = vpop.trf.xlu0
        %v2634 = vpop.trf.xlu0
        %v2635 = vpop.trf.xlu0
        %v2636 = vpop.trf.xlu0
        %v2637 = vpop.trf.xlu0
        %v2638 = vpop.trf.xlu0
        %v2639 = vpop.trf.xlu0
        %v2640 = vpop.trf.xlu0
        %v2641 = vpop.trf.xlu0
        %v2642 = vpop.trf.xlu0
        %v2643 = vpop.trf.xlu0
        %v2644 = vpop.trf.xlu0
        %v2645 = vpop.trf.xlu0
        %v2647 = vsel %vm564, %v2534, 0
        %v2650 = vsel %vm564, %v2535, 0
        %v2653 = vsel %vm564, %v2536, 0
        %v2656 = vsel %vm564, %v2537, 0
        %v2659 = vsel %vm564, %v2566, 0
        %v2662 = vsel %vm564, %v2567, 0
        %v2665 = vsel %vm564, %v2568, 0
        %v2668 = vsel %vm564, %v2569, 0
        %v2671 = vsel %vm564, %v2598, 0
        %v2674 = vsel %vm564, %v2599, 0
        %v2677 = vsel %vm564, %v2600, 0
        %v2680 = vsel %vm564, %v2601, 0
        %v2683 = vsel %vm564, %v2630, 0
        %v2686 = vsel %vm564, %v2631, 0
        %v2689 = vsel %vm564, %v2632, 0
        %v2692 = vsel %vm564, %v2633, 0
        %2694 = vmatprep.subr.mxu0 0.0
        %2695 = vmatpush1.msra.mxu0 0.0
        %2696 = vmatprep.subr.mxu0 0.0
        %2697 = vmatpush1.msra.mxu0 0.0
        %2698 = vmatprep.subr.mxu0 0.0
        %2699 = vmatpush1.msra.mxu0 0.0
        %2700 = vmatprep.subr.mxu0 0.0
        %2701 = vmatpush1.msra.mxu0 0.0
        %2702 = vmatprep.subr.mxu0 0.0
        %2703 = vmatpush1.msra.mxu0 0.0
        %2704 = vmatprep.subr.mxu0 0.0
        %2705 = vmatpush1.msra.mxu0 0.0
        %2706 = vmatprep.subr.mxu0 0.0
        %2707 = vmatpush1.msra.mxu0 0.0
        %2708 = vmatprep.subr.mxu0 0.0
        %2709 = vmatpush1.msra.mxu0 0.0
        %2710 = vmatprep.subr.mxu0 0.0
        %2711 = vmatpush1.msra.mxu0 0.0
        %2712 = vmatprep.subr.mxu0 0.0
        %2713 = vmatpush1.msra.mxu0 0.0
        %2714 = vmatprep.subr.mxu0 0.0
        %2715 = vmatpush1.msra.mxu0 0.0
        %2716 = vmatprep.subr.mxu0 0.0
        %2717 = vmatpush1.msra.mxu0 0.0
        %2718 = vmatprep.subr.mxu0 0.0
        %2719 = vmatpush1.msra.mxu0 0.0
        %2720 = vmatprep.subr.mxu0 0.0
        %2721 = vmatpush1.msra.mxu0 0.0
        %2722 = vmatprep.subr.mxu0 0.0
        %2723 = vmatpush1.msra.mxu0 %v2388
        %2724 = vmatprep.subr.mxu0 0.0
        %2725 = vmatpush1.msra.mxu0 %v2387
        %2726 = vmatprep.subr.mxu0 0.0
        %2727 = vmatpush2.msra.mxu0 0.0
        %2728 = vmatprep.subr.mxu0 0.0
        %2729 = vmatpush2.msra.mxu0 0.0
        %2730 = vmatprep.subr.mxu0 0.0
        %2731 = vmatpush2.msra.mxu0 0.0
        %2732 = vmatprep.subr.mxu0 0.0
        %2733 = vmatpush2.msra.mxu0 0.0
        %2734 = vmatprep.subr.mxu0 0.0
        %2735 = vmatpush2.msra.mxu0 0.0
        %2736 = vmatprep.subr.mxu0 0.0
        %2737 = vmatpush2.msra.mxu0 0.0
        %2738 = vmatprep.subr.mxu0 0.0
        %2739 = vmatpush2.msra.mxu0 0.0
        %2740 = vmatprep.subr.mxu0 0.0
        %2741 = vmatpush2.msra.mxu0 0.0
        %2742 = vmatprep.subr.mxu0 0.0
        %2743 = vmatpush2.msra.mxu0 0.0
        %2744 = vmatprep.subr.mxu0 0.0
        %2745 = vmatpush2.msra.mxu0 0.0
        %2746 = vmatprep.subr.mxu0 0.0
        %2747 = vmatpush2.msra.mxu0 0.0
        %2748 = vmatprep.subr.mxu0 0.0
        %2749 = vmatpush2.msra.mxu0 0.0
        %2750 = vmatprep.subr.mxu0 0.0
        %2751 = vmatpush2.msra.mxu0 0.0
        %2752 = vmatprep.subr.mxu0 0.0
        %2753 = vmatpush2.msra.mxu0 0.0
        %2754 = vmatprep.subr.mxu0 0.0
        %2755 = vmatpush2.msra.mxu0 0.0
        %2756 = vmatprep.subr.mxu0 0.0
        %2757 = vmatpush2.msra.mxu0 0.0
        %2758 = vmatprep.mubr.f32.mxu0 0.0
        %2759 = vmatmul.mubr.f32.gmra.mxu0 %v2647
        %v2760 = vpop.f32.mrf.mxu0
        %v2761 = vadd.f32 0.0, %v2760
        %v2762 = vpop.f32.mrf.mxu0
        %2763 = vmatprep.mubr.f32.mxu0 0.0
        %2764 = vmatmul.mubr.f32.gmra.mxu0 %v2650
        %v2765 = vpop.f32.mrf.mxu0
        %v2766 = vadd.f32 0.0, %v2765
        %v2767 = vpop.f32.mrf.mxu0
        %2768 = vmatprep.mubr.f32.mxu0 0.0
        %2769 = vmatmul.mubr.f32.gmra.mxu0 %v2653
        %v2770 = vpop.f32.mrf.mxu0
        %v2771 = vadd.f32 0.0, %v2770
        %v2772 = vpop.f32.mrf.mxu0
        %2773 = vmatprep.mubr.f32.mxu0 0.0
        %2774 = vmatmul.mubr.f32.gmra.mxu0 %v2656
        %v2775 = vpop.f32.mrf.mxu0
        %v2776 = vadd.f32 0.0, %v2775
        %v2777 = vpop.f32.mrf.mxu0
        %2778 = vmatprep.mubr.f32.mxu0 0.0
        %2779 = vmatmul.mubr.f32.gmra.mxu0 %v2659
        %v2780 = vpop.f32.mrf.mxu0
        %v2781 = vadd.f32 0.0, %v2780
        %v2782 = vpop.f32.mrf.mxu0
        %2783 = vmatprep.mubr.f32.mxu0 0.0
        %2784 = vmatmul.mubr.f32.gmra.mxu0 %v2662
        %v2785 = vpop.f32.mrf.mxu0
        %v2786 = vadd.f32 0.0, %v2785
        %v2787 = vpop.f32.mrf.mxu0
        %2788 = vmatprep.mubr.f32.mxu0 0.0
        %2789 = vmatmul.mubr.f32.gmra.mxu0 %v2665
        %v2790 = vpop.f32.mrf.mxu0
        %v2791 = vadd.f32 0.0, %v2790
        %v2792 = vpop.f32.mrf.mxu0
        %2793 = vmatprep.mubr.f32.mxu0 0.0
        %2794 = vmatmul.mubr.f32.gmra.mxu0 %v2668
        %v2795 = vpop.f32.mrf.mxu0
        %v2796 = vadd.f32 0.0, %v2795
        %v2797 = vpop.f32.mrf.mxu0
        %2798 = vmatprep.mubr.f32.mxu0 0.0
        %2799 = vmatmul.mubr.f32.gmra.mxu0 %v2671
        %v2800 = vpop.f32.mrf.mxu0
        %v2801 = vadd.f32 0.0, %v2800
        %v2802 = vpop.f32.mrf.mxu0
        %2803 = vmatprep.mubr.f32.mxu0 0.0
        %2804 = vmatmul.mubr.f32.gmra.mxu0 %v2674
        %v2805 = vpop.f32.mrf.mxu0
        %v2806 = vadd.f32 0.0, %v2805
        %v2807 = vpop.f32.mrf.mxu0
        %2808 = vmatprep.mubr.f32.mxu0 0.0
        %2809 = vmatmul.mubr.f32.gmra.mxu0 %v2677
        %v2810 = vpop.f32.mrf.mxu0
        %v2811 = vadd.f32 0.0, %v2810
        %v2812 = vpop.f32.mrf.mxu0
        %2813 = vmatprep.mubr.f32.mxu0 0.0
        %2814 = vmatmul.mubr.f32.gmra.mxu0 %v2680
        %v2815 = vpop.f32.mrf.mxu0
        %v2816 = vadd.f32 0.0, %v2815
        %v2817 = vpop.f32.mrf.mxu0
        %2818 = vmatprep.mubr.f32.mxu0 0.0
        %2819 = vmatmul.mubr.f32.gmra.mxu0 %v2683
        %v2820 = vpop.f32.mrf.mxu0
        %v2821 = vadd.f32 0.0, %v2820
        %v2822 = vpop.f32.mrf.mxu0
        %2823 = vmatprep.mubr.f32.mxu0 0.0
        %2824 = vmatmul.mubr.f32.gmra.mxu0 %v2686
        %v2825 = vpop.f32.mrf.mxu0
        %v2826 = vadd.f32 0.0, %v2825
        %v2827 = vpop.f32.mrf.mxu0
        %2828 = vmatprep.mubr.f32.mxu0 0.0
        %2829 = vmatmul.mubr.f32.gmra.mxu0 %v2689
        %v2830 = vpop.f32.mrf.mxu0
        %v2831 = vadd.f32 0.0, %v2830
        %v2832 = vpop.f32.mrf.mxu0
        %2833 = vmatprep.mubr.f32.mxu0 0.0
        %2834 = vmatmul.mubr.f32.gmra.mxu0 %v2692
        %v2835 = vpop.f32.mrf.mxu0
        %v2836 = vadd.f32 0.0, %v2835
        %v2837 = vpop.f32.mrf.mxu0
        %2838 = vdwg.mxu0
        %v2839 = vld [vmem:[%s454] sm:$0xff]
        %v2840 = vld [vmem:[%s454 + $0x8] sm:$0xff]
        %v2841 = vld [vmem:[%s454 + $0x10] sm:$0xff]
        %v2842 = vld [vmem:[%s454 + $0x18] sm:$0xff]
        %v2843 = vld [vmem:[%s454 + $0x20] sm:$0xff]
        %v2844 = vld [vmem:[%s454 + $0x28] sm:$0xff]
        %v2845 = vld [vmem:[%s454 + $0x30] sm:$0xff]
        %v2846 = vld [vmem:[%s454 + $0x38] sm:$0xff]
        %v2847 = vmul.f32 %v2761, %v2839
        %v2848 = vmul.f32 %v2766, %v2840
        %v2849 = vmul.f32 %v2771, %v2841
        %v2850 = vmul.f32 %v2776, %v2842
        %v2851 = vmul.f32 %v2781, %v2843
        %v2852 = vmul.f32 %v2786, %v2844
        %v2853 = vmul.f32 %v2791, %v2845
        %v2854 = vmul.f32 %v2796, %v2846
        %v2855 = vadd.f32 %v2847, %v2801
        %v2856 = vadd.f32 %v2848, %v2806
        %v2857 = vadd.f32 %v2849, %v2811
        %v2858 = vadd.f32 %v2850, %v2816
        %v2859 = vadd.f32 %v2851, %v2821
        %v2860 = vadd.f32 %v2852, %v2826
        %v2861 = vadd.f32 %v2853, %v2831
        %v2862 = vadd.f32 %v2854, %v2836
        %vm2863 = vcmask 261120
        %2864 = vst.msk [vmem:[%s541] sm:$0xff] %vm2863, %v2855
        %2865 = vst.msk [vmem:[%s541 + $0x8] sm:$0xff] %vm2863, %v2856
        %2866 = vst.msk [vmem:[%s541 + $0x10] sm:$0xff] %vm2863, %v2857
        %2867 = vst.msk [vmem:[%s541 + $0x18] sm:$0xff] %vm2863, %v2858
        %2868 = vst.msk [vmem:[%s541 + $0x20] sm:$0xff] %vm2863, %v2859
        %2869 = vst.msk [vmem:[%s541 + $0x28] sm:$0xff] %vm2863, %v2860
        %2870 = vst.msk [vmem:[%s541 + $0x30] sm:$0xff] %vm2863, %v2861
        %2871 = vst.msk [vmem:[%s541 + $0x38] sm:$0xff] %vm2863, %v2862
        %s2872 = sand.u32 %s265, 1
        %s2873 = scalar_lea.sflag [#allocation4], %s2872
        %s2874 = sand.u32 %s265, 1
        %s2875 = smul.addr %s2874, 64
        %s2876 = scalar_lea.vmem [#allocation18], %s2875
        // Predicated region
        $region93: #{tpu_custom_call.1} parent=55 // pred_check
          %p2877 = pneg %p275
        $region94: #{tpu_custom_call.1} parent=55 // pred_check_branch
          %2879 = sbr.rel (%p2877) target = $region96
        $region95: #{tpu_custom_call.1} parent=55 // pred_region
          %s2880 = smul.u32 2, %s38
          %s2882 = ssub.s32 1024, 1024
          %2883 = vsyncadd %s2873, %s2882
          %s2884 = smul.addr %s2880, 4
          %s2885 = smul.addr %s37, 16
          %s2886 = sadd.s32 %s2884, %s2885
          %s2887 = smul.addr %s2886, 128
          %s2888 = scalar_lea.hbm %s9, %s2887
          %s2889 = sshll.u32 %s2876, 4
          %s2890 = int_to_ptr.vmem [resolvable:$true] %s2889
          %2895 = dma.vmem_to_hbm [thread:$0]  %s2890, 1024, %s2888, %s2873, 128, 128, 8
        $region96: #{tpu_custom_call.1} parent=55 // pred_fallthru
          _
      $region56: #{tpu_custom_call.1} parent=5 // pred_fallthru
        _
      %p2896 = scmp.le.s32.totalorder 2, %s28
      // Predicated region
      $region97: #{tpu_custom_call.1} parent=5 // pred_check
        %p2897 = pneg %p2896
      $region98: #{tpu_custom_call.1} parent=5 // pred_check_branch
        %2899 = sbr.rel (%p2897) target = $region100
      $region99: #{tpu_custom_call.1} parent=5 // pred_region
        %s2900 = ssub.s32 %s28, 2
        // Predicated region
        $region101: #{tpu_custom_call.1} parent=99 // pred_check
          %p2901 = pneg %p281
        $region102: #{tpu_custom_call.1} parent=99 // pred_check_branch
          %2903 = sbr.rel (%p2901) target = $region104
        $region103: #{tpu_custom_call.1} parent=99 // pred_region
          %s2904 = sand.u32 %s266, 1
          %s2905 = scalar_lea.sflag [#allocation4], %s2904
          %s2906 = sand.u32 %s266, 1
          %s2907 = smul.addr %s2906, 64
          %s2908 = scalar_lea.vmem [#allocation18], %s2907
          %2909 = dma.done %s2905, 1024
        $region104: #{tpu_custom_call.1} parent=99 // pred_fallthru
          _
      $region100: #{tpu_custom_call.1} parent=5 // pred_fallthru
        _
    $region6: #{tpu_custom_call.1} parent=1 // loop_footer
      %s32 = sadd.s32 1, %s28
    $region7: #{tpu_custom_call.1} parent=1 // loop_footer_branch
      %27 = sbr.rel target = $region3
    $region8: #{tpu_custom_call.1} parent=1 // loop_exit
      _
    %2910 = vsyncpa [#allocation3], 1
    %s2911 = scalar_lea.sflag [#allocation3], 1
    %2912 = vsyncpa %s2911, 1
    %2913 = vsyncpa [#allocation7], 1
    %s2914 = scalar_lea.sflag [#allocation7], 1
    %2915 = vsyncpa %s2914, 1
    %2916 = vsyncpa [#allocation10], 1
    %2917 = vsyncpa [#allocation13], 1
    %2918 = vsyncpa [#allocation4], 1
    %s2919 = scalar_lea.sflag [#allocation4], 1
    %2920 = vsyncpa %s2919, 1
    %2921 = vsyncpa [#allocation5], 1
    %s2922 = scalar_lea.sflag [#allocation5], 1
    %2923 = vsyncpa %s2922, 1
    %2924 = vsyncpa [#allocation17], 1

</llo_original>
